<compile_context>
chip_gen: v7x
topology: tpu7x:2x2x1
jax: 0.10.0
libtpu: 0.0.40
codegen_flags: <defaults>
</compile_context>

<pallas_src>
import functools

import jax
import jax.numpy as jnp
from jax.experimental import pallas as pl
from jax.experimental.pallas import tpu as pltpu


def _round_up(x, m):
    return (x + m - 1) // m * m


# ---------------------------------------------------------------------------
# Kernel A: fused concat + 1x1 conv + folded BatchNorm + ReLU
# ---------------------------------------------------------------------------

def _cat_conv_bn_relu_kernel(x5_ref, x4_ref, x3_ref, x2_ref,
                             w5_ref, w4_ref, w3_ref, w2_ref,
                             bias_ref, o_ref):
    acc = jnp.dot(x5_ref[...], w5_ref[...], preferred_element_type=jnp.float32)
    acc = acc + jnp.dot(x4_ref[...], w4_ref[...], preferred_element_type=jnp.float32)
    acc = acc + jnp.dot(x3_ref[...], w3_ref[...], preferred_element_type=jnp.float32)
    acc = acc + jnp.dot(x2_ref[...], w2_ref[...], preferred_element_type=jnp.float32)
    o_ref[...] = jnp.maximum(acc + bias_ref[...], 0.0)


def cat_conv_bn_relu(xs, ws, bias_row, tm=256):
    """xs: 4x (M, ci) row-major activations; ws: 4x (ci, C) BN-folded weights; bias_row: (1, C)."""
    M = xs[0].shape[0]
    C = ws[0].shape[1]
    tm = min(tm, _round_up(M, 8))
    Mp = _round_up(M, tm)
    if Mp != M:
        xs = [jnp.pad(x, ((0, Mp - M), (0, 0))) for x in xs]

    in_specs = [pl.BlockSpec((tm, x.shape[1]), lambda i: (i, 0)) for x in xs]
    in_specs += [pl.BlockSpec((w.shape[0], C), lambda i: (0, 0)) for w in ws]
    in_specs += [pl.BlockSpec((1, C), lambda i: (0, 0))]

    out = pl.pallas_call(
        _cat_conv_bn_relu_kernel,
        out_shape=jax.ShapeDtypeStruct((Mp, C), jnp.float32),
        grid_spec=pltpu.PrefetchScalarGridSpec(
            num_scalar_prefetch=0,
            grid=(Mp // tm,),
            in_specs=in_specs,
            out_specs=pl.BlockSpec((tm, C), lambda i: (i, 0)),
        ),
        compiler_params=pltpu.CompilerParams(
            dimension_semantics=("parallel",)),
    )(*xs, *ws, bias_row)
    return out[:M] if Mp != M else out


# ---------------------------------------------------------------------------
# Kernel B: fused Q/K/V 1x1 convs + linear attention + gamma scale + residual
# ---------------------------------------------------------------------------

def _attention_residual_kernel(feat_ref, wq_ref, bq_ref, wk_ref, bk_ref,
                               wv_ref, bv_ref, gamma_ref, o_ref, *, eps, n_pix):
    x = feat_ref[0]                                                    # (N, C)
    q = jnp.dot(x, wq_ref[...], preferred_element_type=jnp.float32) + bq_ref[...]   # (N, Cq)
    k = jnp.dot(x, wk_ref[...], preferred_element_type=jnp.float32) + bk_ref[...]   # (N, Cq)
    v = jnp.dot(x, wv_ref[...], preferred_element_type=jnp.float32) + bv_ref[...]   # (N, C)

    # l2_norm over the channel dim per spatial position (rows here).
    qn = q * jax.lax.rsqrt(jnp.sum(q * q, axis=-1, keepdims=True))
    kn = k * jax.lax.rsqrt(jnp.sum(k * k, axis=-1, keepdims=True))

    ksum = jnp.sum(kn, axis=0, keepdims=True) + eps                    # (1, Cq)
    tailor = 1.0 / (n_pix + jnp.sum(qn * ksum, axis=-1, keepdims=True))  # (N, 1)

    vsum = jnp.sum(v, axis=0, keepdims=True)                           # (1, C)
    mat = jax.lax.dot_general(kn, v, (((0,), (0,)), ((), ())),
                              preferred_element_type=jnp.float32)      # (Cq, C)
    qm = jnp.dot(qn, mat, preferred_element_type=jnp.float32)          # (N, C)

    weight_value = (vsum + qm) * tailor
    o_ref[0] = gamma_ref[...] * weight_value + x                       # atten + feat


def attention_residual(feat3, wq, bq, wk, bk, wv, bv, gamma, eps=1e-6):
    B, N, C = feat3.shape
    Cq = wq.shape[1]
    kern = functools.partial(_attention_residual_kernel, eps=eps, n_pix=float(N))
    # TODO(synk): for very large H*W, tile this kernel over N with a two-pass
    # (stats accumulate, then apply) structure instead of one (1, N, C) block.
    return pl.pallas_call(
        kern,
        out_shape=jax.ShapeDtypeStruct((B, N, C), jnp.float32),
        grid_spec=pltpu.PrefetchScalarGridSpec(
            num_scalar_prefetch=0,
            grid=(B,),
            in_specs=[
                pl.BlockSpec((1, N, C), lambda b: (b, 0, 0)),
                pl.BlockSpec((C, Cq), lambda b: (0, 0)),
                pl.BlockSpec((1, Cq), lambda b: (0, 0)),
                pl.BlockSpec((C, Cq), lambda b: (0, 0)),
                pl.BlockSpec((1, Cq), lambda b: (0, 0)),
                pl.BlockSpec((C, C), lambda b: (0, 0)),
                pl.BlockSpec((1, C), lambda b: (0, 0)),
                pl.BlockSpec((1, 1), lambda b: (0, 0)),
            ],
            out_specs=pl.BlockSpec((1, N, C), lambda b: (b, 0, 0)),
        ),
        compiler_params=pltpu.CompilerParams(
            dimension_semantics=("parallel",)),
    )(feat3, wq, bq, wk, bk, wv, bv, gamma)


# ---------------------------------------------------------------------------
# Deterministic synthetic parameters (BN folded at prep time)
# ---------------------------------------------------------------------------

def init_params(key, in_chans, out_chan, scale=8, bn_eps=1e-5):
    cq = out_chan // scale
    in_chan = sum(in_chans)
    ks = jax.random.split(key, 8)

    # ConvBnRelu: 1x1 conv (no bias) + eval-mode BatchNorm + ReLU
    w_conv = jax.random.normal(ks[0], (in_chan, out_chan), jnp.float32) * jnp.sqrt(2.0 / in_chan)
    bn_gamma = 1.0 + 0.1 * jax.random.normal(ks[1], (out_chan,), jnp.float32)
    bn_beta = 0.1 * jax.random.normal(ks[2], (out_chan,), jnp.float32)
    bn_mean = 0.1 * jax.random.normal(ks[3], (out_chan,), jnp.float32)
    bn_var = jax.random.uniform(ks[4], (out_chan,), jnp.float32, minval=0.5, maxval=1.5)

    # Fold BN into the conv: y = relu(conv(x) * s + t)
    s = bn_gamma / jnp.sqrt(bn_var + bn_eps)
    w_folded = w_conv * s[None, :]
    b_folded = bn_beta - bn_mean * s

    # Split the folded weight along input channels to match (s5, s4, s3, s2).
    splits, off = [], 0
    for ci in in_chans:
        splits.append(w_folded[off:off + ci])
        off += ci

    def conv1x1(k, cin, cout):
        kw, kb = jax.random.split(k)
        w = jax.random.normal(kw, (cin, cout), jnp.float32) * jnp.sqrt(1.0 / cin)
        b = 0.01 * jax.random.normal(kb, (cout,), jnp.float32)
        return w, b

    wq, bq = conv1x1(ks[5], out_chan, cq)
    wk, bk = conv1x1(ks[6], out_chan, cq)
    wv, bv = conv1x1(ks[7], out_chan, out_chan)

    # torch default init for Attention.gamma is 0; use a nonzero value so the
    # attention branch contributes numerically in this test.
    gamma = jnp.full((1, 1), 0.75, jnp.float32)

    return {
        'w_splits': tuple(splits),
        'bias_row': b_folded.reshape(1, out_chan),
        'wq': wq, 'bq': bq.reshape(1, cq),
        'wk': wk, 'bk': bk.reshape(1, cq),
        'wv': wv, 'bv': bv.reshape(1, out_chan),
        'gamma': gamma,
        'out_chan': out_chan,
    }


# ---------------------------------------------------------------------------
# Forward pass (NCHW in / NCHW out, like the PyTorch module)
# ---------------------------------------------------------------------------

def attention_aggregation_forward(s5, s4, s3, s2, params):
    B, _, H, W = s5.shape
    N = H * W
    C = params['out_chan']

    def to_rows(x):
        return jnp.transpose(x, (0, 2, 3, 1)).reshape(B * N, x.shape[1])

    xs = [to_rows(s5), to_rows(s4), to_rows(s3), to_rows(s2)]
    feat2d = cat_conv_bn_relu(xs, list(params['w_splits']), params['bias_row'])
    feat3 = feat2d.reshape(B, N, C)

    out3 = attention_residual(
        feat3,
        params['wq'], params['bq'],
        params['wk'], params['bk'],
        params['wv'], params['bv'],
        params['gamma'])

    return jnp.transpose(out3.reshape(B, H, W, C), (0, 3, 1, 2))


# ---------------------------------------------------------------------------

if __name__ == "__main__":
    B, H, W = 2, 16, 16
    in_chans = (32, 32, 32, 32)        # s5, s4, s3, s2 channel counts
    out_chan = sum(in_chans)           # 128 (AttentionAggregationModule(in, out) with in == out)

    key = jax.random.PRNGKey(0)
    kp, k5, k4, k3, k2 = jax.random.split(key, 5)
    params = init_params(kp, in_chans, out_chan)

    s5 = jax.random.normal(k5, (B, in_chans[0], H, W), jnp.float32)
    s4 = jax.random.normal(k4, (B, in_chans[1], H, W), jnp.float32)
    s3 = jax.random.normal(k3, (B, in_chans[2], H, W), jnp.float32)
    s2 = jax.random.normal(k2, (B, in_chans[3], H, W), jnp.float32)

    fwd = jax.jit(lambda a, b, c, d: attention_aggregation_forward(a, b, c, d, params))
    out = fwd(s5, s4, s3, s2)
    out = jax.block_until_ready(out)

    assert out.shape == (B, out_chan, H, W), out.shape
    assert bool(jnp.all(jnp.isfinite(out)))
    print("KERNEL_OK")
</pallas_src>

<mosaic_0001>
module attributes {stable_mosaic.version = 11 : i64} {
  func.func @_cat_conv_bn_relu_kernel(%arg0: i32, %arg1: memref<256x32xf32, #tpu.memory_space<vmem>>, %arg2: memref<256x32xf32, #tpu.memory_space<vmem>>, %arg3: memref<256x32xf32, #tpu.memory_space<vmem>>, %arg4: memref<256x32xf32, #tpu.memory_space<vmem>>, %arg5: memref<32x128xf32, #tpu.memory_space<vmem>>, %arg6: memref<32x128xf32, #tpu.memory_space<vmem>>, %arg7: memref<32x128xf32, #tpu.memory_space<vmem>>, %arg8: memref<32x128xf32, #tpu.memory_space<vmem>>, %arg9: memref<1x128xf32, #tpu.memory_space<vmem>>, %arg10: memref<256x128xf32, #tpu.memory_space<vmem>>) attributes {dimension_semantics = [#tpu.dimension_semantics<parallel>], iteration_bounds = array<i64: 2>, scalar_prefetch = 0 : i64, scratch_operands = 0 : i64, tpu.core_type = #tpu.core_type<tc>, window_params = [{transform_indices = @transform_0, window_bounds = array<i64: 256, 32>}, {transform_indices = @transform_1, window_bounds = array<i64: 256, 32>}, {transform_indices = @transform_2, window_bounds = array<i64: 256, 32>}, {transform_indices = @transform_3, window_bounds = array<i64: 256, 32>}, {pipeline_mode = #tpu.pipeline_mode<synchronous>, transform_indices = @transform_4, window_bounds = array<i64: 32, 128>}, {pipeline_mode = #tpu.pipeline_mode<synchronous>, transform_indices = @transform_5, window_bounds = array<i64: 32, 128>}, {pipeline_mode = #tpu.pipeline_mode<synchronous>, transform_indices = @transform_6, window_bounds = array<i64: 32, 128>}, {pipeline_mode = #tpu.pipeline_mode<synchronous>, transform_indices = @transform_7, window_bounds = array<i64: 32, 128>}, {pipeline_mode = #tpu.pipeline_mode<synchronous>, transform_indices = @transform_8, window_bounds = array<i64: 1, 128>}, {transform_indices = @transform_9, window_bounds = array<i64: 256, 128>}]} {
    %c0 = arith.constant 0 : index
    %c0_0 = arith.constant 0 : index
    %0 = vector.load %arg1[%c0, %c0_0] : memref<256x32xf32, #tpu.memory_space<vmem>>, vector<256x32xf32>
    %c0_1 = arith.constant 0 : index
    %c0_2 = arith.constant 0 : index
    %1 = vector.load %arg5[%c0_1, %c0_2] : memref<32x128xf32, #tpu.memory_space<vmem>>, vector<32x128xf32>
    %cst = arith.constant dense<0.000000e+00> : vector<256x128xf32>
    %2 = tpu.matmul %0, %1, %cst {dimension_numbers = #tpu.dot_dimension_numbers<[1], [0], [0], [1], [0, 0, 1, 1], [], []>} : vector<256x32xf32>, vector<32x128xf32>, vector<256x128xf32> -> vector<256x128xf32>
    %c0_3 = arith.constant 0 : index
    %c0_4 = arith.constant 0 : index
    %3 = vector.load %arg2[%c0_3, %c0_4] : memref<256x32xf32, #tpu.memory_space<vmem>>, vector<256x32xf32>
    %c0_5 = arith.constant 0 : index
    %c0_6 = arith.constant 0 : index
    %4 = vector.load %arg6[%c0_5, %c0_6] : memref<32x128xf32, #tpu.memory_space<vmem>>, vector<32x128xf32>
    %cst_7 = arith.constant dense<0.000000e+00> : vector<256x128xf32>
    %5 = tpu.matmul %3, %4, %cst_7 {dimension_numbers = #tpu.dot_dimension_numbers<[1], [0], [0], [1], [0, 0, 1, 1], [], []>} : vector<256x32xf32>, vector<32x128xf32>, vector<256x128xf32> -> vector<256x128xf32>
    %6 = arith.addf %2, %5 : vector<256x128xf32>
    %c0_8 = arith.constant 0 : index
    %c0_9 = arith.constant 0 : index
    %7 = vector.load %arg3[%c0_8, %c0_9] : memref<256x32xf32, #tpu.memory_space<vmem>>, vector<256x32xf32>
    %c0_10 = arith.constant 0 : index
    %c0_11 = arith.constant 0 : index
    %8 = vector.load %arg7[%c0_10, %c0_11] : memref<32x128xf32, #tpu.memory_space<vmem>>, vector<32x128xf32>
    %cst_12 = arith.constant dense<0.000000e+00> : vector<256x128xf32>
    %9 = tpu.matmul %7, %8, %cst_12 {dimension_numbers = #tpu.dot_dimension_numbers<[1], [0], [0], [1], [0, 0, 1, 1], [], []>} : vector<256x32xf32>, vector<32x128xf32>, vector<256x128xf32> -> vector<256x128xf32>
    %10 = arith.addf %6, %9 : vector<256x128xf32>
    %c0_13 = arith.constant 0 : index
    %c0_14 = arith.constant 0 : index
    %11 = vector.load %arg4[%c0_13, %c0_14] : memref<256x32xf32, #tpu.memory_space<vmem>>, vector<256x32xf32>
    %c0_15 = arith.constant 0 : index
    %c0_16 = arith.constant 0 : index
    %12 = vector.load %arg8[%c0_15, %c0_16] : memref<32x128xf32, #tpu.memory_space<vmem>>, vector<32x128xf32>
    %cst_17 = arith.constant dense<0.000000e+00> : vector<256x128xf32>
    %13 = tpu.matmul %11, %12, %cst_17 {dimension_numbers = #tpu.dot_dimension_numbers<[1], [0], [0], [1], [0, 0, 1, 1], [], []>} : vector<256x32xf32>, vector<32x128xf32>, vector<256x128xf32> -> vector<256x128xf32>
    %14 = arith.addf %10, %13 : vector<256x128xf32>
    %c0_18 = arith.constant 0 : index
    %c0_19 = arith.constant 0 : index
    %15 = vector.load %arg9[%c0_18, %c0_19] : memref<1x128xf32, #tpu.memory_space<vmem>>, vector<1x128xf32>
    %16 = vector.broadcast %15 : vector<1x128xf32> to vector<256x128xf32>
    %17 = arith.addf %14, %16 : vector<256x128xf32>
    %cst_20 = arith.constant 0.000000e+00 : f32
    %18 = vector.broadcast %cst_20 : f32 to vector<256x128xf32>
    %19 = arith.maximumf %17, %18 : vector<256x128xf32>
    %c0_21 = arith.constant 0 : index
    %c0_22 = arith.constant 0 : index
    %20 = vector.load %arg10[%c0_21, %c0_22] : memref<256x128xf32, #tpu.memory_space<vmem>>, vector<256x128xf32>
    tpu.vector_store %arg10[%c0_21, %c0_22], %19 {strides = array<i32>} : memref<256x128xf32, #tpu.memory_space<vmem>>, vector<256x128xf32>,
    return
  }
  func.func @transform_0(%arg0: i32) -> (i32, i32) {
    %c0_i32 = arith.constant 0 : i32
    %c0_i32_0 = arith.constant 0 : i32
    return %arg0, %c0_i32 : i32, i32
  }
  func.func @transform_1(%arg0: i32) -> (i32, i32) {
    %c0_i32 = arith.constant 0 : i32
    %c0_i32_0 = arith.constant 0 : i32
    return %arg0, %c0_i32 : i32, i32
  }
  func.func @transform_2(%arg0: i32) -> (i32, i32) {
    %c0_i32 = arith.constant 0 : i32
    %c0_i32_0 = arith.constant 0 : i32
    return %arg0, %c0_i32 : i32, i32
  }
  func.func @transform_3(%arg0: i32) -> (i32, i32) {
    %c0_i32 = arith.constant 0 : i32
    %c0_i32_0 = arith.constant 0 : i32
    return %arg0, %c0_i32 : i32, i32
  }
  func.func @transform_4(%arg0: i32) -> (i32, i32) {
    %c0_i32 = arith.constant 0 : i32
    %c0_i32_0 = arith.constant 0 : i32
    %c0_i32_1 = arith.constant 0 : i32
    return %c0_i32, %c0_i32_0 : i32, i32
  }
  func.func @transform_5(%arg0: i32) -> (i32, i32) {
    %c0_i32 = arith.constant 0 : i32
    %c0_i32_0 = arith.constant 0 : i32
    %c0_i32_1 = arith.constant 0 : i32
    return %c0_i32, %c0_i32_0 : i32, i32
  }
  func.func @transform_6(%arg0: i32) -> (i32, i32) {
    %c0_i32 = arith.constant 0 : i32
    %c0_i32_0 = arith.constant 0 : i32
    %c0_i32_1 = arith.constant 0 : i32
    return %c0_i32, %c0_i32_0 : i32, i32
  }
  func.func @transform_7(%arg0: i32) -> (i32, i32) {
    %c0_i32 = arith.constant 0 : i32
    %c0_i32_0 = arith.constant 0 : i32
    %c0_i32_1 = arith.constant 0 : i32
    return %c0_i32, %c0_i32_0 : i32, i32
  }
  func.func @transform_8(%arg0: i32) -> (i32, i32) {
    %c0_i32 = arith.constant 0 : i32
    %c0_i32_0 = arith.constant 0 : i32
    %c0_i32_1 = arith.constant 0 : i32
    return %c0_i32, %c0_i32_0 : i32, i32
  }
  func.func @transform_9(%arg0: i32) -> (i32, i32) {
    %c0_i32 = arith.constant 0 : i32
    %c0_i32_0 = arith.constant 0 : i32
    return %arg0, %c0_i32 : i32, i32
  }
}

module attributes {stable_mosaic.version = 11 : i64} {
  func.func @_attention_residual_kernel(%arg0: i32, %arg1: memref<1x256x128xf32, #tpu.memory_space<vmem>>, %arg2: memref<128x16xf32, #tpu.memory_space<vmem>>, %arg3: memref<1x16xf32, #tpu.memory_space<vmem>>, %arg4: memref<128x16xf32, #tpu.memory_space<vmem>>, %arg5: memref<1x16xf32, #tpu.memory_space<vmem>>, %arg6: memref<128x128xf32, #tpu.memory_space<vmem>>, %arg7: memref<1x128xf32, #tpu.memory_space<vmem>>, %arg8: memref<1x1xf32, #tpu.memory_space<vmem>>, %arg9: memref<1x256x128xf32, #tpu.memory_space<vmem>>) attributes {dimension_semantics = [#tpu.dimension_semantics<parallel>], iteration_bounds = array<i64: 2>, scalar_prefetch = 0 : i64, scratch_operands = 0 : i64, tpu.core_type = #tpu.core_type<tc>, window_params = [{transform_indices = @transform_0, window_bounds = array<i64: 1, 256, 128>}, {pipeline_mode = #tpu.pipeline_mode<synchronous>, transform_indices = @transform_1, window_bounds = array<i64: 128, 16>}, {pipeline_mode = #tpu.pipeline_mode<synchronous>, transform_indices = @transform_2, window_bounds = array<i64: 1, 16>}, {pipeline_mode = #tpu.pipeline_mode<synchronous>, transform_indices = @transform_3, window_bounds = array<i64: 128, 16>}, {pipeline_mode = #tpu.pipeline_mode<synchronous>, transform_indices = @transform_4, window_bounds = array<i64: 1, 16>}, {pipeline_mode = #tpu.pipeline_mode<synchronous>, transform_indices = @transform_5, window_bounds = array<i64: 128, 128>}, {pipeline_mode = #tpu.pipeline_mode<synchronous>, transform_indices = @transform_6, window_bounds = array<i64: 1, 128>}, {pipeline_mode = #tpu.pipeline_mode<synchronous>, transform_indices = @transform_7, window_bounds = array<i64: 1, 1>}, {transform_indices = @transform_8, window_bounds = array<i64: 1, 256, 128>}]} {
    %c0 = arith.constant 0 : index
    %c0_0 = arith.constant 0 : index
    %c0_1 = arith.constant 0 : index
    %0 = vector.load %arg1[%c0, %c0_0, %c0_1] : memref<1x256x128xf32, #tpu.memory_space<vmem>>, vector<1x256x128xf32>
    %1 = vector.shape_cast %0 : vector<1x256x128xf32> to vector<256x128xf32>
    %c0_2 = arith.constant 0 : index
    %c0_3 = arith.constant 0 : index
    %2 = vector.load %arg2[%c0_2, %c0_3] : memref<128x16xf32, #tpu.memory_space<vmem>>, vector<128x16xf32>
    %cst = arith.constant dense<0.000000e+00> : vector<256x16xf32>
    %3 = tpu.matmul %1, %2, %cst {dimension_numbers = #tpu.dot_dimension_numbers<[1], [0], [0], [1], [0, 0, 1, 1], [], []>} : vector<256x128xf32>, vector<128x16xf32>, vector<256x16xf32> -> vector<256x16xf32>
    %c0_4 = arith.constant 0 : index
    %c0_5 = arith.constant 0 : index
    %4 = vector.load %arg3[%c0_4, %c0_5] : memref<1x16xf32, #tpu.memory_space<vmem>>, vector<1x16xf32>
    %5 = vector.broadcast %4 : vector<1x16xf32> to vector<256x16xf32>
    %6 = arith.addf %3, %5 : vector<256x16xf32>
    %c0_6 = arith.constant 0 : index
    %c0_7 = arith.constant 0 : index
    %7 = vector.load %arg4[%c0_6, %c0_7] : memref<128x16xf32, #tpu.memory_space<vmem>>, vector<128x16xf32>
    %cst_8 = arith.constant dense<0.000000e+00> : vector<256x16xf32>
    %8 = tpu.matmul %1, %7, %cst_8 {dimension_numbers = #tpu.dot_dimension_numbers<[1], [0], [0], [1], [0, 0, 1, 1], [], []>} : vector<256x128xf32>, vector<128x16xf32>, vector<256x16xf32> -> vector<256x16xf32>
    %c0_9 = arith.constant 0 : index
    %c0_10 = arith.constant 0 : index
    %9 = vector.load %arg5[%c0_9, %c0_10] : memref<1x16xf32, #tpu.memory_space<vmem>>, vector<1x16xf32>
    %10 = vector.broadcast %9 : vector<1x16xf32> to vector<256x16xf32>
    %11 = arith.addf %8, %10 : vector<256x16xf32>
    %c0_11 = arith.constant 0 : index
    %c0_12 = arith.constant 0 : index
    %12 = vector.load %arg6[%c0_11, %c0_12] : memref<128x128xf32, #tpu.memory_space<vmem>>, vector<128x128xf32>
    %cst_13 = arith.constant dense<0.000000e+00> : vector<256x128xf32>
    %13 = tpu.matmul %1, %12, %cst_13 {dimension_numbers = #tpu.dot_dimension_numbers<[1], [0], [0], [1], [0, 0, 1, 1], [], []>} : vector<256x128xf32>, vector<128x128xf32>, vector<256x128xf32> -> vector<256x128xf32>
    %c0_14 = arith.constant 0 : index
    %c0_15 = arith.constant 0 : index
    %14 = vector.load %arg7[%c0_14, %c0_15] : memref<1x128xf32, #tpu.memory_space<vmem>>, vector<1x128xf32>
    %15 = vector.broadcast %14 : vector<1x128xf32> to vector<256x128xf32>
    %16 = arith.addf %13, %15 : vector<256x128xf32>
    %17 = arith.mulf %6, %6 : vector<256x16xf32>
    %cst_16 = arith.constant dense<0.000000e+00> : vector<256xf32>
    %18 = vector.multi_reduction <add>, %17, %cst_16 [1] : vector<256x16xf32> to vector<256xf32>
    %19 = vector.shape_cast %18 : vector<256xf32> to vector<256x1xf32>
    %20 = math.rsqrt %19 : vector<256x1xf32>
    %21 = vector.broadcast %20 : vector<256x1xf32> to vector<256x16xf32>
    %22 = arith.mulf %6, %21 : vector<256x16xf32>
    %23 = arith.mulf %11, %11 : vector<256x16xf32>
    %cst_17 = arith.constant dense<0.000000e+00> : vector<256xf32>
    %24 = vector.multi_reduction <add>, %23, %cst_17 [1] : vector<256x16xf32> to vector<256xf32>
    %25 = vector.shape_cast %24 : vector<256xf32> to vector<256x1xf32>
    %26 = math.rsqrt %25 : vector<256x1xf32>
    %27 = vector.broadcast %26 : vector<256x1xf32> to vector<256x16xf32>
    %28 = arith.mulf %11, %27 : vector<256x16xf32>
    %cst_18 = arith.constant dense<0.000000e+00> : vector<16xf32>
    %29 = vector.multi_reduction <add>, %28, %cst_18 [0] : vector<256x16xf32> to vector<16xf32>
    %30 = vector.shape_cast %29 : vector<16xf32> to vector<1x16xf32>
    %cst_19 = arith.constant 9.99999997E-7 : f32
    %31 = vector.broadcast %cst_19 : f32 to vector<1x16xf32>
    %32 = arith.addf %30, %31 : vector<1x16xf32>
    %33 = vector.broadcast %32 : vector<1x16xf32> to vector<256x16xf32>
    %34 = arith.mulf %22, %33 : vector<256x16xf32>
    %cst_20 = arith.constant dense<0.000000e+00> : vector<256xf32>
    %35 = vector.multi_reduction <add>, %34, %cst_20 [1] : vector<256x16xf32> to vector<256xf32>
    %36 = vector.shape_cast %35 : vector<256xf32> to vector<256x1xf32>
    %cst_21 = arith.constant 2.560000e+02 : f32
    %37 = vector.broadcast %cst_21 : f32 to vector<256x1xf32>
    %38 = arith.addf %37, %36 : vector<256x1xf32>
    %cst_22 = arith.constant 1.000000e+00 : f32
    %39 = vector.broadcast %cst_22 : f32 to vector<256x1xf32>
    %40 = arith.divf %39, %38 : vector<256x1xf32>
    %cst_23 = arith.constant dense<0.000000e+00> : vector<128xf32>
    %41 = vector.multi_reduction <add>, %16, %cst_23 [0] : vector<256x128xf32> to vector<128xf32>
    %42 = vector.shape_cast %41 : vector<128xf32> to vector<1x128xf32>
    %cst_24 = arith.constant dense<0.000000e+00> : vector<16x128xf32>
    %43 = tpu.matmul %28, %16, %cst_24 {dimension_numbers = #tpu.dot_dimension_numbers<[0], [0], [1], [1], [0, 1, 1, 1], [], []>} : vector<256x16xf32>, vector<256x128xf32>, vector<16x128xf32> -> vector<16x128xf32>
    %cst_25 = arith.constant dense<0.000000e+00> : vector<256x128xf32>
    %44 = tpu.matmul %22, %43, %cst_25 {dimension_numbers = #tpu.dot_dimension_numbers<[1], [0], [0], [1], [0, 0, 1, 1], [], []>} : vector<256x16xf32>, vector<16x128xf32>, vector<256x128xf32> -> vector<256x128xf32>
    %45 = vector.broadcast %42 : vector<1x128xf32> to vector<256x128xf32>
    %46 = arith.addf %45, %44 : vector<256x128xf32>
    %47 = vector.broadcast %40 : vector<256x1xf32> to vector<256x128xf32>
    %48 = arith.mulf %46, %47 : vector<256x128xf32>
    %c0_26 = arith.constant 0 : index
    %c0_27 = arith.constant 0 : index
    %49 = vector.load %arg8[%c0_26, %c0_27] : memref<1x1xf32, #tpu.memory_space<vmem>>, vector<1x1xf32>
    %50 = vector.broadcast %49 : vector<1x1xf32> to vector<256x128xf32>
    %51 = arith.mulf %50, %48 : vector<256x128xf32>
    %52 = arith.addf %51, %1 : vector<256x128xf32>
    %c0_28 = arith.constant 0 : index
    %c0_29 = arith.constant 0 : index
    %c0_30 = arith.constant 0 : index
    %53 = vector.load %arg9[%c0_28, %c0_29, %c0_30] : memref<1x256x128xf32, #tpu.memory_space<vmem>>, vector<1x256x128xf32>
    %54 = vector.shape_cast %53 : vector<1x256x128xf32> to vector<256x128xf32>
    %55 = vector.shape_cast %52 : vector<256x128xf32> to vector<1x256x128xf32>
    tpu.vector_store %arg9[%c0_28, %c0_29, %c0_30], %55 {strides = array<i32>} : memref<1x256x128xf32, #tpu.memory_space<vmem>>, vector<1x256x128xf32>,
    return
  }
  func.func @transform_0(%arg0: i32) -> (i32, i32, i32) {
    %c0_i32 = arith.constant 0 : i32
    %c0_i32_0 = arith.constant 0 : i32
    %c0_i32_1 = arith.constant 0 : i32
    return %arg0, %c0_i32, %c0_i32_0 : i32, i32, i32
  }
  func.func @transform_1(%arg0: i32) -> (i32, i32) {
    %c0_i32 = arith.constant 0 : i32
    %c0_i32_0 = arith.constant 0 : i32
    %c0_i32_1 = arith.constant 0 : i32
    return %c0_i32, %c0_i32_0 : i32, i32
  }
  func.func @transform_2(%arg0: i32) -> (i32, i32) {
    %c0_i32 = arith.constant 0 : i32
    %c0_i32_0 = arith.constant 0 : i32
    %c0_i32_1 = arith.constant 0 : i32
    return %c0_i32, %c0_i32_0 : i32, i32
  }
  func.func @transform_3(%arg0: i32) -> (i32, i32) {
    %c0_i32 = arith.constant 0 : i32
    %c0_i32_0 = arith.constant 0 : i32
    %c0_i32_1 = arith.constant 0 : i32
    return %c0_i32, %c0_i32_0 : i32, i32
  }
  func.func @transform_4(%arg0: i32) -> (i32, i32) {
    %c0_i32 = arith.constant 0 : i32
    %c0_i32_0 = arith.constant 0 : i32
    %c0_i32_1 = arith.constant 0 : i32
    return %c0_i32, %c0_i32_0 : i32, i32
  }
  func.func @transform_5(%arg0: i32) -> (i32, i32) {
    %c0_i32 = arith.constant 0 : i32
    %c0_i32_0 = arith.constant 0 : i32
    %c0_i32_1 = arith.constant 0 : i32
    return %c0_i32, %c0_i32_0 : i32, i32
  }
  func.func @transform_6(%arg0: i32) -> (i32, i32) {
    %c0_i32 = arith.constant 0 : i32
    %c0_i32_0 = arith.constant 0 : i32
    %c0_i32_1 = arith.constant 0 : i32
    return %c0_i32, %c0_i32_0 : i32, i32
  }
  func.func @transform_7(%arg0: i32) -> (i32, i32) {
    %c0_i32 = arith.constant 0 : i32
    %c0_i32_0 = arith.constant 0 : i32
    %c0_i32_1 = arith.constant 0 : i32
    return %c0_i32, %c0_i32_0 : i32, i32
  }
  func.func @transform_8(%arg0: i32) -> (i32, i32, i32) {
    %c0_i32 = arith.constant 0 : i32
    %c0_i32_0 = arith.constant 0 : i32
    %c0_i32_1 = arith.constant 0 : i32
    return %arg0, %c0_i32, %c0_i32_0 : i32, i32, i32
  }
}

</mosaic_0001>

<llo_original>
// kernel: _lambda_.2
$region0: #{_lambda_.2}
  #allocation0 [shape = 'u32[]', space=smem, size = 0x4, offset = 0x4, fixed_abs, tag = 'smem constant byte address 0x4 - core index']
  #allocation1 [shape = 'u32[144,128]{1,0:T(1,128)}', space=vmem, size = 0x12000, scoped, tag = 'internal scratch']
  %s0 = inlined_call_operand.hbm [shape: f32[512,32], index: 0, kind: input, shape index: {}]
  %s1 = inlined_call_operand.hbm [shape: f32[512,32], index: 1, kind: input, shape index: {}]
  %s2 = inlined_call_operand.hbm [shape: f32[512,32], index: 2, kind: input, shape index: {}]
  %s3 = inlined_call_operand.hbm [shape: f32[512,32], index: 3, kind: input, shape index: {}]
  %s4 = inlined_call_operand.hbm [shape: f32[32,128], index: 4, kind: input, shape index: {}]
  %s5 = inlined_call_operand.hbm [shape: f32[32,128], index: 5, kind: input, shape index: {}]
  %s6 = inlined_call_operand.vmem [shape: f32[32,128], index: 6, kind: input, shape index: {}]
  %s7 = inlined_call_operand.vmem [shape: f32[32,128], index: 7, kind: input, shape index: {}]
  %s8 = inlined_call_operand.vmem [shape: f32[1,128], index: 8, kind: input, shape index: {}]
  %s9 = inlined_call_operand.vmem [shape: f32[512,128], index: 9, kind: output, shape index: {}]
  %s10 = sld [smem:[#allocation0]]
  $region93: #{_lambda_.2} parent=0
    _
  %s12 = ssub.s32 1, %s10
  %s13 = scalar_select 0, %s12, %s10
  $region1: #{_lambda_.2} parent=0
    #allocation2 [shape = 'u8[262144]{0}', space=vmem, size = 0x40000, scoped, tag = 'input window, operand 0']
    #allocation3 [shape = 's32[2]{0}', space=sflag, size = 0x8, scoped, tag = 'scoped memory for _lambda_.2']
    #allocation4 [shape = 'u8[262144]{0}', space=vmem, size = 0x40000, scoped, tag = 'input window, operand 1']
    #allocation5 [shape = 's32[2]{0}', space=sflag, size = 0x8, scoped, tag = 'scoped memory for _lambda_.2']
    #allocation6 [shape = 'u8[262144]{0}', space=vmem, size = 0x40000, scoped, tag = 'input window, operand 2']
    #allocation7 [shape = 'u8[262144]{0}', space=vmem, size = 0x40000, scoped, tag = 'input window, operand 3']
    #allocation8 [shape = 's32[2]{0}', space=sflag, size = 0x8, scoped, tag = 'scoped memory for _lambda_.2']
    #allocation9 [shape = 'u8[16384]{0}', space=vmem, size = 0x4000, scoped, tag = 'input window, operand 4, single buffered']
    #allocation10 [shape = 'u8[16384]{0}', space=vmem, size = 0x4000, scoped, tag = 'input window, operand 5, single buffered']
    #allocation11 [shape = 's32[1]{0}', space=sflag, size = 0x4, scoped, tag = 'scoped memory for _lambda_.2']
    %14 = vsyncpa [#allocation3], 0
    %s15 = scalar_lea.sflag [#allocation3], 1
    %16 = vsyncpa %s15, 0
    %17 = vsyncpa [#allocation5], 0
    %s18 = scalar_lea.sflag [#allocation5], 1
    %19 = vsyncpa %s18, 0
    %20 = vsyncpa [#allocation8], 0
    %s21 = scalar_lea.sflag [#allocation8], 1
    %22 = vsyncpa %s21, 0
    %23 = vsyncpa [#allocation11], 0
    loop: start=0, step=1, limit=4
    $region2: #{_lambda_.2} parent=1 // loop_pre_header
      _
    $region3: #{_lambda_.2} parent=1 // loop_header
      %s25 = sphi 0, %s29
      %p26 = scmp.ge.s32.totalorder %s25, 4
      %s35 = sphi 0, %s37
      %s38 = sphi 0, %s35
      %s39 = sphi 0, %s38
      %s55 = sphi 0, %s39
      %s61 = sphi 0, %s63
      %s64 = sphi 0, %s61
      %s65 = sphi 0, %s64
      %s81 = sphi 0, %s65
      %s87 = sphi 0, %s89
      %s90 = sphi 0, %s87
      %s91 = sphi 0, %s90
      %s107 = sphi 0, %s91
      %s113 = sphi 0, %s115
      %s116 = sphi 0, %s113
      %s117 = sphi 0, %s116
      %s133 = sphi 0, %s117
      %s137 = sphi 0, %s137
      %s139 = sphi 0, %s137
      %s140 = sphi 0, %s139
      %s154 = sphi 0, %s140
      %s158 = sphi 0, %s158
      %s160 = sphi 0, %s158
      %s161 = sphi 0, %s160
      %s175 = sphi 0, %s161
      %s179 = sphi 0, %s179
      %s181 = sphi 0, %s179
      %s182 = sphi 0, %s181
      %s196 = sphi 0, %s182
      %s200 = sphi 0, %s200
      %s202 = sphi 0, %s200
      %s203 = sphi 0, %s202
      %s217 = sphi 0, %s203
      %s221 = sphi 0, %s221
      %s223 = sphi 0, %s221
      %s224 = sphi 0, %s223
      %s238 = sphi 0, %s224
      %s244 = sphi 0, %s246
      %s247 = sphi 0, %s244
      %s248 = sphi 0, %s247
      %s264 = sphi 0, %s248
    $region4: #{_lambda_.2} parent=1 // loop_header_branch
      %28 = sbr.rel (%p26) target = $region8
    $region5: #{_lambda_.2} parent=1 // loop_body
      %s30 = ssub.s32 %s25, 1
      %s31 = ssub.s32 %s25, 2
      %s32 = sadd.s32 %s25, 1
      %s33 = ssub.s32 %s25, %s32
      %p34 = scmp.eq.s32.totalorder %s33, 0
      %s36 = sadd.s32 %s35, 1
      %s37 = scalar_select %p34, %s35, %s36
      %p40 = pneg %p34
      %p41 = scmp.eq.s32.totalorder %s25, 1
      %p42 = por %p40, %p41
      %p43 = scmp.ne.s32.totalorder %s35, %s38
      %p44 = scmp.eq.s32.totalorder %s25, 0
      %p45 = por %p43, %p44
      %p46 = scmp.ne.s32.totalorder %s35, %s38
      %p47 = scmp.eq.s32.totalorder %s30, 1
      %p48 = por %p46, %p47
      %p49 = scmp.ne.s32.totalorder %s38, %s39
      %p50 = scmp.eq.s32.totalorder %s30, 0
      %p51 = por %p49, %p50
      %p52 = scmp.ne.s32.totalorder %s38, %s39
      %p53 = scmp.eq.s32.totalorder %s31, 1
      %p54 = por %p52, %p53
      %p56 = scmp.ne.s32.totalorder %s39, %s55
      %p57 = scmp.eq.s32.totalorder %s31, 0
      %p58 = por %p56, %p57
      %s59 = ssub.s32 %s25, %s32
      %p60 = scmp.eq.s32.totalorder %s59, 0
      %s62 = sadd.s32 %s61, 1
      %s63 = scalar_select %p60, %s61, %s62
      %p66 = pneg %p60
      %p67 = scmp.eq.s32.totalorder %s25, 1
      %p68 = por %p66, %p67
      %p69 = scmp.ne.s32.totalorder %s61, %s64
      %p70 = scmp.eq.s32.totalorder %s25, 0
      %p71 = por %p69, %p70
      %p72 = scmp.ne.s32.totalorder %s61, %s64
      %p73 = scmp.eq.s32.totalorder %s30, 1
      %p74 = por %p72, %p73
      %p75 = scmp.ne.s32.totalorder %s64, %s65
      %p76 = scmp.eq.s32.totalorder %s30, 0
      %p77 = por %p75, %p76
      %p78 = scmp.ne.s32.totalorder %s64, %s65
      %p79 = scmp.eq.s32.totalorder %s31, 1
      %p80 = por %p78, %p79
      %p82 = scmp.ne.s32.totalorder %s65, %s81
      %p83 = scmp.eq.s32.totalorder %s31, 0
      %p84 = por %p82, %p83
      %s85 = ssub.s32 %s25, %s32
      %p86 = scmp.eq.s32.totalorder %s85, 0
      %s88 = sadd.s32 %s87, 1
      %s89 = scalar_select %p86, %s87, %s88
      %p92 = pneg %p86
      %p93 = scmp.eq.s32.totalorder %s25, 1
      %p94 = por %p92, %p93
      %p95 = scmp.ne.s32.totalorder %s87, %s90
      %p96 = scmp.eq.s32.totalorder %s25, 0
      %p97 = por %p95, %p96
      %p98 = scmp.ne.s32.totalorder %s87, %s90
      %p99 = scmp.eq.s32.totalorder %s30, 1
      %p100 = por %p98, %p99
      %p101 = scmp.ne.s32.totalorder %s90, %s91
      %p102 = scmp.eq.s32.totalorder %s30, 0
      %p103 = por %p101, %p102
      %p104 = scmp.ne.s32.totalorder %s90, %s91
      %p105 = scmp.eq.s32.totalorder %s31, 1
      %p106 = por %p104, %p105
      %p108 = scmp.ne.s32.totalorder %s91, %s107
      %p109 = scmp.eq.s32.totalorder %s31, 0
      %p110 = por %p108, %p109
      %s111 = ssub.s32 %s25, %s32
      %p112 = scmp.eq.s32.totalorder %s111, 0
      %s114 = sadd.s32 %s113, 1
      %s115 = scalar_select %p112, %s113, %s114
      %p118 = pneg %p112
      %p119 = scmp.eq.s32.totalorder %s25, 1
      %p120 = por %p118, %p119
      %p121 = scmp.ne.s32.totalorder %s113, %s116
      %p122 = scmp.eq.s32.totalorder %s25, 0
      %p123 = por %p121, %p122
      %p124 = scmp.ne.s32.totalorder %s113, %s116
      %p125 = scmp.eq.s32.totalorder %s30, 1
      %p126 = por %p124, %p125
      %p127 = scmp.ne.s32.totalorder %s116, %s117
      %p128 = scmp.eq.s32.totalorder %s30, 0
      %p129 = por %p127, %p128
      %p130 = scmp.ne.s32.totalorder %s116, %s117
      %p131 = scmp.eq.s32.totalorder %s31, 1
      %p132 = por %p130, %p131
      %p134 = scmp.ne.s32.totalorder %s117, %s133
      %p135 = scmp.eq.s32.totalorder %s31, 0
      %p136 = por %p134, %p135
      %s138 = sadd.s32 %s137, 1
      %p141 = scmp.eq.s32.totalorder %s25, 1
      %p142 = scmp.ne.s32.totalorder %s137, %s139
      %p143 = scmp.eq.s32.totalorder %s25, 0
      %p144 = por %p142, %p143
      %p145 = scmp.ne.s32.totalorder %s137, %s139
      %p146 = scmp.eq.s32.totalorder %s30, 1
      %p147 = por %p145, %p146
      %p148 = scmp.ne.s32.totalorder %s139, %s140
      %p149 = scmp.eq.s32.totalorder %s30, 0
      %p150 = por %p148, %p149
      %p151 = scmp.ne.s32.totalorder %s139, %s140
      %p152 = scmp.eq.s32.totalorder %s31, 1
      %p153 = por %p151, %p152
      %p155 = scmp.ne.s32.totalorder %s140, %s154
      %p156 = scmp.eq.s32.totalorder %s31, 0
      %p157 = por %p155, %p156
      %s159 = sadd.s32 %s158, 1
      %p162 = scmp.eq.s32.totalorder %s25, 1
      %p163 = scmp.ne.s32.totalorder %s158, %s160
      %p164 = scmp.eq.s32.totalorder %s25, 0
      %p165 = por %p163, %p164
      %p166 = scmp.ne.s32.totalorder %s158, %s160
      %p167 = scmp.eq.s32.totalorder %s30, 1
      %p168 = por %p166, %p167
      %p169 = scmp.ne.s32.totalorder %s160, %s161
      %p170 = scmp.eq.s32.totalorder %s30, 0
      %p171 = por %p169, %p170
      %p172 = scmp.ne.s32.totalorder %s160, %s161
      %p173 = scmp.eq.s32.totalorder %s31, 1
      %p174 = por %p172, %p173
      %p176 = scmp.ne.s32.totalorder %s161, %s175
      %p177 = scmp.eq.s32.totalorder %s31, 0
      %p178 = por %p176, %p177
      %s180 = sadd.s32 %s179, 1
      %p183 = scmp.eq.s32.totalorder %s25, 1
      %p184 = scmp.ne.s32.totalorder %s179, %s181
      %p185 = scmp.eq.s32.totalorder %s25, 0
      %p186 = por %p184, %p185
      %p187 = scmp.ne.s32.totalorder %s179, %s181
      %p188 = scmp.eq.s32.totalorder %s30, 1
      %p189 = por %p187, %p188
      %p190 = scmp.ne.s32.totalorder %s181, %s182
      %p191 = scmp.eq.s32.totalorder %s30, 0
      %p192 = por %p190, %p191
      %p193 = scmp.ne.s32.totalorder %s181, %s182
      %p194 = scmp.eq.s32.totalorder %s31, 1
      %p195 = por %p193, %p194
      %p197 = scmp.ne.s32.totalorder %s182, %s196
      %p198 = scmp.eq.s32.totalorder %s31, 0
      %p199 = por %p197, %p198
      %s201 = sadd.s32 %s200, 1
      %p204 = scmp.eq.s32.totalorder %s25, 1
      %p205 = scmp.ne.s32.totalorder %s200, %s202
      %p206 = scmp.eq.s32.totalorder %s25, 0
      %p207 = por %p205, %p206
      %p208 = scmp.ne.s32.totalorder %s200, %s202
      %p209 = scmp.eq.s32.totalorder %s30, 1
      %p210 = por %p208, %p209
      %p211 = scmp.ne.s32.totalorder %s202, %s203
      %p212 = scmp.eq.s32.totalorder %s30, 0
      %p213 = por %p211, %p212
      %p214 = scmp.ne.s32.totalorder %s202, %s203
      %p215 = scmp.eq.s32.totalorder %s31, 1
      %p216 = por %p214, %p215
      %p218 = scmp.ne.s32.totalorder %s203, %s217
      %p219 = scmp.eq.s32.totalorder %s31, 0
      %p220 = por %p218, %p219
      %s222 = sadd.s32 %s221, 1
      %p225 = scmp.eq.s32.totalorder %s25, 1
      %p226 = scmp.ne.s32.totalorder %s221, %s223
      %p227 = scmp.eq.s32.totalorder %s25, 0
      %p228 = por %p226, %p227
      %p229 = scmp.ne.s32.totalorder %s221, %s223
      %p230 = scmp.eq.s32.totalorder %s30, 1
      %p231 = por %p229, %p230
      %p232 = scmp.ne.s32.totalorder %s223, %s224
      %p233 = scmp.eq.s32.totalorder %s30, 0
      %p234 = por %p232, %p233
      %p235 = scmp.ne.s32.totalorder %s223, %s224
      %p236 = scmp.eq.s32.totalorder %s31, 1
      %p237 = por %p235, %p236
      %p239 = scmp.ne.s32.totalorder %s224, %s238
      %p240 = scmp.eq.s32.totalorder %s31, 0
      %p241 = por %p239, %p240
      %s242 = ssub.s32 %s25, %s32
      %p243 = scmp.eq.s32.totalorder %s242, 0
      %s245 = sadd.s32 %s244, 1
      %s246 = scalar_select %p243, %s244, %s245
      %p249 = pneg %p243
      %p250 = scmp.eq.s32.totalorder %s25, 1
      %p251 = por %p249, %p250
      %p252 = scmp.ne.s32.totalorder %s244, %s247
      %p253 = scmp.eq.s32.totalorder %s25, 0
      %p254 = por %p252, %p253
      %p255 = scmp.ne.s32.totalorder %s244, %s247
      %p256 = scmp.eq.s32.totalorder %s30, 1
      %p257 = por %p255, %p256
      %p258 = scmp.ne.s32.totalorder %s247, %s248
      %p259 = scmp.eq.s32.totalorder %s30, 0
      %p260 = por %p258, %p259
      %p261 = scmp.ne.s32.totalorder %s247, %s248
      %p262 = scmp.eq.s32.totalorder %s31, 1
      %p263 = por %p261, %p262
      %p265 = scmp.ne.s32.totalorder %s248, %s264
      %p266 = scmp.eq.s32.totalorder %s31, 0
      %p267 = por %p265, %p266
      %p268 = scmp.le.s32.totalorder 1, %s25
      %p269 = scmp.lt.s32.totalorder %s25, 3
      %p270 = pnand %p268, %p269
      %p271 = pneg %p270
      // Predicated region
      $region9: #{_lambda_.2} parent=5 // pred_check
        _
      $region10: #{_lambda_.2} parent=5 // pred_check_branch
        %273 = sbr.rel (%p270) target = $region12
      $region11: #{_lambda_.2} parent=5 // pred_region
        %s274 = ssub.s32 %s25, 1
        // Predicated region
        $region13: #{_lambda_.2} parent=11 // pred_check
          %p275 = pneg %p150
        $region14: #{_lambda_.2} parent=11 // pred_check_branch
          %277 = sbr.rel (%p275) target = $region16
        $region15: #{_lambda_.2} parent=11 // pred_region
          %s279 = ssub.s32 512, 512
          %280 = vsyncadd [#allocation8], %s279
          %s281 = sshll.u32 [#allocation9], 4
          %s282 = int_to_ptr.vmem [resolvable:$true] %s281
          %287 = dma.hbm_to_vmem [thread:$0]  %s4, 512, %s282, [#allocation8], 128, 128, 8
        $region16: #{_lambda_.2} parent=11 // pred_fallthru
          _
        // Predicated region
        $region17: #{_lambda_.2} parent=11 // pred_check
          %p288 = pneg %p171
        $region18: #{_lambda_.2} parent=11 // pred_check_branch
          %290 = sbr.rel (%p288) target = $region20
        $region19: #{_lambda_.2} parent=11 // pred_region
          %s292 = ssub.s32 512, 512
          %293 = vsyncadd [#allocation11], %s292
          %s294 = sshll.u32 [#allocation10], 4
          %s295 = int_to_ptr.vmem [resolvable:$true] %s294
          %300 = dma.hbm_to_vmem [thread:$0]  %s5, 512, %s295, [#allocation11], 128, 128, 8
        $region20: #{_lambda_.2} parent=11 // pred_fallthru
          _
        // Predicated region
        $region21: #{_lambda_.2} parent=11 // pred_check
          %p301 = pneg %p192
        $region22: #{_lambda_.2} parent=11 // pred_check_branch
          %303 = sbr.rel (%p301) target = $region24
        $region23: #{_lambda_.2} parent=11 // pred_region
          _
        $region24: #{_lambda_.2} parent=11 // pred_fallthru
          _
        // Predicated region
        $region25: #{_lambda_.2} parent=11 // pred_check
          %p304 = pneg %p213
        $region26: #{_lambda_.2} parent=11 // pred_check_branch
          %306 = sbr.rel (%p304) target = $region28
        $region27: #{_lambda_.2} parent=11 // pred_region
          _
        $region28: #{_lambda_.2} parent=11 // pred_fallthru
          _
        // Predicated region
        $region29: #{_lambda_.2} parent=11 // pred_check
          %p307 = pneg %p234
        $region30: #{_lambda_.2} parent=11 // pred_check_branch
          %309 = sbr.rel (%p307) target = $region32
        $region31: #{_lambda_.2} parent=11 // pred_region
          _
        $region32: #{_lambda_.2} parent=11 // pred_fallthru
          _
      $region12: #{_lambda_.2} parent=5 // pred_fallthru
        _
      %p310 = scmp.lt.s32.totalorder %s25, 2
      // Predicated region
      $region33: #{_lambda_.2} parent=5 // pred_check
        %p311 = pneg %p310
      $region34: #{_lambda_.2} parent=5 // pred_check_branch
        %313 = sbr.rel (%p311) target = $region36
      $region35: #{_lambda_.2} parent=5 // pred_region
        // Predicated region
        $region37: #{_lambda_.2} parent=35 // pred_check
          %p314 = pneg %p45
        $region38: #{_lambda_.2} parent=35 // pred_check_branch
          %316 = sbr.rel (%p314) target = $region40
        $region39: #{_lambda_.2} parent=35 // pred_region
          %s317 = sand.u32 %s35, 1
          %s318 = scalar_lea.sflag [#allocation3], %s317
          %s319 = sand.u32 %s35, 1
          %s320 = smul.addr %s319, 256
          %s321 = scalar_lea.vmem [#allocation2], %s320
          %s322 = smul.u32 32, %s25
          %s324 = ssub.s32 4096, 4096
          %325 = vsyncadd %s318, %s324
          %s326 = smul.addr %s322, 128
          %s327 = scalar_lea.hbm %s0, %s326
          %s328 = sshll.u32 %s321, 4
          %s329 = int_to_ptr.vmem [resolvable:$true] %s328
          %334 = dma.hbm_to_vmem [thread:$0]  %s327, 4096, %s329, %s318, 128, 128, 8
        $region40: #{_lambda_.2} parent=35 // pred_fallthru
          _
        // Predicated region
        $region41: #{_lambda_.2} parent=35 // pred_check
          %p335 = pneg %p71
        $region42: #{_lambda_.2} parent=35 // pred_check_branch
          %337 = sbr.rel (%p335) target = $region44
        $region43: #{_lambda_.2} parent=35 // pred_region
          %s338 = sand.u32 %s25, 1
          %s339 = scalar_lea.sflag [#allocation5], %s338
          %s340 = sand.u32 %s61, 1
          %s341 = smul.addr %s340, 256
          %s342 = scalar_lea.vmem [#allocation4], %s341
          %s343 = smul.u32 32, %s25
          %s345 = ssub.s32 4096, 4096
          %346 = vsyncadd %s339, %s345
          %s347 = smul.addr %s343, 128
          %s348 = scalar_lea.hbm %s1, %s347
          %s349 = sshll.u32 %s342, 4
          %s350 = int_to_ptr.vmem [resolvable:$true] %s349
          %355 = dma.hbm_to_vmem [thread:$0]  %s348, 4096, %s350, %s339, 128, 128, 8
        $region44: #{_lambda_.2} parent=35 // pred_fallthru
          _
        // Predicated region
        $region45: #{_lambda_.2} parent=35 // pred_check
          %p356 = pneg %p97
        $region46: #{_lambda_.2} parent=35 // pred_check_branch
          %358 = sbr.rel (%p356) target = $region48
        $region47: #{_lambda_.2} parent=35 // pred_region
          %s359 = sand.u32 %s25, 1
          %s360 = scalar_lea.sflag [#allocation5], %s359
          %s361 = sand.u32 %s87, 1
          %s362 = smul.addr %s361, 256
          %s363 = scalar_lea.vmem [#allocation6], %s362
          %s364 = smul.u32 32, %s25
          %s366 = ssub.s32 4096, 4096
          %367 = vsyncadd %s360, %s366
          %s368 = smul.addr %s364, 128
          %s369 = scalar_lea.hbm %s2, %s368
          %s370 = sshll.u32 %s363, 4
          %s371 = int_to_ptr.vmem [resolvable:$true] %s370
          %376 = dma.hbm_to_vmem [thread:$0]  %s369, 4096, %s371, %s360, 128, 128, 8
        $region48: #{_lambda_.2} parent=35 // pred_fallthru
          _
        // Predicated region
        $region49: #{_lambda_.2} parent=35 // pred_check
          %p377 = pneg %p123
        $region50: #{_lambda_.2} parent=35 // pred_check_branch
          %379 = sbr.rel (%p377) target = $region52
        $region51: #{_lambda_.2} parent=35 // pred_region
          %s380 = sand.u32 %s25, 1
          %s381 = scalar_lea.sflag [#allocation8], %s380
          %s382 = sand.u32 %s113, 1
          %s383 = smul.addr %s382, 256
          %s384 = scalar_lea.vmem [#allocation7], %s383
          %s385 = smul.u32 32, %s25
          %s387 = ssub.s32 4096, 4096
          %388 = vsyncadd %s381, %s387
          %s389 = smul.addr %s385, 128
          %s390 = scalar_lea.hbm %s3, %s389
          %s391 = sshll.u32 %s384, 4
          %s392 = int_to_ptr.vmem [resolvable:$true] %s391
          %397 = dma.hbm_to_vmem [thread:$0]  %s390, 4096, %s392, %s381, 128, 128, 8
        $region52: #{_lambda_.2} parent=35 // pred_fallthru
          _
      $region36: #{_lambda_.2} parent=5 // pred_fallthru
        _
      %p398 = scmp.le.s32.totalorder 1, %s25
      %p399 = scmp.lt.s32.totalorder %s25, 3
      %p400 = pnand %p398, %p399
      %p401 = pneg %p400
      // Predicated region
      $region53: #{_lambda_.2} parent=5 // pred_check
        _
      $region54: #{_lambda_.2} parent=5 // pred_check_branch
        %403 = sbr.rel (%p400) target = $region56
      $region55: #{_lambda_.2} parent=5 // pred_region
        %s404 = ssub.s32 %s25, 1
        %s405 = sand.u32 %s38, 1
        %s406 = scalar_lea.sflag [#allocation3], %s405
        %s407 = sand.u32 %s38, 1
        %s408 = smul.addr %s407, 256
        %s409 = scalar_lea.vmem [#allocation2], %s408
        // Predicated region
        $region57: #{_lambda_.2} parent=55 // pred_check
          %p410 = pneg %p51
        $region58: #{_lambda_.2} parent=55 // pred_check_branch
          %412 = sbr.rel (%p410) target = $region60
        $region59: #{_lambda_.2} parent=55 // pred_region
          %413 = dma.done %s406, 4096
        $region60: #{_lambda_.2} parent=55 // pred_fallthru
          _
        %s414 = sand.u32 %s30, 1
        %s415 = scalar_lea.sflag [#allocation5], %s414
        %s416 = sand.u32 %s64, 1
        %s417 = smul.addr %s416, 256
        %s418 = scalar_lea.vmem [#allocation4], %s417
        // Predicated region
        $region61: #{_lambda_.2} parent=55 // pred_check
          %p419 = pneg %p77
        $region62: #{_lambda_.2} parent=55 // pred_check_branch
          %421 = sbr.rel (%p419) target = $region64
        $region63: #{_lambda_.2} parent=55 // pred_region
          %422 = dma.done %s415, 4096
        $region64: #{_lambda_.2} parent=55 // pred_fallthru
          _
        %s423 = sand.u32 %s30, 1
        %s424 = scalar_lea.sflag [#allocation5], %s423
        %s425 = sand.u32 %s90, 1
        %s426 = smul.addr %s425, 256
        %s427 = scalar_lea.vmem [#allocation6], %s426
        // Predicated region
        $region65: #{_lambda_.2} parent=55 // pred_check
          %p428 = pneg %p103
        $region66: #{_lambda_.2} parent=55 // pred_check_branch
          %430 = sbr.rel (%p428) target = $region68
        $region67: #{_lambda_.2} parent=55 // pred_region
          %431 = dma.done %s424, 4096
        $region68: #{_lambda_.2} parent=55 // pred_fallthru
          _
        %s432 = sand.u32 %s30, 1
        %s433 = scalar_lea.sflag [#allocation8], %s432
        %s434 = sand.u32 %s116, 1
        %s435 = smul.addr %s434, 256
        %s436 = scalar_lea.vmem [#allocation7], %s435
        // Predicated region
        $region69: #{_lambda_.2} parent=55 // pred_check
          %p437 = pneg %p129
        $region70: #{_lambda_.2} parent=55 // pred_check_branch
          %439 = sbr.rel (%p437) target = $region72
        $region71: #{_lambda_.2} parent=55 // pred_region
          %440 = dma.done %s433, 4096
        $region72: #{_lambda_.2} parent=55 // pred_fallthru
          _
        // Predicated region
        $region73: #{_lambda_.2} parent=55 // pred_check
          %p441 = pneg %p150
        $region74: #{_lambda_.2} parent=55 // pred_check_branch
          %443 = sbr.rel (%p441) target = $region76
        $region75: #{_lambda_.2} parent=55 // pred_region
          %444 = dma.done [#allocation8], 512
        $region76: #{_lambda_.2} parent=55 // pred_fallthru
          _
        // Predicated region
        $region77: #{_lambda_.2} parent=55 // pred_check
          %p445 = pneg %p171
        $region78: #{_lambda_.2} parent=55 // pred_check_branch
          %447 = sbr.rel (%p445) target = $region80
        $region79: #{_lambda_.2} parent=55 // pred_region
          %448 = dma.done [#allocation11], 512
        $region80: #{_lambda_.2} parent=55 // pred_fallthru
          _
        %s449 = sand.u32 %s38, 1
        %s450 = scalar_lea.sflag [#allocation3], %s449
        %s451 = sand.u32 %s38, 1
        %s452 = smul.addr %s451, 256
        %s453 = scalar_lea.vmem [#allocation2], %s452
        %p454 = pneg %p51
        %p455 = pneg %p48
        %s456 = sand.u32 %s30, 1
        %s457 = scalar_lea.sflag [#allocation5], %s456
        %s458 = sand.u32 %s64, 1
        %s459 = smul.addr %s458, 256
        %s460 = scalar_lea.vmem [#allocation4], %s459
        %p461 = pneg %p77
        %p462 = pneg %p74
        %s463 = sand.u32 %s30, 1
        %s464 = scalar_lea.sflag [#allocation5], %s463
        %s465 = sand.u32 %s90, 1
        %s466 = smul.addr %s465, 256
        %s467 = scalar_lea.vmem [#allocation6], %s466
        %p468 = pneg %p103
        %p469 = pneg %p100
        %s470 = sand.u32 %s30, 1
        %s471 = scalar_lea.sflag [#allocation8], %s470
        %s472 = sand.u32 %s116, 1
        %s473 = smul.addr %s472, 256
        %s474 = scalar_lea.vmem [#allocation7], %s473
        %p475 = pneg %p129
        %p476 = pneg %p126
        %p477 = pneg %p150
        %p478 = pneg %p147
        %p479 = pneg %p171
        %p480 = pneg %p168
        %p481 = pneg %p192
        %p482 = pneg %p189
        %p483 = pneg %p213
        %p484 = pneg %p210
        %p485 = pneg %p234
        %p486 = pneg %p231
        %p487 = pneg %p260
        %p488 = pneg %p257
        %s489 = smul.u32 32, %s30
        %p490 = scmp.lt.s32.totalorder %s489, 63
        %s491 = scalar_select %p490, %s489, 63
        %s492 = smul.addr %s491, 8
        %s493 = scalar_lea.vmem %s9, %s492
        %s494 = smul.u32 32, %s30
        %s495 = smul.u32 32, %s30
        %s496 = smul.u32 32, %s30
        %s497 = smul.u32 32, %s30
        %s498 = smul.u32 32, %s30
        %p499 = scmp.lt.s32.totalorder %s498, 63
        %s500 = scalar_select %p499, %s498, 63
        %s501 = smul.addr %s500, 8
        %s502 = scalar_lea.vmem %s9, %s501
        %s503 = smul.u32 32, %s30
        %v504 = vld [vmem:[%s409] sm:$0xff]
        %v505 = vld [vmem:[%s409 + $0x8] sm:$0xff]
        %v506 = vld [vmem:[%s409 + $0x10] sm:$0xff]
        %v507 = vld [vmem:[%s409 + $0x18] sm:$0xff]
        %v508 = vld [vmem:[%s409 + $0x20] sm:$0xff]
        %v509 = vld [vmem:[%s409 + $0x28] sm:$0xff]
        %v510 = vld [vmem:[%s409 + $0x30] sm:$0xff]
        %v511 = vld [vmem:[%s409 + $0x38] sm:$0xff]
        %v512 = vld [vmem:[%s409 + $0x40] sm:$0xff]
        %v513 = vld [vmem:[%s409 + $0x48] sm:$0xff]
        %v514 = vld [vmem:[%s409 + $0x50] sm:$0xff]
        %v515 = vld [vmem:[%s409 + $0x58] sm:$0xff]
        %v516 = vld [vmem:[%s409 + $0x60] sm:$0xff]
        %v517 = vld [vmem:[%s409 + $0x68] sm:$0xff]
        %v518 = vld [vmem:[%s409 + $0x70] sm:$0xff]
        %v519 = vld [vmem:[%s409 + $0x78] sm:$0xff]
        %v520 = vld [vmem:[%s409 + $0x80] sm:$0xff]
        %v521 = vld [vmem:[%s409 + $0x88] sm:$0xff]
        %v522 = vld [vmem:[%s409 + $0x90] sm:$0xff]
        %v523 = vld [vmem:[%s409 + $0x98] sm:$0xff]
        %v524 = vld [vmem:[%s409 + $0xa0] sm:$0xff]
        %v525 = vld [vmem:[%s409 + $0xa8] sm:$0xff]
        %v526 = vld [vmem:[%s409 + $0xb0] sm:$0xff]
        %v527 = vld [vmem:[%s409 + $0xb8] sm:$0xff]
        %v528 = vld [vmem:[%s409 + $0xc0] sm:$0xff]
        %v529 = vld [vmem:[%s409 + $0xc8] sm:$0xff]
        %v530 = vld [vmem:[%s409 + $0xd0] sm:$0xff]
        %v531 = vld [vmem:[%s409 + $0xd8] sm:$0xff]
        %v532 = vld [vmem:[%s409 + $0xe0] sm:$0xff]
        %v533 = vld [vmem:[%s409 + $0xe8] sm:$0xff]
        %v534 = vld [vmem:[%s409 + $0xf0] sm:$0xff]
        %v535 = vld [vmem:[%s409 + $0xf8] sm:$0xff]
        %v536 = vld [vmem:[#allocation9] sm:$0xff]
        %v537 = vld [vmem:[#allocation9 + $0x8] sm:$0xff]
        %v538 = vld [vmem:[#allocation9 + $0x10] sm:$0xff]
        %v539 = vld [vmem:[#allocation9 + $0x18] sm:$0xff]
        %v540 = vld [vmem:[%s418] sm:$0xff]
        %v541 = vld [vmem:[%s418 + $0x8] sm:$0xff]
        %v542 = vld [vmem:[%s418 + $0x10] sm:$0xff]
        %v543 = vld [vmem:[%s418 + $0x18] sm:$0xff]
        %v544 = vld [vmem:[%s418 + $0x20] sm:$0xff]
        %v545 = vld [vmem:[%s418 + $0x28] sm:$0xff]
        %v546 = vld [vmem:[%s418 + $0x30] sm:$0xff]
        %v547 = vld [vmem:[%s418 + $0x38] sm:$0xff]
        %v548 = vld [vmem:[%s418 + $0x40] sm:$0xff]
        %v549 = vld [vmem:[%s418 + $0x48] sm:$0xff]
        %v550 = vld [vmem:[%s418 + $0x50] sm:$0xff]
        %v551 = vld [vmem:[%s418 + $0x58] sm:$0xff]
        %v552 = vld [vmem:[%s418 + $0x60] sm:$0xff]
        %v553 = vld [vmem:[%s418 + $0x68] sm:$0xff]
        %v554 = vld [vmem:[%s418 + $0x70] sm:$0xff]
        %v555 = vld [vmem:[%s418 + $0x78] sm:$0xff]
        %v556 = vld [vmem:[%s418 + $0x80] sm:$0xff]
        %v557 = vld [vmem:[%s418 + $0x88] sm:$0xff]
        %v558 = vld [vmem:[%s418 + $0x90] sm:$0xff]
        %v559 = vld [vmem:[%s418 + $0x98] sm:$0xff]
        %v560 = vld [vmem:[%s418 + $0xa0] sm:$0xff]
        %v561 = vld [vmem:[%s418 + $0xa8] sm:$0xff]
        %v562 = vld [vmem:[%s418 + $0xb0] sm:$0xff]
        %v563 = vld [vmem:[%s418 + $0xb8] sm:$0xff]
        %v564 = vld [vmem:[%s418 + $0xc0] sm:$0xff]
        %v565 = vld [vmem:[%s418 + $0xc8] sm:$0xff]
        %v566 = vld [vmem:[%s418 + $0xd0] sm:$0xff]
        %v567 = vld [vmem:[%s418 + $0xd8] sm:$0xff]
        %v568 = vld [vmem:[%s418 + $0xe0] sm:$0xff]
        %v569 = vld [vmem:[%s418 + $0xe8] sm:$0xff]
        %v570 = vld [vmem:[%s418 + $0xf0] sm:$0xff]
        %v571 = vld [vmem:[%s418 + $0xf8] sm:$0xff]
        %v572 = vld [vmem:[#allocation10] sm:$0xff]
        %v573 = vld [vmem:[#allocation10 + $0x8] sm:$0xff]
        %v574 = vld [vmem:[#allocation10 + $0x10] sm:$0xff]
        %v575 = vld [vmem:[#allocation10 + $0x18] sm:$0xff]
        %vm576 = vcmask 261120
        %v578 = vsel %vm576, %v540, 0
        %v581 = vsel %vm576, %v541, 0
        %v584 = vsel %vm576, %v542, 0
        %v587 = vsel %vm576, %v543, 0
        %v590 = vsel %vm576, %v544, 0
        %v593 = vsel %vm576, %v545, 0
        %v596 = vsel %vm576, %v546, 0
        %v599 = vsel %vm576, %v547, 0
        %v602 = vsel %vm576, %v548, 0
        %v605 = vsel %vm576, %v549, 0
        %v608 = vsel %vm576, %v550, 0
        %v611 = vsel %vm576, %v551, 0
        %v614 = vsel %vm576, %v552, 0
        %v617 = vsel %vm576, %v553, 0
        %v620 = vsel %vm576, %v554, 0
        %v623 = vsel %vm576, %v555, 0
        %v626 = vsel %vm576, %v556, 0
        %v629 = vsel %vm576, %v557, 0
        %v632 = vsel %vm576, %v558, 0
        %v635 = vsel %vm576, %v559, 0
        %v638 = vsel %vm576, %v560, 0
        %v641 = vsel %vm576, %v561, 0
        %v644 = vsel %vm576, %v562, 0
        %v647 = vsel %vm576, %v563, 0
        %v650 = vsel %vm576, %v564, 0
        %v653 = vsel %vm576, %v565, 0
        %v656 = vsel %vm576, %v566, 0
        %v659 = vsel %vm576, %v567, 0
        %v662 = vsel %vm576, %v568, 0
        %v665 = vsel %vm576, %v569, 0
        %v668 = vsel %vm576, %v570, 0
        %v671 = vsel %vm576, %v571, 0
        %673 = vmatprep.subr.mxu0 0.0
        %674 = vmatpush1.msra.mxu0 %v572
        %675 = vmatprep.subr.mxu0 0.0
        %676 = vmatpush1.msra.mxu0 %v573
        %677 = vmatprep.subr.mxu0 0.0
        %678 = vmatpush1.msra.mxu0 %v574
        %679 = vmatprep.subr.mxu0 0.0
        %680 = vmatpush1.msra.mxu0 %v575
        %681 = vmatprep.subr.mxu0 0.0
        %682 = vmatpush1.msra.mxu0 0.0
        %683 = vmatprep.subr.mxu0 0.0
        %684 = vmatpush1.msra.mxu0 0.0
        %685 = vmatprep.subr.mxu0 0.0
        %686 = vmatpush1.msra.mxu0 0.0
        %687 = vmatprep.subr.mxu0 0.0
        %688 = vmatpush1.msra.mxu0 0.0
        %689 = vmatprep.subr.mxu0 0.0
        %690 = vmatpush1.msra.mxu0 0.0
        %691 = vmatprep.subr.mxu0 0.0
        %692 = vmatpush1.msra.mxu0 0.0
        %693 = vmatprep.subr.mxu0 0.0
        %694 = vmatpush1.msra.mxu0 0.0
        %695 = vmatprep.subr.mxu0 0.0
        %696 = vmatpush1.msra.mxu0 0.0
        %697 = vmatprep.subr.mxu0 0.0
        %698 = vmatpush1.msra.mxu0 0.0
        %699 = vmatprep.subr.mxu0 0.0
        %700 = vmatpush1.msra.mxu0 0.0
        %701 = vmatprep.subr.mxu0 0.0
        %702 = vmatpush1.msra.mxu0 0.0
        %703 = vmatprep.subr.mxu0 0.0
        %704 = vmatpush1.msra.mxu0 0.0
        %705 = vmatprep.subr.mxu0 0.0
        %706 = vmatpush1.msra.mxu0 0.0
        %707 = vmatprep.subr.mxu0 0.0
        %708 = vmatpush1.msra.mxu0 0.0
        %709 = vmatprep.subr.mxu0 0.0
        %710 = vmatpush1.msra.mxu0 0.0
        %711 = vmatprep.subr.mxu0 0.0
        %712 = vmatpush1.msra.mxu0 0.0
        %713 = vmatprep.subr.mxu0 0.0
        %714 = vmatpush1.msra.mxu0 0.0
        %715 = vmatprep.subr.mxu0 0.0
        %716 = vmatpush1.msra.mxu0 0.0
        %717 = vmatprep.subr.mxu0 0.0
        %718 = vmatpush1.msra.mxu0 0.0
        %719 = vmatprep.subr.mxu0 0.0
        %720 = vmatpush1.msra.mxu0 0.0
        %721 = vmatprep.subr.mxu0 0.0
        %722 = vmatpush1.msra.mxu0 0.0
        %723 = vmatprep.subr.mxu0 0.0
        %724 = vmatpush1.msra.mxu0 0.0
        %725 = vmatprep.subr.mxu0 0.0
        %726 = vmatpush1.msra.mxu0 0.0
        %727 = vmatprep.subr.mxu0 0.0
        %728 = vmatpush1.msra.mxu0 0.0
        %729 = vmatprep.subr.mxu0 0.0
        %730 = vmatpush1.msra.mxu0 0.0
        %731 = vmatprep.subr.mxu0 0.0
        %732 = vmatpush1.msra.mxu0 0.0
        %733 = vmatprep.subr.mxu0 0.0
        %734 = vmatpush1.msra.mxu0 0.0
        %735 = vmatprep.subr.mxu0 0.0
        %736 = vmatpush1.msra.mxu0 0.0
        %737 = vmatprep.mubr.f32.mxu0 0.0
        %738 = vmatmul.mubr.f32.gmra.mrb[0].mxu0 %v578
        %v739 = vpop.f32.mrb[0].mxu0
        %v740 = vadd.f32 0.0, %v739
        %v741 = vpop.f32.mrb[0].mxu0
        %742 = vmatprep.mubr.f32.mxu0 0.0
        %743 = vmatmul.mubr.f32.gmra.mrb[0].mxu0 %v581
        %v744 = vpop.f32.mrb[0].mxu0
        %v745 = vadd.f32 0.0, %v744
        %v746 = vpop.f32.mrb[0].mxu0
        %747 = vmatprep.mubr.f32.mxu0 0.0
        %748 = vmatmul.mubr.f32.gmra.mrb[0].mxu0 %v584
        %v749 = vpop.f32.mrb[0].mxu0
        %v750 = vadd.f32 0.0, %v749
        %v751 = vpop.f32.mrb[0].mxu0
        %752 = vmatprep.mubr.f32.mxu0 0.0
        %753 = vmatmul.mubr.f32.gmra.mrb[0].mxu0 %v587
        %v754 = vpop.f32.mrb[0].mxu0
        %v755 = vadd.f32 0.0, %v754
        %v756 = vpop.f32.mrb[0].mxu0
        %757 = vmatprep.mubr.f32.mxu0 0.0
        %758 = vmatmul.mubr.f32.gmra.mrb[0].mxu0 %v590
        %v759 = vpop.f32.mrb[0].mxu0
        %v760 = vadd.f32 0.0, %v759
        %v761 = vpop.f32.mrb[0].mxu0
        %762 = vmatprep.mubr.f32.mxu0 0.0
        %763 = vmatmul.mubr.f32.gmra.mrb[0].mxu0 %v593
        %v764 = vpop.f32.mrb[0].mxu0
        %v765 = vadd.f32 0.0, %v764
        %v766 = vpop.f32.mrb[0].mxu0
        %767 = vmatprep.mubr.f32.mxu0 0.0
        %768 = vmatmul.mubr.f32.gmra.mrb[0].mxu0 %v596
        %v769 = vpop.f32.mrb[0].mxu0
        %v770 = vadd.f32 0.0, %v769
        %v771 = vpop.f32.mrb[0].mxu0
        %772 = vmatprep.mubr.f32.mxu0 0.0
        %773 = vmatmul.mubr.f32.gmra.mrb[0].mxu0 %v599
        %v774 = vpop.f32.mrb[0].mxu0
        %v775 = vadd.f32 0.0, %v774
        %v776 = vpop.f32.mrb[0].mxu0
        %777 = vmatprep.mubr.f32.mxu0 0.0
        %778 = vmatmul.mubr.f32.gmra.mrb[0].mxu0 %v602
        %v779 = vpop.f32.mrb[0].mxu0
        %v780 = vadd.f32 0.0, %v779
        %v781 = vpop.f32.mrb[0].mxu0
        %782 = vmatprep.mubr.f32.mxu0 0.0
        %783 = vmatmul.mubr.f32.gmra.mrb[0].mxu0 %v605
        %v784 = vpop.f32.mrb[0].mxu0
        %v785 = vadd.f32 0.0, %v784
        %v786 = vpop.f32.mrb[0].mxu0
        %787 = vmatprep.mubr.f32.mxu0 0.0
        %788 = vmatmul.mubr.f32.gmra.mrb[0].mxu0 %v608
        %v789 = vpop.f32.mrb[0].mxu0
        %v790 = vadd.f32 0.0, %v789
        %v791 = vpop.f32.mrb[0].mxu0
        %792 = vmatprep.mubr.f32.mxu0 0.0
        %793 = vmatmul.mubr.f32.gmra.mrb[0].mxu0 %v611
        %v794 = vpop.f32.mrb[0].mxu0
        %v795 = vadd.f32 0.0, %v794
        %v796 = vpop.f32.mrb[0].mxu0
        %797 = vmatprep.mubr.f32.mxu0 0.0
        %798 = vmatmul.mubr.f32.gmra.mrb[0].mxu0 %v614
        %v799 = vpop.f32.mrb[0].mxu0
        %v800 = vadd.f32 0.0, %v799
        %v801 = vpop.f32.mrb[0].mxu0
        %802 = vmatprep.mubr.f32.mxu0 0.0
        %803 = vmatmul.mubr.f32.gmra.mrb[0].mxu0 %v617
        %v804 = vpop.f32.mrb[0].mxu0
        %v805 = vadd.f32 0.0, %v804
        %v806 = vpop.f32.mrb[0].mxu0
        %807 = vmatprep.mubr.f32.mxu0 0.0
        %808 = vmatmul.mubr.f32.gmra.mrb[0].mxu0 %v620
        %v809 = vpop.f32.mrb[0].mxu0
        %v810 = vadd.f32 0.0, %v809
        %v811 = vpop.f32.mrb[0].mxu0
        %812 = vmatprep.mubr.f32.mxu0 0.0
        %813 = vmatmul.mubr.f32.gmra.mrb[0].mxu0 %v623
        %v814 = vpop.f32.mrb[0].mxu0
        %v815 = vadd.f32 0.0, %v814
        %v816 = vpop.f32.mrb[0].mxu0
        %817 = vmatprep.mubr.f32.mxu0 0.0
        %818 = vmatmul.mubr.f32.gmra.mrb[0].mxu0 %v626
        %v819 = vpop.f32.mrb[0].mxu0
        %v820 = vadd.f32 0.0, %v819
        %v821 = vpop.f32.mrb[0].mxu0
        %822 = vmatprep.mubr.f32.mxu0 0.0
        %823 = vmatmul.mubr.f32.gmra.mrb[0].mxu0 %v629
        %v824 = vpop.f32.mrb[0].mxu0
        %v825 = vadd.f32 0.0, %v824
        %v826 = vpop.f32.mrb[0].mxu0
        %827 = vmatprep.mubr.f32.mxu0 0.0
        %828 = vmatmul.mubr.f32.gmra.mrb[0].mxu0 %v632
        %v829 = vpop.f32.mrb[0].mxu0
        %v830 = vadd.f32 0.0, %v829
        %v831 = vpop.f32.mrb[0].mxu0
        %832 = vmatprep.mubr.f32.mxu0 0.0
        %833 = vmatmul.mubr.f32.gmra.mrb[0].mxu0 %v635
        %v834 = vpop.f32.mrb[0].mxu0
        %v835 = vadd.f32 0.0, %v834
        %v836 = vpop.f32.mrb[0].mxu0
        %837 = vmatprep.mubr.f32.mxu0 0.0
        %838 = vmatmul.mubr.f32.gmra.mrb[0].mxu0 %v638
        %v839 = vpop.f32.mrb[0].mxu0
        %v840 = vadd.f32 0.0, %v839
        %v841 = vpop.f32.mrb[0].mxu0
        %842 = vmatprep.mubr.f32.mxu0 0.0
        %843 = vmatmul.mubr.f32.gmra.mrb[0].mxu0 %v641
        %v844 = vpop.f32.mrb[0].mxu0
        %v845 = vadd.f32 0.0, %v844
        %v846 = vpop.f32.mrb[0].mxu0
        %847 = vmatprep.mubr.f32.mxu0 0.0
        %848 = vmatmul.mubr.f32.gmra.mrb[0].mxu0 %v644
        %v849 = vpop.f32.mrb[0].mxu0
        %v850 = vadd.f32 0.0, %v849
        %v851 = vpop.f32.mrb[0].mxu0
        %852 = vmatprep.mubr.f32.mxu0 0.0
        %853 = vmatmul.mubr.f32.gmra.mrb[0].mxu0 %v647
        %v854 = vpop.f32.mrb[0].mxu0
        %v855 = vadd.f32 0.0, %v854
        %v856 = vpop.f32.mrb[0].mxu0
        %857 = vmatprep.mubr.f32.mxu0 0.0
        %858 = vmatmul.mubr.f32.gmra.mrb[0].mxu0 %v650
        %v859 = vpop.f32.mrb[0].mxu0
        %v860 = vadd.f32 0.0, %v859
        %v861 = vpop.f32.mrb[0].mxu0
        %862 = vmatprep.mubr.f32.mxu0 0.0
        %863 = vmatmul.mubr.f32.gmra.mrb[0].mxu0 %v653
        %v864 = vpop.f32.mrb[0].mxu0
        %v865 = vadd.f32 0.0, %v864
        %v866 = vpop.f32.mrb[0].mxu0
        %867 = vmatprep.mubr.f32.mxu0 0.0
        %868 = vmatmul.mubr.f32.gmra.mrb[0].mxu0 %v656
        %v869 = vpop.f32.mrb[0].mxu0
        %v870 = vadd.f32 0.0, %v869
        %v871 = vpop.f32.mrb[0].mxu0
        %872 = vmatprep.mubr.f32.mxu0 0.0
        %873 = vmatmul.mubr.f32.gmra.mrb[0].mxu0 %v659
        %v874 = vpop.f32.mrb[0].mxu0
        %v875 = vadd.f32 0.0, %v874
        %v876 = vpop.f32.mrb[0].mxu0
        %877 = vmatprep.mubr.f32.mxu0 0.0
        %878 = vmatmul.mubr.f32.gmra.mrb[0].mxu0 %v662
        %v879 = vpop.f32.mrb[0].mxu0
        %v880 = vadd.f32 0.0, %v879
        %v881 = vpop.f32.mrb[0].mxu0
        %882 = vmatprep.mubr.f32.mxu0 0.0
        %883 = vmatmul.mubr.f32.gmra.mrb[0].mxu0 %v665
        %v884 = vpop.f32.mrb[0].mxu0
        %v885 = vadd.f32 0.0, %v884
        %v886 = vpop.f32.mrb[0].mxu0
        %887 = vmatprep.mubr.f32.mxu0 0.0
        %888 = vmatmul.mubr.f32.gmra.mrb[0].mxu0 %v668
        %v889 = vpop.f32.mrb[0].mxu0
        %v890 = vadd.f32 0.0, %v889
        %v891 = vpop.f32.mrb[0].mxu0
        %892 = vmatprep.mubr.f32.mxu0 0.0
        %893 = vmatmul.mubr.f32.gmra.mrb[0].mxu0 %v671
        %v894 = vpop.f32.mrb[0].mxu0
        %v895 = vadd.f32 0.0, %v894
        %v896 = vpop.f32.mrb[0].mxu0
        %897 = vdwg.mxu0
        %v899 = vsel %vm576, %v504, 0
        %v902 = vsel %vm576, %v505, 0
        %v905 = vsel %vm576, %v506, 0
        %v908 = vsel %vm576, %v507, 0
        %v911 = vsel %vm576, %v508, 0
        %v914 = vsel %vm576, %v509, 0
        %v917 = vsel %vm576, %v510, 0
        %v920 = vsel %vm576, %v511, 0
        %v923 = vsel %vm576, %v512, 0
        %v926 = vsel %vm576, %v513, 0
        %v929 = vsel %vm576, %v514, 0
        %v932 = vsel %vm576, %v515, 0
        %v935 = vsel %vm576, %v516, 0
        %v938 = vsel %vm576, %v517, 0
        %v941 = vsel %vm576, %v518, 0
        %v944 = vsel %vm576, %v519, 0
        %v947 = vsel %vm576, %v520, 0
        %v950 = vsel %vm576, %v521, 0
        %v953 = vsel %vm576, %v522, 0
        %v956 = vsel %vm576, %v523, 0
        %v959 = vsel %vm576, %v524, 0
        %v962 = vsel %vm576, %v525, 0
        %v965 = vsel %vm576, %v526, 0
        %v968 = vsel %vm576, %v527, 0
        %v971 = vsel %vm576, %v528, 0
        %v974 = vsel %vm576, %v529, 0
        %v977 = vsel %vm576, %v530, 0
        %v980 = vsel %vm576, %v531, 0
        %v983 = vsel %vm576, %v532, 0
        %v986 = vsel %vm576, %v533, 0
        %v989 = vsel %vm576, %v534, 0
        %v992 = vsel %vm576, %v535, 0
        %994 = vmatprep.subr.mxu0 0.0
        %995 = vmatpush1.msra.mxu0 %v536
        %996 = vmatprep.subr.mxu0 0.0
        %997 = vmatpush1.msra.mxu0 %v537
        %998 = vmatprep.subr.mxu0 0.0
        %999 = vmatpush1.msra.mxu0 %v538
        %1000 = vmatprep.subr.mxu0 0.0
        %1001 = vmatpush1.msra.mxu0 %v539
        %1002 = vmatprep.subr.mxu0 0.0
        %1003 = vmatpush1.msra.mxu0 0.0
        %1004 = vmatprep.subr.mxu0 0.0
        %1005 = vmatpush1.msra.mxu0 0.0
        %1006 = vmatprep.subr.mxu0 0.0
        %1007 = vmatpush1.msra.mxu0 0.0
        %1008 = vmatprep.subr.mxu0 0.0
        %1009 = vmatpush1.msra.mxu0 0.0
        %1010 = vmatprep.subr.mxu0 0.0
        %1011 = vmatpush1.msra.mxu0 0.0
        %1012 = vmatprep.subr.mxu0 0.0
        %1013 = vmatpush1.msra.mxu0 0.0
        %1014 = vmatprep.subr.mxu0 0.0
        %1015 = vmatpush1.msra.mxu0 0.0
        %1016 = vmatprep.subr.mxu0 0.0
        %1017 = vmatpush1.msra.mxu0 0.0
        %1018 = vmatprep.subr.mxu0 0.0
        %1019 = vmatpush1.msra.mxu0 0.0
        %1020 = vmatprep.subr.mxu0 0.0
        %1021 = vmatpush1.msra.mxu0 0.0
        %1022 = vmatprep.subr.mxu0 0.0
        %1023 = vmatpush1.msra.mxu0 0.0
        %1024 = vmatprep.subr.mxu0 0.0
        %1025 = vmatpush1.msra.mxu0 0.0
        %1026 = vmatprep.subr.mxu0 0.0
        %1027 = vmatpush1.msra.mxu0 0.0
        %1028 = vmatprep.subr.mxu0 0.0
        %1029 = vmatpush1.msra.mxu0 0.0
        %1030 = vmatprep.subr.mxu0 0.0
        %1031 = vmatpush1.msra.mxu0 0.0
        %1032 = vmatprep.subr.mxu0 0.0
        %1033 = vmatpush1.msra.mxu0 0.0
        %1034 = vmatprep.subr.mxu0 0.0
        %1035 = vmatpush1.msra.mxu0 0.0
        %1036 = vmatprep.subr.mxu0 0.0
        %1037 = vmatpush1.msra.mxu0 0.0
        %1038 = vmatprep.subr.mxu0 0.0
        %1039 = vmatpush1.msra.mxu0 0.0
        %1040 = vmatprep.subr.mxu0 0.0
        %1041 = vmatpush1.msra.mxu0 0.0
        %1042 = vmatprep.subr.mxu0 0.0
        %1043 = vmatpush1.msra.mxu0 0.0
        %1044 = vmatprep.subr.mxu0 0.0
        %1045 = vmatpush1.msra.mxu0 0.0
        %1046 = vmatprep.subr.mxu0 0.0
        %1047 = vmatpush1.msra.mxu0 0.0
        %1048 = vmatprep.subr.mxu0 0.0
        %1049 = vmatpush1.msra.mxu0 0.0
        %1050 = vmatprep.subr.mxu0 0.0
        %1051 = vmatpush1.msra.mxu0 0.0
        %1052 = vmatprep.subr.mxu0 0.0
        %1053 = vmatpush1.msra.mxu0 0.0
        %1054 = vmatprep.subr.mxu0 0.0
        %1055 = vmatpush1.msra.mxu0 0.0
        %1056 = vmatprep.subr.mxu0 0.0
        %1057 = vmatpush1.msra.mxu0 0.0
        %1058 = vmatprep.mubr.f32.mxu0 0.0
        %1059 = vmatmul.mubr.f32.gmra.mrb[0].mxu0 %v899
        %v1060 = vpop.f32.mrb[0].mxu0
        %v1061 = vadd.f32 %v740, %v1060
        %v1062 = vpop.f32.mrb[0].mxu0
        %1063 = vmatprep.mubr.f32.mxu0 0.0
        %1064 = vmatmul.mubr.f32.gmra.mrb[0].mxu0 %v902
        %v1065 = vpop.f32.mrb[0].mxu0
        %v1066 = vadd.f32 %v745, %v1065
        %v1067 = vpop.f32.mrb[0].mxu0
        %1068 = vmatprep.mubr.f32.mxu0 0.0
        %1069 = vmatmul.mubr.f32.gmra.mrb[0].mxu0 %v905
        %v1070 = vpop.f32.mrb[0].mxu0
        %v1071 = vadd.f32 %v750, %v1070
        %v1072 = vpop.f32.mrb[0].mxu0
        %1073 = vmatprep.mubr.f32.mxu0 0.0
        %1074 = vmatmul.mubr.f32.gmra.mrb[0].mxu0 %v908
        %v1075 = vpop.f32.mrb[0].mxu0
        %v1076 = vadd.f32 %v755, %v1075
        %v1077 = vpop.f32.mrb[0].mxu0
        %1078 = vmatprep.mubr.f32.mxu0 0.0
        %1079 = vmatmul.mubr.f32.gmra.mrb[0].mxu0 %v911
        %v1080 = vpop.f32.mrb[0].mxu0
        %v1081 = vadd.f32 %v760, %v1080
        %v1082 = vpop.f32.mrb[0].mxu0
        %1083 = vmatprep.mubr.f32.mxu0 0.0
        %1084 = vmatmul.mubr.f32.gmra.mrb[0].mxu0 %v914
        %v1085 = vpop.f32.mrb[0].mxu0
        %v1086 = vadd.f32 %v765, %v1085
        %v1087 = vpop.f32.mrb[0].mxu0
        %1088 = vmatprep.mubr.f32.mxu0 0.0
        %1089 = vmatmul.mubr.f32.gmra.mrb[0].mxu0 %v917
        %v1090 = vpop.f32.mrb[0].mxu0
        %v1091 = vadd.f32 %v770, %v1090
        %v1092 = vpop.f32.mrb[0].mxu0
        %1093 = vmatprep.mubr.f32.mxu0 0.0
        %1094 = vmatmul.mubr.f32.gmra.mrb[0].mxu0 %v920
        %v1095 = vpop.f32.mrb[0].mxu0
        %v1096 = vadd.f32 %v775, %v1095
        %v1097 = vpop.f32.mrb[0].mxu0
        %1098 = vmatprep.mubr.f32.mxu0 0.0
        %1099 = vmatmul.mubr.f32.gmra.mrb[0].mxu0 %v923
        %v1100 = vpop.f32.mrb[0].mxu0
        %v1101 = vadd.f32 %v780, %v1100
        %v1102 = vpop.f32.mrb[0].mxu0
        %1103 = vmatprep.mubr.f32.mxu0 0.0
        %1104 = vmatmul.mubr.f32.gmra.mrb[0].mxu0 %v926
        %v1105 = vpop.f32.mrb[0].mxu0
        %v1106 = vadd.f32 %v785, %v1105
        %v1107 = vpop.f32.mrb[0].mxu0
        %1108 = vmatprep.mubr.f32.mxu0 0.0
        %1109 = vmatmul.mubr.f32.gmra.mrb[0].mxu0 %v929
        %v1110 = vpop.f32.mrb[0].mxu0
        %v1111 = vadd.f32 %v790, %v1110
        %v1112 = vpop.f32.mrb[0].mxu0
        %1113 = vmatprep.mubr.f32.mxu0 0.0
        %1114 = vmatmul.mubr.f32.gmra.mrb[0].mxu0 %v932
        %v1115 = vpop.f32.mrb[0].mxu0
        %v1116 = vadd.f32 %v795, %v1115
        %v1117 = vpop.f32.mrb[0].mxu0
        %1118 = vmatprep.mubr.f32.mxu0 0.0
        %1119 = vmatmul.mubr.f32.gmra.mrb[0].mxu0 %v935
        %v1120 = vpop.f32.mrb[0].mxu0
        %v1121 = vadd.f32 %v800, %v1120
        %v1122 = vpop.f32.mrb[0].mxu0
        %1123 = vmatprep.mubr.f32.mxu0 0.0
        %1124 = vmatmul.mubr.f32.gmra.mrb[0].mxu0 %v938
        %v1125 = vpop.f32.mrb[0].mxu0
        %v1126 = vadd.f32 %v805, %v1125
        %v1127 = vpop.f32.mrb[0].mxu0
        %1128 = vmatprep.mubr.f32.mxu0 0.0
        %1129 = vmatmul.mubr.f32.gmra.mrb[0].mxu0 %v941
        %v1130 = vpop.f32.mrb[0].mxu0
        %v1131 = vadd.f32 %v810, %v1130
        %v1132 = vpop.f32.mrb[0].mxu0
        %1133 = vmatprep.mubr.f32.mxu0 0.0
        %1134 = vmatmul.mubr.f32.gmra.mrb[0].mxu0 %v944
        %v1135 = vpop.f32.mrb[0].mxu0
        %v1136 = vadd.f32 %v815, %v1135
        %v1137 = vpop.f32.mrb[0].mxu0
        %1138 = vmatprep.mubr.f32.mxu0 0.0
        %1139 = vmatmul.mubr.f32.gmra.mrb[0].mxu0 %v947
        %v1140 = vpop.f32.mrb[0].mxu0
        %v1141 = vadd.f32 %v820, %v1140
        %v1142 = vpop.f32.mrb[0].mxu0
        %1143 = vmatprep.mubr.f32.mxu0 0.0
        %1144 = vmatmul.mubr.f32.gmra.mrb[0].mxu0 %v950
        %v1145 = vpop.f32.mrb[0].mxu0
        %v1146 = vadd.f32 %v825, %v1145
        %v1147 = vpop.f32.mrb[0].mxu0
        %1148 = vmatprep.mubr.f32.mxu0 0.0
        %1149 = vmatmul.mubr.f32.gmra.mrb[0].mxu0 %v953
        %v1150 = vpop.f32.mrb[0].mxu0
        %v1151 = vadd.f32 %v830, %v1150
        %v1152 = vpop.f32.mrb[0].mxu0
        %1153 = vmatprep.mubr.f32.mxu0 0.0
        %1154 = vmatmul.mubr.f32.gmra.mrb[0].mxu0 %v956
        %v1155 = vpop.f32.mrb[0].mxu0
        %v1156 = vadd.f32 %v835, %v1155
        %v1157 = vpop.f32.mrb[0].mxu0
        %1158 = vmatprep.mubr.f32.mxu0 0.0
        %1159 = vmatmul.mubr.f32.gmra.mrb[0].mxu0 %v959
        %v1160 = vpop.f32.mrb[0].mxu0
        %v1161 = vadd.f32 %v840, %v1160
        %v1162 = vpop.f32.mrb[0].mxu0
        %1163 = vmatprep.mubr.f32.mxu0 0.0
        %1164 = vmatmul.mubr.f32.gmra.mrb[0].mxu0 %v962
        %v1165 = vpop.f32.mrb[0].mxu0
        %v1166 = vadd.f32 %v845, %v1165
        %v1167 = vpop.f32.mrb[0].mxu0
        %1168 = vmatprep.mubr.f32.mxu0 0.0
        %1169 = vmatmul.mubr.f32.gmra.mrb[0].mxu0 %v965
        %v1170 = vpop.f32.mrb[0].mxu0
        %v1171 = vadd.f32 %v850, %v1170
        %v1172 = vpop.f32.mrb[0].mxu0
        %1173 = vmatprep.mubr.f32.mxu0 0.0
        %1174 = vmatmul.mubr.f32.gmra.mrb[0].mxu0 %v968
        %v1175 = vpop.f32.mrb[0].mxu0
        %v1176 = vadd.f32 %v855, %v1175
        %v1177 = vpop.f32.mrb[0].mxu0
        %1178 = vmatprep.mubr.f32.mxu0 0.0
        %1179 = vmatmul.mubr.f32.gmra.mrb[0].mxu0 %v971
        %v1180 = vpop.f32.mrb[0].mxu0
        %v1181 = vadd.f32 %v860, %v1180
        %v1182 = vpop.f32.mrb[0].mxu0
        %1183 = vmatprep.mubr.f32.mxu0 0.0
        %1184 = vmatmul.mubr.f32.gmra.mrb[0].mxu0 %v974
        %v1185 = vpop.f32.mrb[0].mxu0
        %v1186 = vadd.f32 %v865, %v1185
        %v1187 = vpop.f32.mrb[0].mxu0
        %1188 = vmatprep.mubr.f32.mxu0 0.0
        %1189 = vmatmul.mubr.f32.gmra.mrb[0].mxu0 %v977
        %v1190 = vpop.f32.mrb[0].mxu0
        %v1191 = vadd.f32 %v870, %v1190
        %v1192 = vpop.f32.mrb[0].mxu0
        %1193 = vmatprep.mubr.f32.mxu0 0.0
        %1194 = vmatmul.mubr.f32.gmra.mrb[0].mxu0 %v980
        %v1195 = vpop.f32.mrb[0].mxu0
        %v1196 = vadd.f32 %v875, %v1195
        %v1197 = vpop.f32.mrb[0].mxu0
        %1198 = vmatprep.mubr.f32.mxu0 0.0
        %1199 = vmatmul.mubr.f32.gmra.mrb[0].mxu0 %v983
        %v1200 = vpop.f32.mrb[0].mxu0
        %v1201 = vadd.f32 %v880, %v1200
        %v1202 = vpop.f32.mrb[0].mxu0
        %1203 = vmatprep.mubr.f32.mxu0 0.0
        %1204 = vmatmul.mubr.f32.gmra.mrb[0].mxu0 %v986
        %v1205 = vpop.f32.mrb[0].mxu0
        %v1206 = vadd.f32 %v885, %v1205
        %v1207 = vpop.f32.mrb[0].mxu0
        %1208 = vmatprep.mubr.f32.mxu0 0.0
        %1209 = vmatmul.mubr.f32.gmra.mrb[0].mxu0 %v989
        %v1210 = vpop.f32.mrb[0].mxu0
        %v1211 = vadd.f32 %v890, %v1210
        %v1212 = vpop.f32.mrb[0].mxu0
        %1213 = vmatprep.mubr.f32.mxu0 0.0
        %1214 = vmatmul.mubr.f32.gmra.mrb[0].mxu0 %v992
        %v1215 = vpop.f32.mrb[0].mxu0
        %v1216 = vadd.f32 %v895, %v1215
        %v1217 = vpop.f32.mrb[0].mxu0
        %1218 = vdwg.mxu0
        %v1219 = vld [vmem:[%s427] sm:$0xff]
        %v1220 = vld [vmem:[%s427 + $0x8] sm:$0xff]
        %v1221 = vld [vmem:[%s427 + $0x10] sm:$0xff]
        %v1222 = vld [vmem:[%s427 + $0x18] sm:$0xff]
        %v1223 = vld [vmem:[%s427 + $0x20] sm:$0xff]
        %v1224 = vld [vmem:[%s427 + $0x28] sm:$0xff]
        %v1225 = vld [vmem:[%s427 + $0x30] sm:$0xff]
        %v1226 = vld [vmem:[%s427 + $0x38] sm:$0xff]
        %v1227 = vld [vmem:[%s427 + $0x40] sm:$0xff]
        %v1228 = vld [vmem:[%s427 + $0x48] sm:$0xff]
        %v1229 = vld [vmem:[%s427 + $0x50] sm:$0xff]
        %v1230 = vld [vmem:[%s427 + $0x58] sm:$0xff]
        %v1231 = vld [vmem:[%s427 + $0x60] sm:$0xff]
        %v1232 = vld [vmem:[%s427 + $0x68] sm:$0xff]
        %v1233 = vld [vmem:[%s427 + $0x70] sm:$0xff]
        %v1234 = vld [vmem:[%s427 + $0x78] sm:$0xff]
        %v1235 = vld [vmem:[%s427 + $0x80] sm:$0xff]
        %v1236 = vld [vmem:[%s427 + $0x88] sm:$0xff]
        %v1237 = vld [vmem:[%s427 + $0x90] sm:$0xff]
        %v1238 = vld [vmem:[%s427 + $0x98] sm:$0xff]
        %v1239 = vld [vmem:[%s427 + $0xa0] sm:$0xff]
        %v1240 = vld [vmem:[%s427 + $0xa8] sm:$0xff]
        %v1241 = vld [vmem:[%s427 + $0xb0] sm:$0xff]
        %v1242 = vld [vmem:[%s427 + $0xb8] sm:$0xff]
        %v1243 = vld [vmem:[%s427 + $0xc0] sm:$0xff]
        %v1244 = vld [vmem:[%s427 + $0xc8] sm:$0xff]
        %v1245 = vld [vmem:[%s427 + $0xd0] sm:$0xff]
        %v1246 = vld [vmem:[%s427 + $0xd8] sm:$0xff]
        %v1247 = vld [vmem:[%s427 + $0xe0] sm:$0xff]
        %v1248 = vld [vmem:[%s427 + $0xe8] sm:$0xff]
        %v1249 = vld [vmem:[%s427 + $0xf0] sm:$0xff]
        %v1250 = vld [vmem:[%s427 + $0xf8] sm:$0xff]
        %v1251 = vld [vmem:[%s6] sm:$0xff]
        %v1252 = vld [vmem:[%s6 + $0x8] sm:$0xff]
        %v1253 = vld [vmem:[%s6 + $0x10] sm:$0xff]
        %v1254 = vld [vmem:[%s6 + $0x18] sm:$0xff]
        %v1256 = vsel %vm576, %v1219, 0
        %v1259 = vsel %vm576, %v1220, 0
        %v1262 = vsel %vm576, %v1221, 0
        %v1265 = vsel %vm576, %v1222, 0
        %v1268 = vsel %vm576, %v1223, 0
        %v1271 = vsel %vm576, %v1224, 0
        %v1274 = vsel %vm576, %v1225, 0
        %v1277 = vsel %vm576, %v1226, 0
        %v1280 = vsel %vm576, %v1227, 0
        %v1283 = vsel %vm576, %v1228, 0
        %v1286 = vsel %vm576, %v1229, 0
        %v1289 = vsel %vm576, %v1230, 0
        %v1292 = vsel %vm576, %v1231, 0
        %v1295 = vsel %vm576, %v1232, 0
        %v1298 = vsel %vm576, %v1233, 0
        %v1301 = vsel %vm576, %v1234, 0
        %v1304 = vsel %vm576, %v1235, 0
        %v1307 = vsel %vm576, %v1236, 0
        %v1310 = vsel %vm576, %v1237, 0
        %v1313 = vsel %vm576, %v1238, 0
        %v1316 = vsel %vm576, %v1239, 0
        %v1319 = vsel %vm576, %v1240, 0
        %v1322 = vsel %vm576, %v1241, 0
        %v1325 = vsel %vm576, %v1242, 0
        %v1328 = vsel %vm576, %v1243, 0
        %v1331 = vsel %vm576, %v1244, 0
        %v1334 = vsel %vm576, %v1245, 0
        %v1337 = vsel %vm576, %v1246, 0
        %v1340 = vsel %vm576, %v1247, 0
        %v1343 = vsel %vm576, %v1248, 0
        %v1346 = vsel %vm576, %v1249, 0
        %v1349 = vsel %vm576, %v1250, 0
        %1351 = vmatprep.subr.mxu0 0.0
        %1352 = vmatpush1.msra.mxu0 %v1251
        %1353 = vmatprep.subr.mxu0 0.0
        %1354 = vmatpush1.msra.mxu0 %v1252
        %1355 = vmatprep.subr.mxu0 0.0
        %1356 = vmatpush1.msra.mxu0 %v1253
        %1357 = vmatprep.subr.mxu0 0.0
        %1358 = vmatpush1.msra.mxu0 %v1254
        %1359 = vmatprep.subr.mxu0 0.0
        %1360 = vmatpush1.msra.mxu0 0.0
        %1361 = vmatprep.subr.mxu0 0.0
        %1362 = vmatpush1.msra.mxu0 0.0
        %1363 = vmatprep.subr.mxu0 0.0
        %1364 = vmatpush1.msra.mxu0 0.0
        %1365 = vmatprep.subr.mxu0 0.0
        %1366 = vmatpush1.msra.mxu0 0.0
        %1367 = vmatprep.subr.mxu0 0.0
        %1368 = vmatpush1.msra.mxu0 0.0
        %1369 = vmatprep.subr.mxu0 0.0
        %1370 = vmatpush1.msra.mxu0 0.0
        %1371 = vmatprep.subr.mxu0 0.0
        %1372 = vmatpush1.msra.mxu0 0.0
        %1373 = vmatprep.subr.mxu0 0.0
        %1374 = vmatpush1.msra.mxu0 0.0
        %1375 = vmatprep.subr.mxu0 0.0
        %1376 = vmatpush1.msra.mxu0 0.0
        %1377 = vmatprep.subr.mxu0 0.0
        %1378 = vmatpush1.msra.mxu0 0.0
        %1379 = vmatprep.subr.mxu0 0.0
        %1380 = vmatpush1.msra.mxu0 0.0
        %1381 = vmatprep.subr.mxu0 0.0
        %1382 = vmatpush1.msra.mxu0 0.0
        %1383 = vmatprep.subr.mxu0 0.0
        %1384 = vmatpush1.msra.mxu0 0.0
        %1385 = vmatprep.subr.mxu0 0.0
        %1386 = vmatpush1.msra.mxu0 0.0
        %1387 = vmatprep.subr.mxu0 0.0
        %1388 = vmatpush1.msra.mxu0 0.0
        %1389 = vmatprep.subr.mxu0 0.0
        %1390 = vmatpush1.msra.mxu0 0.0
        %1391 = vmatprep.subr.mxu0 0.0
        %1392 = vmatpush1.msra.mxu0 0.0
        %1393 = vmatprep.subr.mxu0 0.0
        %1394 = vmatpush1.msra.mxu0 0.0
        %1395 = vmatprep.subr.mxu0 0.0
        %1396 = vmatpush1.msra.mxu0 0.0
        %1397 = vmatprep.subr.mxu0 0.0
        %1398 = vmatpush1.msra.mxu0 0.0
        %1399 = vmatprep.subr.mxu0 0.0
        %1400 = vmatpush1.msra.mxu0 0.0
        %1401 = vmatprep.subr.mxu0 0.0
        %1402 = vmatpush1.msra.mxu0 0.0
        %1403 = vmatprep.subr.mxu0 0.0
        %1404 = vmatpush1.msra.mxu0 0.0
        %1405 = vmatprep.subr.mxu0 0.0
        %1406 = vmatpush1.msra.mxu0 0.0
        %1407 = vmatprep.subr.mxu0 0.0
        %1408 = vmatpush1.msra.mxu0 0.0
        %1409 = vmatprep.subr.mxu0 0.0
        %1410 = vmatpush1.msra.mxu0 0.0
        %1411 = vmatprep.subr.mxu0 0.0
        %1412 = vmatpush1.msra.mxu0 0.0
        %1413 = vmatprep.subr.mxu0 0.0
        %1414 = vmatpush1.msra.mxu0 0.0
        %1415 = vmatprep.mubr.f32.mxu0 0.0
        %1416 = vmatmul.mubr.f32.gmra.mrb[0].mxu0 %v1256
        %v1417 = vpop.f32.mrb[0].mxu0
        %v1418 = vadd.f32 0.0, %v1417
        %v1419 = vpop.f32.mrb[0].mxu0
        %1420 = vmatprep.mubr.f32.mxu0 0.0
        %1421 = vmatmul.mubr.f32.gmra.mrb[0].mxu0 %v1259
        %v1422 = vpop.f32.mrb[0].mxu0
        %v1423 = vadd.f32 0.0, %v1422
        %v1424 = vpop.f32.mrb[0].mxu0
        %1425 = vmatprep.mubr.f32.mxu0 0.0
        %1426 = vmatmul.mubr.f32.gmra.mrb[0].mxu0 %v1262
        %v1427 = vpop.f32.mrb[0].mxu0
        %v1428 = vadd.f32 0.0, %v1427
        %v1429 = vpop.f32.mrb[0].mxu0
        %1430 = vmatprep.mubr.f32.mxu0 0.0
        %1431 = vmatmul.mubr.f32.gmra.mrb[0].mxu0 %v1265
        %v1432 = vpop.f32.mrb[0].mxu0
        %v1433 = vadd.f32 0.0, %v1432
        %v1434 = vpop.f32.mrb[0].mxu0
        %1435 = vmatprep.mubr.f32.mxu0 0.0
        %1436 = vmatmul.mubr.f32.gmra.mrb[0].mxu0 %v1268
        %v1437 = vpop.f32.mrb[0].mxu0
        %v1438 = vadd.f32 0.0, %v1437
        %v1439 = vpop.f32.mrb[0].mxu0
        %1440 = vmatprep.mubr.f32.mxu0 0.0
        %1441 = vmatmul.mubr.f32.gmra.mrb[0].mxu0 %v1271
        %v1442 = vpop.f32.mrb[0].mxu0
        %v1443 = vadd.f32 0.0, %v1442
        %v1444 = vpop.f32.mrb[0].mxu0
        %1445 = vmatprep.mubr.f32.mxu0 0.0
        %1446 = vmatmul.mubr.f32.gmra.mrb[0].mxu0 %v1274
        %v1447 = vpop.f32.mrb[0].mxu0
        %v1448 = vadd.f32 0.0, %v1447
        %v1449 = vpop.f32.mrb[0].mxu0
        %1450 = vmatprep.mubr.f32.mxu0 0.0
        %1451 = vmatmul.mubr.f32.gmra.mrb[0].mxu0 %v1277
        %v1452 = vpop.f32.mrb[0].mxu0
        %v1453 = vadd.f32 0.0, %v1452
        %v1454 = vpop.f32.mrb[0].mxu0
        %1455 = vmatprep.mubr.f32.mxu0 0.0
        %1456 = vmatmul.mubr.f32.gmra.mrb[0].mxu0 %v1280
        %v1457 = vpop.f32.mrb[0].mxu0
        %v1458 = vadd.f32 0.0, %v1457
        %v1459 = vpop.f32.mrb[0].mxu0
        %1460 = vmatprep.mubr.f32.mxu0 0.0
        %1461 = vmatmul.mubr.f32.gmra.mrb[0].mxu0 %v1283
        %v1462 = vpop.f32.mrb[0].mxu0
        %v1463 = vadd.f32 0.0, %v1462
        %v1464 = vpop.f32.mrb[0].mxu0
        %1465 = vmatprep.mubr.f32.mxu0 0.0
        %1466 = vmatmul.mubr.f32.gmra.mrb[0].mxu0 %v1286
        %v1467 = vpop.f32.mrb[0].mxu0
        %v1468 = vadd.f32 0.0, %v1467
        %v1469 = vpop.f32.mrb[0].mxu0
        %1470 = vmatprep.mubr.f32.mxu0 0.0
        %1471 = vmatmul.mubr.f32.gmra.mrb[0].mxu0 %v1289
        %v1472 = vpop.f32.mrb[0].mxu0
        %v1473 = vadd.f32 0.0, %v1472
        %v1474 = vpop.f32.mrb[0].mxu0
        %1475 = vmatprep.mubr.f32.mxu0 0.0
        %1476 = vmatmul.mubr.f32.gmra.mrb[0].mxu0 %v1292
        %v1477 = vpop.f32.mrb[0].mxu0
        %v1478 = vadd.f32 0.0, %v1477
        %v1479 = vpop.f32.mrb[0].mxu0
        %1480 = vmatprep.mubr.f32.mxu0 0.0
        %1481 = vmatmul.mubr.f32.gmra.mrb[0].mxu0 %v1295
        %v1482 = vpop.f32.mrb[0].mxu0
        %v1483 = vadd.f32 0.0, %v1482
        %v1484 = vpop.f32.mrb[0].mxu0
        %1485 = vmatprep.mubr.f32.mxu0 0.0
        %1486 = vmatmul.mubr.f32.gmra.mrb[0].mxu0 %v1298
        %v1487 = vpop.f32.mrb[0].mxu0
        %v1488 = vadd.f32 0.0, %v1487
        %v1489 = vpop.f32.mrb[0].mxu0
        %1490 = vmatprep.mubr.f32.mxu0 0.0
        %1491 = vmatmul.mubr.f32.gmra.mrb[0].mxu0 %v1301
        %v1492 = vpop.f32.mrb[0].mxu0
        %v1493 = vadd.f32 0.0, %v1492
        %v1494 = vpop.f32.mrb[0].mxu0
        %1495 = vmatprep.mubr.f32.mxu0 0.0
        %1496 = vmatmul.mubr.f32.gmra.mrb[0].mxu0 %v1304
        %v1497 = vpop.f32.mrb[0].mxu0
        %v1498 = vadd.f32 0.0, %v1497
        %v1499 = vpop.f32.mrb[0].mxu0
        %1500 = vmatprep.mubr.f32.mxu0 0.0
        %1501 = vmatmul.mubr.f32.gmra.mrb[0].mxu0 %v1307
        %v1502 = vpop.f32.mrb[0].mxu0
        %v1503 = vadd.f32 0.0, %v1502
        %v1504 = vpop.f32.mrb[0].mxu0
        %1505 = vmatprep.mubr.f32.mxu0 0.0
        %1506 = vmatmul.mubr.f32.gmra.mrb[0].mxu0 %v1310
        %v1507 = vpop.f32.mrb[0].mxu0
        %v1508 = vadd.f32 0.0, %v1507
        %v1509 = vpop.f32.mrb[0].mxu0
        %1510 = vmatprep.mubr.f32.mxu0 0.0
        %1511 = vmatmul.mubr.f32.gmra.mrb[0].mxu0 %v1313
        %v1512 = vpop.f32.mrb[0].mxu0
        %v1513 = vadd.f32 0.0, %v1512
        %v1514 = vpop.f32.mrb[0].mxu0
        %1515 = vmatprep.mubr.f32.mxu0 0.0
        %1516 = vmatmul.mubr.f32.gmra.mrb[0].mxu0 %v1316
        %v1517 = vpop.f32.mrb[0].mxu0
        %v1518 = vadd.f32 0.0, %v1517
        %v1519 = vpop.f32.mrb[0].mxu0
        %1520 = vmatprep.mubr.f32.mxu0 0.0
        %1521 = vmatmul.mubr.f32.gmra.mrb[0].mxu0 %v1319
        %v1522 = vpop.f32.mrb[0].mxu0
        %v1523 = vadd.f32 0.0, %v1522
        %v1524 = vpop.f32.mrb[0].mxu0
        %1525 = vmatprep.mubr.f32.mxu0 0.0
        %1526 = vmatmul.mubr.f32.gmra.mrb[0].mxu0 %v1322
        %v1527 = vpop.f32.mrb[0].mxu0
        %v1528 = vadd.f32 0.0, %v1527
        %v1529 = vpop.f32.mrb[0].mxu0
        %1530 = vmatprep.mubr.f32.mxu0 0.0
        %1531 = vmatmul.mubr.f32.gmra.mrb[0].mxu0 %v1325
        %v1532 = vpop.f32.mrb[0].mxu0
        %v1533 = vadd.f32 0.0, %v1532
        %v1534 = vpop.f32.mrb[0].mxu0
        %1535 = vmatprep.mubr.f32.mxu0 0.0
        %1536 = vmatmul.mubr.f32.gmra.mrb[0].mxu0 %v1328
        %v1537 = vpop.f32.mrb[0].mxu0
        %v1538 = vadd.f32 0.0, %v1537
        %v1539 = vpop.f32.mrb[0].mxu0
        %1540 = vmatprep.mubr.f32.mxu0 0.0
        %1541 = vmatmul.mubr.f32.gmra.mrb[0].mxu0 %v1331
        %v1542 = vpop.f32.mrb[0].mxu0
        %v1543 = vadd.f32 0.0, %v1542
        %v1544 = vpop.f32.mrb[0].mxu0
        %1545 = vmatprep.mubr.f32.mxu0 0.0
        %1546 = vmatmul.mubr.f32.gmra.mrb[0].mxu0 %v1334
        %v1547 = vpop.f32.mrb[0].mxu0
        %v1548 = vadd.f32 0.0, %v1547
        %v1549 = vpop.f32.mrb[0].mxu0
        %1550 = vmatprep.mubr.f32.mxu0 0.0
        %1551 = vmatmul.mubr.f32.gmra.mrb[0].mxu0 %v1337
        %v1552 = vpop.f32.mrb[0].mxu0
        %v1553 = vadd.f32 0.0, %v1552
        %v1554 = vpop.f32.mrb[0].mxu0
        %1555 = vmatprep.mubr.f32.mxu0 0.0
        %1556 = vmatmul.mubr.f32.gmra.mrb[0].mxu0 %v1340
        %v1557 = vpop.f32.mrb[0].mxu0
        %v1558 = vadd.f32 0.0, %v1557
        %v1559 = vpop.f32.mrb[0].mxu0
        %1560 = vmatprep.mubr.f32.mxu0 0.0
        %1561 = vmatmul.mubr.f32.gmra.mrb[0].mxu0 %v1343
        %v1562 = vpop.f32.mrb[0].mxu0
        %v1563 = vadd.f32 0.0, %v1562
        %v1564 = vpop.f32.mrb[0].mxu0
        %1565 = vmatprep.mubr.f32.mxu0 0.0
        %1566 = vmatmul.mubr.f32.gmra.mrb[0].mxu0 %v1346
        %v1567 = vpop.f32.mrb[0].mxu0
        %v1568 = vadd.f32 0.0, %v1567
        %v1569 = vpop.f32.mrb[0].mxu0
        %1570 = vmatprep.mubr.f32.mxu0 0.0
        %1571 = vmatmul.mubr.f32.gmra.mrb[0].mxu0 %v1349
        %v1572 = vpop.f32.mrb[0].mxu0
        %v1573 = vadd.f32 0.0, %v1572
        %v1574 = vpop.f32.mrb[0].mxu0
        %1575 = vdwg.mxu0
        %v1576 = vadd.f32 %v1061, %v1418
        %v1577 = vadd.f32 %v1066, %v1423
        %v1578 = vadd.f32 %v1071, %v1428
        %v1579 = vadd.f32 %v1076, %v1433
        %v1580 = vadd.f32 %v1081, %v1438
        %v1581 = vadd.f32 %v1086, %v1443
        %v1582 = vadd.f32 %v1091, %v1448
        %v1583 = vadd.f32 %v1096, %v1453
        %v1584 = vadd.f32 %v1101, %v1458
        %v1585 = vadd.f32 %v1106, %v1463
        %v1586 = vadd.f32 %v1111, %v1468
        %v1587 = vadd.f32 %v1116, %v1473
        %v1588 = vadd.f32 %v1121, %v1478
        %v1589 = vadd.f32 %v1126, %v1483
        %v1590 = vadd.f32 %v1131, %v1488
        %v1591 = vadd.f32 %v1136, %v1493
        %v1592 = vadd.f32 %v1141, %v1498
        %v1593 = vadd.f32 %v1146, %v1503
        %v1594 = vadd.f32 %v1151, %v1508
        %v1595 = vadd.f32 %v1156, %v1513
        %v1596 = vadd.f32 %v1161, %v1518
        %v1597 = vadd.f32 %v1166, %v1523
        %v1598 = vadd.f32 %v1171, %v1528
        %v1599 = vadd.f32 %v1176, %v1533
        %v1600 = vadd.f32 %v1181, %v1538
        %v1601 = vadd.f32 %v1186, %v1543
        %v1602 = vadd.f32 %v1191, %v1548
        %v1603 = vadd.f32 %v1196, %v1553
        %v1604 = vadd.f32 %v1201, %v1558
        %v1605 = vadd.f32 %v1206, %v1563
        %v1606 = vadd.f32 %v1211, %v1568
        %v1607 = vadd.f32 %v1216, %v1573
        %v1608 = vld [vmem:[%s436] sm:$0xff]
        %v1609 = vld [vmem:[%s436 + $0x8] sm:$0xff]
        %v1610 = vld [vmem:[%s436 + $0x10] sm:$0xff]
        %v1611 = vld [vmem:[%s436 + $0x18] sm:$0xff]
        %v1612 = vld [vmem:[%s436 + $0x20] sm:$0xff]
        %v1613 = vld [vmem:[%s436 + $0x28] sm:$0xff]
        %v1614 = vld [vmem:[%s436 + $0x30] sm:$0xff]
        %v1615 = vld [vmem:[%s436 + $0x38] sm:$0xff]
        %v1616 = vld [vmem:[%s436 + $0x40] sm:$0xff]
        %v1617 = vld [vmem:[%s436 + $0x48] sm:$0xff]
        %v1618 = vld [vmem:[%s436 + $0x50] sm:$0xff]
        %v1619 = vld [vmem:[%s436 + $0x58] sm:$0xff]
        %v1620 = vld [vmem:[%s436 + $0x60] sm:$0xff]
        %v1621 = vld [vmem:[%s436 + $0x68] sm:$0xff]
        %v1622 = vld [vmem:[%s436 + $0x70] sm:$0xff]
        %v1623 = vld [vmem:[%s436 + $0x78] sm:$0xff]
        %v1624 = vld [vmem:[%s436 + $0x80] sm:$0xff]
        %v1625 = vld [vmem:[%s436 + $0x88] sm:$0xff]
        %v1626 = vld [vmem:[%s436 + $0x90] sm:$0xff]
        %v1627 = vld [vmem:[%s436 + $0x98] sm:$0xff]
        %v1628 = vld [vmem:[%s436 + $0xa0] sm:$0xff]
        %v1629 = vld [vmem:[%s436 + $0xa8] sm:$0xff]
        %v1630 = vld [vmem:[%s436 + $0xb0] sm:$0xff]
        %v1631 = vld [vmem:[%s436 + $0xb8] sm:$0xff]
        %v1632 = vld [vmem:[%s436 + $0xc0] sm:$0xff]
        %v1633 = vld [vmem:[%s436 + $0xc8] sm:$0xff]
        %v1634 = vld [vmem:[%s436 + $0xd0] sm:$0xff]
        %v1635 = vld [vmem:[%s436 + $0xd8] sm:$0xff]
        %v1636 = vld [vmem:[%s436 + $0xe0] sm:$0xff]
        %v1637 = vld [vmem:[%s436 + $0xe8] sm:$0xff]
        %v1638 = vld [vmem:[%s436 + $0xf0] sm:$0xff]
        %v1639 = vld [vmem:[%s436 + $0xf8] sm:$0xff]
        %v1640 = vld [vmem:[%s7] sm:$0xff]
        %v1641 = vld [vmem:[%s7 + $0x8] sm:$0xff]
        %v1642 = vld [vmem:[%s7 + $0x10] sm:$0xff]
        %v1643 = vld [vmem:[%s7 + $0x18] sm:$0xff]
        %v1645 = vsel %vm576, %v1608, 0
        %v1648 = vsel %vm576, %v1609, 0
        %v1651 = vsel %vm576, %v1610, 0
        %v1654 = vsel %vm576, %v1611, 0
        %v1657 = vsel %vm576, %v1612, 0
        %v1660 = vsel %vm576, %v1613, 0
        %v1663 = vsel %vm576, %v1614, 0
        %v1666 = vsel %vm576, %v1615, 0
        %v1669 = vsel %vm576, %v1616, 0
        %v1672 = vsel %vm576, %v1617, 0
        %v1675 = vsel %vm576, %v1618, 0
        %v1678 = vsel %vm576, %v1619, 0
        %v1681 = vsel %vm576, %v1620, 0
        %v1684 = vsel %vm576, %v1621, 0
        %v1687 = vsel %vm576, %v1622, 0
        %v1690 = vsel %vm576, %v1623, 0
        %v1693 = vsel %vm576, %v1624, 0
        %v1696 = vsel %vm576, %v1625, 0
        %v1699 = vsel %vm576, %v1626, 0
        %v1702 = vsel %vm576, %v1627, 0
        %v1705 = vsel %vm576, %v1628, 0
        %v1708 = vsel %vm576, %v1629, 0
        %v1711 = vsel %vm576, %v1630, 0
        %v1714 = vsel %vm576, %v1631, 0
        %v1717 = vsel %vm576, %v1632, 0
        %v1720 = vsel %vm576, %v1633, 0
        %v1723 = vsel %vm576, %v1634, 0
        %v1726 = vsel %vm576, %v1635, 0
        %v1729 = vsel %vm576, %v1636, 0
        %v1732 = vsel %vm576, %v1637, 0
        %v1735 = vsel %vm576, %v1638, 0
        %v1738 = vsel %vm576, %v1639, 0
        %1740 = vmatprep.subr.mxu0 0.0
        %1741 = vmatpush1.msra.mxu0 %v1640
        %1742 = vmatprep.subr.mxu0 0.0
        %1743 = vmatpush1.msra.mxu0 %v1641
        %1744 = vmatprep.subr.mxu0 0.0
        %1745 = vmatpush1.msra.mxu0 %v1642
        %1746 = vmatprep.subr.mxu0 0.0
        %1747 = vmatpush1.msra.mxu0 %v1643
        %1748 = vmatprep.subr.mxu0 0.0
        %1749 = vmatpush1.msra.mxu0 0.0
        %1750 = vmatprep.subr.mxu0 0.0
        %1751 = vmatpush1.msra.mxu0 0.0
        %1752 = vmatprep.subr.mxu0 0.0
        %1753 = vmatpush1.msra.mxu0 0.0
        %1754 = vmatprep.subr.mxu0 0.0
        %1755 = vmatpush1.msra.mxu0 0.0
        %1756 = vmatprep.subr.mxu0 0.0
        %1757 = vmatpush1.msra.mxu0 0.0
        %1758 = vmatprep.subr.mxu0 0.0
        %1759 = vmatpush1.msra.mxu0 0.0
        %1760 = vmatprep.subr.mxu0 0.0
        %1761 = vmatpush1.msra.mxu0 0.0
        %1762 = vmatprep.subr.mxu0 0.0
        %1763 = vmatpush1.msra.mxu0 0.0
        %1764 = vmatprep.subr.mxu0 0.0
        %1765 = vmatpush1.msra.mxu0 0.0
        %1766 = vmatprep.subr.mxu0 0.0
        %1767 = vmatpush1.msra.mxu0 0.0
        %1768 = vmatprep.subr.mxu0 0.0
        %1769 = vmatpush1.msra.mxu0 0.0
        %1770 = vmatprep.subr.mxu0 0.0
        %1771 = vmatpush1.msra.mxu0 0.0
        %1772 = vmatprep.subr.mxu0 0.0
        %1773 = vmatpush1.msra.mxu0 0.0
        %1774 = vmatprep.subr.mxu0 0.0
        %1775 = vmatpush1.msra.mxu0 0.0
        %1776 = vmatprep.subr.mxu0 0.0
        %1777 = vmatpush1.msra.mxu0 0.0
        %1778 = vmatprep.subr.mxu0 0.0
        %1779 = vmatpush1.msra.mxu0 0.0
        %1780 = vmatprep.subr.mxu0 0.0
        %1781 = vmatpush1.msra.mxu0 0.0
        %1782 = vmatprep.subr.mxu0 0.0
        %1783 = vmatpush1.msra.mxu0 0.0
        %1784 = vmatprep.subr.mxu0 0.0
        %1785 = vmatpush1.msra.mxu0 0.0
        %1786 = vmatprep.subr.mxu0 0.0
        %1787 = vmatpush1.msra.mxu0 0.0
        %1788 = vmatprep.subr.mxu0 0.0
        %1789 = vmatpush1.msra.mxu0 0.0
        %1790 = vmatprep.subr.mxu0 0.0
        %1791 = vmatpush1.msra.mxu0 0.0
        %1792 = vmatprep.subr.mxu0 0.0
        %1793 = vmatpush1.msra.mxu0 0.0
        %1794 = vmatprep.subr.mxu0 0.0
        %1795 = vmatpush1.msra.mxu0 0.0
        %1796 = vmatprep.subr.mxu0 0.0
        %1797 = vmatpush1.msra.mxu0 0.0
        %1798 = vmatprep.subr.mxu0 0.0
        %1799 = vmatpush1.msra.mxu0 0.0
        %1800 = vmatprep.subr.mxu0 0.0
        %1801 = vmatpush1.msra.mxu0 0.0
        %1802 = vmatprep.subr.mxu0 0.0
        %1803 = vmatpush1.msra.mxu0 0.0
        %1804 = vmatprep.mubr.f32.mxu0 0.0
        %1805 = vmatmul.mubr.f32.gmra.mrb[0].mxu0 %v1645
        %v1806 = vpop.f32.mrb[0].mxu0
        %v1807 = vadd.f32 0.0, %v1806
        %v1808 = vpop.f32.mrb[0].mxu0
        %1809 = vmatprep.mubr.f32.mxu0 0.0
        %1810 = vmatmul.mubr.f32.gmra.mrb[0].mxu0 %v1648
        %v1811 = vpop.f32.mrb[0].mxu0
        %v1812 = vadd.f32 0.0, %v1811
        %v1813 = vpop.f32.mrb[0].mxu0
        %1814 = vmatprep.mubr.f32.mxu0 0.0
        %1815 = vmatmul.mubr.f32.gmra.mrb[0].mxu0 %v1651
        %v1816 = vpop.f32.mrb[0].mxu0
        %v1817 = vadd.f32 0.0, %v1816
        %v1818 = vpop.f32.mrb[0].mxu0
        %1819 = vmatprep.mubr.f32.mxu0 0.0
        %1820 = vmatmul.mubr.f32.gmra.mrb[0].mxu0 %v1654
        %v1821 = vpop.f32.mrb[0].mxu0
        %v1822 = vadd.f32 0.0, %v1821
        %v1823 = vpop.f32.mrb[0].mxu0
        %1824 = vmatprep.mubr.f32.mxu0 0.0
        %1825 = vmatmul.mubr.f32.gmra.mrb[0].mxu0 %v1657
        %v1826 = vpop.f32.mrb[0].mxu0
        %v1827 = vadd.f32 0.0, %v1826
        %v1828 = vpop.f32.mrb[0].mxu0
        %1829 = vmatprep.mubr.f32.mxu0 0.0
        %1830 = vmatmul.mubr.f32.gmra.mrb[0].mxu0 %v1660
        %v1831 = vpop.f32.mrb[0].mxu0
        %v1832 = vadd.f32 0.0, %v1831
        %v1833 = vpop.f32.mrb[0].mxu0
        %1834 = vmatprep.mubr.f32.mxu0 0.0
        %1835 = vmatmul.mubr.f32.gmra.mrb[0].mxu0 %v1663
        %v1836 = vpop.f32.mrb[0].mxu0
        %v1837 = vadd.f32 0.0, %v1836
        %v1838 = vpop.f32.mrb[0].mxu0
        %1839 = vmatprep.mubr.f32.mxu0 0.0
        %1840 = vmatmul.mubr.f32.gmra.mrb[0].mxu0 %v1666
        %v1841 = vpop.f32.mrb[0].mxu0
        %v1842 = vadd.f32 0.0, %v1841
        %v1843 = vpop.f32.mrb[0].mxu0
        %1844 = vmatprep.mubr.f32.mxu0 0.0
        %1845 = vmatmul.mubr.f32.gmra.mrb[0].mxu0 %v1669
        %v1846 = vpop.f32.mrb[0].mxu0
        %v1847 = vadd.f32 0.0, %v1846
        %v1848 = vpop.f32.mrb[0].mxu0
        %1849 = vmatprep.mubr.f32.mxu0 0.0
        %1850 = vmatmul.mubr.f32.gmra.mrb[0].mxu0 %v1672
        %v1851 = vpop.f32.mrb[0].mxu0
        %v1852 = vadd.f32 0.0, %v1851
        %v1853 = vpop.f32.mrb[0].mxu0
        %1854 = vmatprep.mubr.f32.mxu0 0.0
        %1855 = vmatmul.mubr.f32.gmra.mrb[0].mxu0 %v1675
        %v1856 = vpop.f32.mrb[0].mxu0
        %v1857 = vadd.f32 0.0, %v1856
        %v1858 = vpop.f32.mrb[0].mxu0
        %1859 = vmatprep.mubr.f32.mxu0 0.0
        %1860 = vmatmul.mubr.f32.gmra.mrb[0].mxu0 %v1678
        %v1861 = vpop.f32.mrb[0].mxu0
        %v1862 = vadd.f32 0.0, %v1861
        %v1863 = vpop.f32.mrb[0].mxu0
        %1864 = vmatprep.mubr.f32.mxu0 0.0
        %1865 = vmatmul.mubr.f32.gmra.mrb[0].mxu0 %v1681
        %v1866 = vpop.f32.mrb[0].mxu0
        %v1867 = vadd.f32 0.0, %v1866
        %v1868 = vpop.f32.mrb[0].mxu0
        %1869 = vmatprep.mubr.f32.mxu0 0.0
        %1870 = vmatmul.mubr.f32.gmra.mrb[0].mxu0 %v1684
        %v1871 = vpop.f32.mrb[0].mxu0
        %v1872 = vadd.f32 0.0, %v1871
        %v1873 = vpop.f32.mrb[0].mxu0
        %1874 = vmatprep.mubr.f32.mxu0 0.0
        %1875 = vmatmul.mubr.f32.gmra.mrb[0].mxu0 %v1687
        %v1876 = vpop.f32.mrb[0].mxu0
        %v1877 = vadd.f32 0.0, %v1876
        %v1878 = vpop.f32.mrb[0].mxu0
        %1879 = vmatprep.mubr.f32.mxu0 0.0
        %1880 = vmatmul.mubr.f32.gmra.mrb[0].mxu0 %v1690
        %v1881 = vpop.f32.mrb[0].mxu0
        %v1882 = vadd.f32 0.0, %v1881
        %v1883 = vpop.f32.mrb[0].mxu0
        %1884 = vmatprep.mubr.f32.mxu0 0.0
        %1885 = vmatmul.mubr.f32.gmra.mrb[0].mxu0 %v1693
        %v1886 = vpop.f32.mrb[0].mxu0
        %v1887 = vadd.f32 0.0, %v1886
        %v1888 = vpop.f32.mrb[0].mxu0
        %1889 = vmatprep.mubr.f32.mxu0 0.0
        %1890 = vmatmul.mubr.f32.gmra.mrb[0].mxu0 %v1696
        %v1891 = vpop.f32.mrb[0].mxu0
        %v1892 = vadd.f32 0.0, %v1891
        %v1893 = vpop.f32.mrb[0].mxu0
        %1894 = vmatprep.mubr.f32.mxu0 0.0
        %1895 = vmatmul.mubr.f32.gmra.mrb[0].mxu0 %v1699
        %v1896 = vpop.f32.mrb[0].mxu0
        %v1897 = vadd.f32 0.0, %v1896
        %v1898 = vpop.f32.mrb[0].mxu0
        %1899 = vmatprep.mubr.f32.mxu0 0.0
        %1900 = vmatmul.mubr.f32.gmra.mrb[0].mxu0 %v1702
        %v1901 = vpop.f32.mrb[0].mxu0
        %v1902 = vadd.f32 0.0, %v1901
        %v1903 = vpop.f32.mrb[0].mxu0
        %1904 = vmatprep.mubr.f32.mxu0 0.0
        %1905 = vmatmul.mubr.f32.gmra.mrb[0].mxu0 %v1705
        %v1906 = vpop.f32.mrb[0].mxu0
        %v1907 = vadd.f32 0.0, %v1906
        %v1908 = vpop.f32.mrb[0].mxu0
        %1909 = vmatprep.mubr.f32.mxu0 0.0
        %1910 = vmatmul.mubr.f32.gmra.mrb[0].mxu0 %v1708
        %v1911 = vpop.f32.mrb[0].mxu0
        %v1912 = vadd.f32 0.0, %v1911
        %v1913 = vpop.f32.mrb[0].mxu0
        %1914 = vmatprep.mubr.f32.mxu0 0.0
        %1915 = vmatmul.mubr.f32.gmra.mrb[0].mxu0 %v1711
        %v1916 = vpop.f32.mrb[0].mxu0
        %v1917 = vadd.f32 0.0, %v1916
        %v1918 = vpop.f32.mrb[0].mxu0
        %1919 = vmatprep.mubr.f32.mxu0 0.0
        %1920 = vmatmul.mubr.f32.gmra.mrb[0].mxu0 %v1714
        %v1921 = vpop.f32.mrb[0].mxu0
        %v1922 = vadd.f32 0.0, %v1921
        %v1923 = vpop.f32.mrb[0].mxu0
        %1924 = vmatprep.mubr.f32.mxu0 0.0
        %1925 = vmatmul.mubr.f32.gmra.mrb[0].mxu0 %v1717
        %v1926 = vpop.f32.mrb[0].mxu0
        %v1927 = vadd.f32 0.0, %v1926
        %v1928 = vpop.f32.mrb[0].mxu0
        %1929 = vmatprep.mubr.f32.mxu0 0.0
        %1930 = vmatmul.mubr.f32.gmra.mrb[0].mxu0 %v1720
        %v1931 = vpop.f32.mrb[0].mxu0
        %v1932 = vadd.f32 0.0, %v1931
        %v1933 = vpop.f32.mrb[0].mxu0
        %1934 = vmatprep.mubr.f32.mxu0 0.0
        %1935 = vmatmul.mubr.f32.gmra.mrb[0].mxu0 %v1723
        %v1936 = vpop.f32.mrb[0].mxu0
        %v1937 = vadd.f32 0.0, %v1936
        %v1938 = vpop.f32.mrb[0].mxu0
        %1939 = vmatprep.mubr.f32.mxu0 0.0
        %1940 = vmatmul.mubr.f32.gmra.mrb[0].mxu0 %v1726
        %v1941 = vpop.f32.mrb[0].mxu0
        %v1942 = vadd.f32 0.0, %v1941
        %v1943 = vpop.f32.mrb[0].mxu0
        %1944 = vmatprep.mubr.f32.mxu0 0.0
        %1945 = vmatmul.mubr.f32.gmra.mrb[0].mxu0 %v1729
        %v1946 = vpop.f32.mrb[0].mxu0
        %v1947 = vadd.f32 0.0, %v1946
        %v1948 = vpop.f32.mrb[0].mxu0
        %1949 = vmatprep.mubr.f32.mxu0 0.0
        %1950 = vmatmul.mubr.f32.gmra.mrb[0].mxu0 %v1732
        %v1951 = vpop.f32.mrb[0].mxu0
        %v1952 = vadd.f32 0.0, %v1951
        %v1953 = vpop.f32.mrb[0].mxu0
        %1954 = vmatprep.mubr.f32.mxu0 0.0
        %1955 = vmatmul.mubr.f32.gmra.mrb[0].mxu0 %v1735
        %v1956 = vpop.f32.mrb[0].mxu0
        %v1957 = vadd.f32 0.0, %v1956
        %v1958 = vpop.f32.mrb[0].mxu0
        %1959 = vmatprep.mubr.f32.mxu0 0.0
        %1960 = vmatmul.mubr.f32.gmra.mrb[0].mxu0 %v1738
        %v1961 = vpop.f32.mrb[0].mxu0
        %v1962 = vadd.f32 0.0, %v1961
        %v1963 = vpop.f32.mrb[0].mxu0
        %1964 = vdwg.mxu0
        %v1965 = vadd.f32 %v1576, %v1807
        %v1966 = vadd.f32 %v1577, %v1812
        %v1967 = vadd.f32 %v1578, %v1817
        %v1968 = vadd.f32 %v1579, %v1822
        %v1969 = vadd.f32 %v1580, %v1827
        %v1970 = vadd.f32 %v1581, %v1832
        %v1971 = vadd.f32 %v1582, %v1837
        %v1972 = vadd.f32 %v1583, %v1842
        %v1973 = vadd.f32 %v1584, %v1847
        %v1974 = vadd.f32 %v1585, %v1852
        %v1975 = vadd.f32 %v1586, %v1857
        %v1976 = vadd.f32 %v1587, %v1862
        %v1977 = vadd.f32 %v1588, %v1867
        %v1978 = vadd.f32 %v1589, %v1872
        %v1979 = vadd.f32 %v1590, %v1877
        %v1980 = vadd.f32 %v1591, %v1882
        %v1981 = vadd.f32 %v1592, %v1887
        %v1982 = vadd.f32 %v1593, %v1892
        %v1983 = vadd.f32 %v1594, %v1897
        %v1984 = vadd.f32 %v1595, %v1902
        %v1985 = vadd.f32 %v1596, %v1907
        %v1986 = vadd.f32 %v1597, %v1912
        %v1987 = vadd.f32 %v1598, %v1917
        %v1988 = vadd.f32 %v1599, %v1922
        %v1989 = vadd.f32 %v1600, %v1927
        %v1990 = vadd.f32 %v1601, %v1932
        %v1991 = vadd.f32 %v1602, %v1937
        %v1992 = vadd.f32 %v1603, %v1942
        %v1993 = vadd.f32 %v1604, %v1947
        %v1994 = vadd.f32 %v1605, %v1952
        %v1995 = vadd.f32 %v1606, %v1957
        %v1996 = vadd.f32 %v1607, %v1962
        %v1997 = vld [vmem:[%s8] sm:$0x1]
        %v1999 = vlaneseq
        %v2000 = vshrl.u32 %v1999, 7
        %v2001 = vsub.s32 0, %v2000
        %v2002 = vrot.slane %v1997, %v2001
        %v2004 = vadd.f32 %v1965, %v2002
        %v2005 = vadd.f32 %v1966, %v2002
        %v2006 = vadd.f32 %v1967, %v2002
        %v2007 = vadd.f32 %v1968, %v2002
        %v2008 = vadd.f32 %v1969, %v2002
        %v2009 = vadd.f32 %v1970, %v2002
        %v2010 = vadd.f32 %v1971, %v2002
        %v2011 = vadd.f32 %v1972, %v2002
        %v2012 = vadd.f32 %v1973, %v2002
        %v2013 = vadd.f32 %v1974, %v2002
        %v2014 = vadd.f32 %v1975, %v2002
        %v2015 = vadd.f32 %v1976, %v2002
        %v2016 = vadd.f32 %v1977, %v2002
        %v2017 = vadd.f32 %v1978, %v2002
        %v2018 = vadd.f32 %v1979, %v2002
        %v2019 = vadd.f32 %v1980, %v2002
        %v2020 = vadd.f32 %v1981, %v2002
        %v2021 = vadd.f32 %v1982, %v2002
        %v2022 = vadd.f32 %v1983, %v2002
        %v2023 = vadd.f32 %v1984, %v2002
        %v2024 = vadd.f32 %v1985, %v2002
        %v2025 = vadd.f32 %v1986, %v2002
        %v2026 = vadd.f32 %v1987, %v2002
        %v2027 = vadd.f32 %v1988, %v2002
        %v2028 = vadd.f32 %v1989, %v2002
        %v2029 = vadd.f32 %v1990, %v2002
        %v2030 = vadd.f32 %v1991, %v2002
        %v2031 = vadd.f32 %v1992, %v2002
        %v2032 = vadd.f32 %v1993, %v2002
        %v2033 = vadd.f32 %v1994, %v2002
        %v2034 = vadd.f32 %v1995, %v2002
        %v2035 = vadd.f32 %v1996, %v2002
        %v2036 = vmax.f32 %v2004, 0.0
        %v2037 = vmax.f32 %v2005, 0.0
        %v2038 = vmax.f32 %v2006, 0.0
        %v2039 = vmax.f32 %v2007, 0.0
        %v2040 = vmax.f32 %v2008, 0.0
        %v2041 = vmax.f32 %v2009, 0.0
        %v2042 = vmax.f32 %v2010, 0.0
        %v2043 = vmax.f32 %v2011, 0.0
        %v2044 = vmax.f32 %v2012, 0.0
        %v2045 = vmax.f32 %v2013, 0.0
        %v2046 = vmax.f32 %v2014, 0.0
        %v2047 = vmax.f32 %v2015, 0.0
        %v2048 = vmax.f32 %v2016, 0.0
        %v2049 = vmax.f32 %v2017, 0.0
        %v2050 = vmax.f32 %v2018, 0.0
        %v2051 = vmax.f32 %v2019, 0.0
        %v2052 = vmax.f32 %v2020, 0.0
        %v2053 = vmax.f32 %v2021, 0.0
        %v2054 = vmax.f32 %v2022, 0.0
        %v2055 = vmax.f32 %v2023, 0.0
        %v2056 = vmax.f32 %v2024, 0.0
        %v2057 = vmax.f32 %v2025, 0.0
        %v2058 = vmax.f32 %v2026, 0.0
        %v2059 = vmax.f32 %v2027, 0.0
        %v2060 = vmax.f32 %v2028, 0.0
        %v2061 = vmax.f32 %v2029, 0.0
        %v2062 = vmax.f32 %v2030, 0.0
        %v2063 = vmax.f32 %v2031, 0.0
        %v2064 = vmax.f32 %v2032, 0.0
        %v2065 = vmax.f32 %v2033, 0.0
        %v2066 = vmax.f32 %v2034, 0.0
        %v2067 = vmax.f32 %v2035, 0.0
        %2068 = vst [vmem:[%s502] sm:$0xff] %v2036
        %2069 = vst [vmem:[%s502 + $0x8] sm:$0xff] %v2037
        %2070 = vst [vmem:[%s502 + $0x10] sm:$0xff] %v2038
        %2071 = vst [vmem:[%s502 + $0x18] sm:$0xff] %v2039
        %2072 = vst [vmem:[%s502 + $0x20] sm:$0xff] %v2040
        %2073 = vst [vmem:[%s502 + $0x28] sm:$0xff] %v2041
        %2074 = vst [vmem:[%s502 + $0x30] sm:$0xff] %v2042
        %2075 = vst [vmem:[%s502 + $0x38] sm:$0xff] %v2043
        %2076 = vst [vmem:[%s502 + $0x40] sm:$0xff] %v2044
        %2077 = vst [vmem:[%s502 + $0x48] sm:$0xff] %v2045
        %2078 = vst [vmem:[%s502 + $0x50] sm:$0xff] %v2046
        %2079 = vst [vmem:[%s502 + $0x58] sm:$0xff] %v2047
        %2080 = vst [vmem:[%s502 + $0x60] sm:$0xff] %v2048
        %2081 = vst [vmem:[%s502 + $0x68] sm:$0xff] %v2049
        %2082 = vst [vmem:[%s502 + $0x70] sm:$0xff] %v2050
        %2083 = vst [vmem:[%s502 + $0x78] sm:$0xff] %v2051
        %2084 = vst [vmem:[%s502 + $0x80] sm:$0xff] %v2052
        %2085 = vst [vmem:[%s502 + $0x88] sm:$0xff] %v2053
        %2086 = vst [vmem:[%s502 + $0x90] sm:$0xff] %v2054
        %2087 = vst [vmem:[%s502 + $0x98] sm:$0xff] %v2055
        %2088 = vst [vmem:[%s502 + $0xa0] sm:$0xff] %v2056
        %2089 = vst [vmem:[%s502 + $0xa8] sm:$0xff] %v2057
        %2090 = vst [vmem:[%s502 + $0xb0] sm:$0xff] %v2058
        %2091 = vst [vmem:[%s502 + $0xb8] sm:$0xff] %v2059
        %2092 = vst [vmem:[%s502 + $0xc0] sm:$0xff] %v2060
        %2093 = vst [vmem:[%s502 + $0xc8] sm:$0xff] %v2061
        %2094 = vst [vmem:[%s502 + $0xd0] sm:$0xff] %v2062
        %2095 = vst [vmem:[%s502 + $0xd8] sm:$0xff] %v2063
        %2096 = vst [vmem:[%s502 + $0xe0] sm:$0xff] %v2064
        %2097 = vst [vmem:[%s502 + $0xe8] sm:$0xff] %v2065
        %2098 = vst [vmem:[%s502 + $0xf0] sm:$0xff] %v2066
        %2099 = vst [vmem:[%s502 + $0xf8] sm:$0xff] %v2067
        %s2100 = smul.u32 32, %s30
        %p2101 = scmp.lt.s32.totalorder %s2100, 63
        %s2102 = scalar_select %p2101, %s2100, 63
        %s2103 = smul.addr %s2102, 8
        %s2104 = scalar_lea.vmem %s9, %s2103
        // Predicated region
        $region81: #{_lambda_.2} parent=55 // pred_check
          %p2105 = pneg %p257
        $region82: #{_lambda_.2} parent=55 // pred_check_branch
          %2107 = sbr.rel (%p2105) target = $region84
        $region83: #{_lambda_.2} parent=55 // pred_region
          %s2108 = smul.u32 32, %s30
        $region84: #{_lambda_.2} parent=55 // pred_fallthru
          _
      $region56: #{_lambda_.2} parent=5 // pred_fallthru
        _
      %p2109 = scmp.le.s32.totalorder 2, %s25
      // Predicated region
      $region85: #{_lambda_.2} parent=5 // pred_check
        %p2110 = pneg %p2109
      $region86: #{_lambda_.2} parent=5 // pred_check_branch
        %2112 = sbr.rel (%p2110) target = $region88
      $region87: #{_lambda_.2} parent=5 // pred_region
        %s2113 = ssub.s32 %s25, 2
        // Predicated region
        $region89: #{_lambda_.2} parent=87 // pred_check
          %p2114 = pneg %p263
        $region90: #{_lambda_.2} parent=87 // pred_check_branch
          %2116 = sbr.rel (%p2114) target = $region92
        $region91: #{_lambda_.2} parent=87 // pred_region
          %s2117 = smul.u32 32, %s31
          %p2118 = scmp.lt.s32.totalorder %s2117, 63
          %s2119 = scalar_select %p2118, %s2117, 63
          %s2120 = smul.addr %s2119, 8
          %s2121 = scalar_lea.vmem %s9, %s2120
        $region92: #{_lambda_.2} parent=87 // pred_fallthru
          _
      $region88: #{_lambda_.2} parent=5 // pred_fallthru
        _
    $region6: #{_lambda_.2} parent=1 // loop_footer
      %s29 = sadd.s32 1, %s25
    $region7: #{_lambda_.2} parent=1 // loop_footer_branch
      %24 = sbr.rel target = $region3
    $region8: #{_lambda_.2} parent=1 // loop_exit
      _
    %2122 = vsyncpa [#allocation3], 1
    %s2123 = scalar_lea.sflag [#allocation3], 1
    %2124 = vsyncpa %s2123, 1
    %2125 = vsyncpa [#allocation5], 1
    %s2126 = scalar_lea.sflag [#allocation5], 1
    %2127 = vsyncpa %s2126, 1
    %2128 = vsyncpa [#allocation8], 1
    %s2129 = scalar_lea.sflag [#allocation8], 1
    %2130 = vsyncpa %s2129, 1
    %2131 = vsyncpa [#allocation11], 1

// kernel: _lambda_.3
$region0: #{_lambda_.3}
  #allocation0 [shape = 'u32[]', space=smem, size = 0x4, offset = 0x4, fixed_abs, tag = 'smem constant byte address 0x4 - core index']
  #allocation1 [shape = 'u32[144,128]{1,0:T(1,128)}', space=vmem, size = 0x12000, scoped, tag = 'internal scratch']
  #allocation2 [shape = 'f32[1,1]{1,0:T(1,128)S(1)}', space=vmem, size = 0x200, scoped, tag = 'scoped memory for _lambda_.3']
  %s0 = inlined_call_operand.vmem [shape: f32[2,256,128], index: 0, kind: input, shape index: {}]
  %s1 = inlined_call_operand.vmem [shape: f32[128,16], index: 1, kind: input, shape index: {}]
  %s2 = inlined_call_operand.vmem [shape: f32[1,16], index: 2, kind: input, shape index: {}]
  %s3 = inlined_call_operand.vmem [shape: f32[128,16], index: 3, kind: input, shape index: {}]
  %s4 = inlined_call_operand.vmem [shape: f32[1,16], index: 4, kind: input, shape index: {}]
  %s5 = inlined_call_operand.vmem [shape: f32[128,128], index: 5, kind: input, shape index: {}]
  %s6 = inlined_call_operand.vmem [shape: f32[1,128], index: 6, kind: input, shape index: {}]
  %s7 = inlined_call_operand.<no memory space> [shape: f32[1,1], index: 7, kind: input, shape index: {}]
  %s8 = inlined_call_operand.hbm [shape: f32[2,256,128], index: 8, kind: output, shape index: {}]
  %s9 = sld [smem:[#allocation0]]
  $region65: #{_lambda_.3} parent=0
    _
  %s11 = ssub.s32 1, %s9
  %s12 = scalar_select 0, %s11, %s9
  %v13 = vstv %s7
  %14 = vst [vmem:[#allocation2] sm:$0x1] %v13
  $region1: #{_lambda_.3} parent=0
    #allocation3 [shape = 'u8[262144]{0}', space=vmem, size = 0x40000, scoped, tag = 'output window, operand 0']
    #allocation4 [shape = 's32[2]{0}', space=sflag, size = 0x8, scoped, tag = 'scoped memory for _lambda_.3']
    %15 = vsyncpa [#allocation4], 0
    %s16 = scalar_lea.sflag [#allocation4], 1
    %17 = vsyncpa %s16, 0
    loop: start=0, step=1, limit=4
    $region2: #{_lambda_.3} parent=1 // loop_pre_header
      _
    $region3: #{_lambda_.3} parent=1 // loop_header
      %s19 = sphi 0, %s23
      %p20 = scmp.ge.s32.totalorder %s19, 4
      %s29 = sphi 0, %s31
      %s32 = sphi 0, %s29
      %s33 = sphi 0, %s32
      %s49 = sphi 0, %s33
      %s53 = sphi 0, %s53
      %s55 = sphi 0, %s53
      %s56 = sphi 0, %s55
      %s70 = sphi 0, %s56
      %s74 = sphi 0, %s74
      %s76 = sphi 0, %s74
      %s77 = sphi 0, %s76
      %s91 = sphi 0, %s77
      %s95 = sphi 0, %s95
      %s97 = sphi 0, %s95
      %s98 = sphi 0, %s97
      %s112 = sphi 0, %s98
      %s116 = sphi 0, %s116
      %s118 = sphi 0, %s116
      %s119 = sphi 0, %s118
      %s133 = sphi 0, %s119
      %s137 = sphi 0, %s137
      %s139 = sphi 0, %s137
      %s140 = sphi 0, %s139
      %s154 = sphi 0, %s140
      %s158 = sphi 0, %s158
      %s160 = sphi 0, %s158
      %s161 = sphi 0, %s160
      %s175 = sphi 0, %s161
      %s179 = sphi 0, %s179
      %s181 = sphi 0, %s179
      %s182 = sphi 0, %s181
      %s196 = sphi 0, %s182
      %s202 = sphi 0, %s204
      %s205 = sphi 0, %s202
      %s206 = sphi 0, %s205
      %s222 = sphi 0, %s206
    $region4: #{_lambda_.3} parent=1 // loop_header_branch
      %22 = sbr.rel (%p20) target = $region8
    $region5: #{_lambda_.3} parent=1 // loop_body
      %s24 = ssub.s32 %s19, 1
      %s25 = ssub.s32 %s19, 2
      %s26 = sadd.s32 %s19, 1
      %s27 = ssub.s32 %s19, %s26
      %p28 = scmp.eq.s32.totalorder %s27, 0
      %s30 = sadd.s32 %s29, 1
      %s31 = scalar_select %p28, %s29, %s30
      %p34 = pneg %p28
      %p35 = scmp.eq.s32.totalorder %s19, 1
      %p36 = por %p34, %p35
      %p37 = scmp.ne.s32.totalorder %s29, %s32
      %p38 = scmp.eq.s32.totalorder %s19, 0
      %p39 = por %p37, %p38
      %p40 = scmp.ne.s32.totalorder %s29, %s32
      %p41 = scmp.eq.s32.totalorder %s24, 1
      %p42 = por %p40, %p41
      %p43 = scmp.ne.s32.totalorder %s32, %s33
      %p44 = scmp.eq.s32.totalorder %s24, 0
      %p45 = por %p43, %p44
      %p46 = scmp.ne.s32.totalorder %s32, %s33
      %p47 = scmp.eq.s32.totalorder %s25, 1
      %p48 = por %p46, %p47
      %p50 = scmp.ne.s32.totalorder %s33, %s49
      %p51 = scmp.eq.s32.totalorder %s25, 0
      %p52 = por %p50, %p51
      %s54 = sadd.s32 %s53, 1
      %p57 = scmp.eq.s32.totalorder %s19, 1
      %p58 = scmp.ne.s32.totalorder %s53, %s55
      %p59 = scmp.eq.s32.totalorder %s19, 0
      %p60 = por %p58, %p59
      %p61 = scmp.ne.s32.totalorder %s53, %s55
      %p62 = scmp.eq.s32.totalorder %s24, 1
      %p63 = por %p61, %p62
      %p64 = scmp.ne.s32.totalorder %s55, %s56
      %p65 = scmp.eq.s32.totalorder %s24, 0
      %p66 = por %p64, %p65
      %p67 = scmp.ne.s32.totalorder %s55, %s56
      %p68 = scmp.eq.s32.totalorder %s25, 1
      %p69 = por %p67, %p68
      %p71 = scmp.ne.s32.totalorder %s56, %s70
      %p72 = scmp.eq.s32.totalorder %s25, 0
      %p73 = por %p71, %p72
      %s75 = sadd.s32 %s74, 1
      %p78 = scmp.eq.s32.totalorder %s19, 1
      %p79 = scmp.ne.s32.totalorder %s74, %s76
      %p80 = scmp.eq.s32.totalorder %s19, 0
      %p81 = por %p79, %p80
      %p82 = scmp.ne.s32.totalorder %s74, %s76
      %p83 = scmp.eq.s32.totalorder %s24, 1
      %p84 = por %p82, %p83
      %p85 = scmp.ne.s32.totalorder %s76, %s77
      %p86 = scmp.eq.s32.totalorder %s24, 0
      %p87 = por %p85, %p86
      %p88 = scmp.ne.s32.totalorder %s76, %s77
      %p89 = scmp.eq.s32.totalorder %s25, 1
      %p90 = por %p88, %p89
      %p92 = scmp.ne.s32.totalorder %s77, %s91
      %p93 = scmp.eq.s32.totalorder %s25, 0
      %p94 = por %p92, %p93
      %s96 = sadd.s32 %s95, 1
      %p99 = scmp.eq.s32.totalorder %s19, 1
      %p100 = scmp.ne.s32.totalorder %s95, %s97
      %p101 = scmp.eq.s32.totalorder %s19, 0
      %p102 = por %p100, %p101
      %p103 = scmp.ne.s32.totalorder %s95, %s97
      %p104 = scmp.eq.s32.totalorder %s24, 1
      %p105 = por %p103, %p104
      %p106 = scmp.ne.s32.totalorder %s97, %s98
      %p107 = scmp.eq.s32.totalorder %s24, 0
      %p108 = por %p106, %p107
      %p109 = scmp.ne.s32.totalorder %s97, %s98
      %p110 = scmp.eq.s32.totalorder %s25, 1
      %p111 = por %p109, %p110
      %p113 = scmp.ne.s32.totalorder %s98, %s112
      %p114 = scmp.eq.s32.totalorder %s25, 0
      %p115 = por %p113, %p114
      %s117 = sadd.s32 %s116, 1
      %p120 = scmp.eq.s32.totalorder %s19, 1
      %p121 = scmp.ne.s32.totalorder %s116, %s118
      %p122 = scmp.eq.s32.totalorder %s19, 0
      %p123 = por %p121, %p122
      %p124 = scmp.ne.s32.totalorder %s116, %s118
      %p125 = scmp.eq.s32.totalorder %s24, 1
      %p126 = por %p124, %p125
      %p127 = scmp.ne.s32.totalorder %s118, %s119
      %p128 = scmp.eq.s32.totalorder %s24, 0
      %p129 = por %p127, %p128
      %p130 = scmp.ne.s32.totalorder %s118, %s119
      %p131 = scmp.eq.s32.totalorder %s25, 1
      %p132 = por %p130, %p131
      %p134 = scmp.ne.s32.totalorder %s119, %s133
      %p135 = scmp.eq.s32.totalorder %s25, 0
      %p136 = por %p134, %p135
      %s138 = sadd.s32 %s137, 1
      %p141 = scmp.eq.s32.totalorder %s19, 1
      %p142 = scmp.ne.s32.totalorder %s137, %s139
      %p143 = scmp.eq.s32.totalorder %s19, 0
      %p144 = por %p142, %p143
      %p145 = scmp.ne.s32.totalorder %s137, %s139
      %p146 = scmp.eq.s32.totalorder %s24, 1
      %p147 = por %p145, %p146
      %p148 = scmp.ne.s32.totalorder %s139, %s140
      %p149 = scmp.eq.s32.totalorder %s24, 0
      %p150 = por %p148, %p149
      %p151 = scmp.ne.s32.totalorder %s139, %s140
      %p152 = scmp.eq.s32.totalorder %s25, 1
      %p153 = por %p151, %p152
      %p155 = scmp.ne.s32.totalorder %s140, %s154
      %p156 = scmp.eq.s32.totalorder %s25, 0
      %p157 = por %p155, %p156
      %s159 = sadd.s32 %s158, 1
      %p162 = scmp.eq.s32.totalorder %s19, 1
      %p163 = scmp.ne.s32.totalorder %s158, %s160
      %p164 = scmp.eq.s32.totalorder %s19, 0
      %p165 = por %p163, %p164
      %p166 = scmp.ne.s32.totalorder %s158, %s160
      %p167 = scmp.eq.s32.totalorder %s24, 1
      %p168 = por %p166, %p167
      %p169 = scmp.ne.s32.totalorder %s160, %s161
      %p170 = scmp.eq.s32.totalorder %s24, 0
      %p171 = por %p169, %p170
      %p172 = scmp.ne.s32.totalorder %s160, %s161
      %p173 = scmp.eq.s32.totalorder %s25, 1
      %p174 = por %p172, %p173
      %p176 = scmp.ne.s32.totalorder %s161, %s175
      %p177 = scmp.eq.s32.totalorder %s25, 0
      %p178 = por %p176, %p177
      %s180 = sadd.s32 %s179, 1
      %p183 = scmp.eq.s32.totalorder %s19, 1
      %p184 = scmp.ne.s32.totalorder %s179, %s181
      %p185 = scmp.eq.s32.totalorder %s19, 0
      %p186 = por %p184, %p185
      %p187 = scmp.ne.s32.totalorder %s179, %s181
      %p188 = scmp.eq.s32.totalorder %s24, 1
      %p189 = por %p187, %p188
      %p190 = scmp.ne.s32.totalorder %s181, %s182
      %p191 = scmp.eq.s32.totalorder %s24, 0
      %p192 = por %p190, %p191
      %p193 = scmp.ne.s32.totalorder %s181, %s182
      %p194 = scmp.eq.s32.totalorder %s25, 1
      %p195 = por %p193, %p194
      %p197 = scmp.ne.s32.totalorder %s182, %s196
      %p198 = scmp.eq.s32.totalorder %s25, 0
      %p199 = por %p197, %p198
      %s200 = ssub.s32 %s19, %s26
      %p201 = scmp.eq.s32.totalorder %s200, 0
      %s203 = sadd.s32 %s202, 1
      %s204 = scalar_select %p201, %s202, %s203
      %p207 = pneg %p201
      %p208 = scmp.eq.s32.totalorder %s19, 1
      %p209 = por %p207, %p208
      %p210 = scmp.ne.s32.totalorder %s202, %s205
      %p211 = scmp.eq.s32.totalorder %s19, 0
      %p212 = por %p210, %p211
      %p213 = scmp.ne.s32.totalorder %s202, %s205
      %p214 = scmp.eq.s32.totalorder %s24, 1
      %p215 = por %p213, %p214
      %p216 = scmp.ne.s32.totalorder %s205, %s206
      %p217 = scmp.eq.s32.totalorder %s24, 0
      %p218 = por %p216, %p217
      %p219 = scmp.ne.s32.totalorder %s205, %s206
      %p220 = scmp.eq.s32.totalorder %s25, 1
      %p221 = por %p219, %p220
      %p223 = scmp.ne.s32.totalorder %s206, %s222
      %p224 = scmp.eq.s32.totalorder %s25, 0
      %p225 = por %p223, %p224
      %p226 = scmp.le.s32.totalorder 1, %s19
      %p227 = scmp.lt.s32.totalorder %s19, 3
      %p228 = pnand %p226, %p227
      %p229 = pneg %p228
      // Predicated region
      $region9: #{_lambda_.3} parent=5 // pred_check
        _
      $region10: #{_lambda_.3} parent=5 // pred_check_branch
        %231 = sbr.rel (%p228) target = $region12
      $region11: #{_lambda_.3} parent=5 // pred_region
        %s232 = ssub.s32 %s19, 1
        // Predicated region
        $region13: #{_lambda_.3} parent=11 // pred_check
          %p233 = pneg %p66
        $region14: #{_lambda_.3} parent=11 // pred_check_branch
          %235 = sbr.rel (%p233) target = $region16
        $region15: #{_lambda_.3} parent=11 // pred_region
          _
        $region16: #{_lambda_.3} parent=11 // pred_fallthru
          _
        // Predicated region
        $region17: #{_lambda_.3} parent=11 // pred_check
          %p236 = pneg %p87
        $region18: #{_lambda_.3} parent=11 // pred_check_branch
          %238 = sbr.rel (%p236) target = $region20
        $region19: #{_lambda_.3} parent=11 // pred_region
          _
        $region20: #{_lambda_.3} parent=11 // pred_fallthru
          _
        // Predicated region
        $region21: #{_lambda_.3} parent=11 // pred_check
          %p239 = pneg %p108
        $region22: #{_lambda_.3} parent=11 // pred_check_branch
          %241 = sbr.rel (%p239) target = $region24
        $region23: #{_lambda_.3} parent=11 // pred_region
          _
        $region24: #{_lambda_.3} parent=11 // pred_fallthru
          _
        // Predicated region
        $region25: #{_lambda_.3} parent=11 // pred_check
          %p242 = pneg %p129
        $region26: #{_lambda_.3} parent=11 // pred_check_branch
          %244 = sbr.rel (%p242) target = $region28
        $region27: #{_lambda_.3} parent=11 // pred_region
          _
        $region28: #{_lambda_.3} parent=11 // pred_fallthru
          _
        // Predicated region
        $region29: #{_lambda_.3} parent=11 // pred_check
          %p245 = pneg %p150
        $region30: #{_lambda_.3} parent=11 // pred_check_branch
          %247 = sbr.rel (%p245) target = $region32
        $region31: #{_lambda_.3} parent=11 // pred_region
          _
        $region32: #{_lambda_.3} parent=11 // pred_fallthru
          _
        // Predicated region
        $region33: #{_lambda_.3} parent=11 // pred_check
          %p248 = pneg %p171
        $region34: #{_lambda_.3} parent=11 // pred_check_branch
          %250 = sbr.rel (%p248) target = $region36
        $region35: #{_lambda_.3} parent=11 // pred_region
          _
        $region36: #{_lambda_.3} parent=11 // pred_fallthru
          _
        // Predicated region
        $region37: #{_lambda_.3} parent=11 // pred_check
          %p251 = pneg %p192
        $region38: #{_lambda_.3} parent=11 // pred_check_branch
          %253 = sbr.rel (%p251) target = $region40
        $region39: #{_lambda_.3} parent=11 // pred_region
          _
        $region40: #{_lambda_.3} parent=11 // pred_fallthru
          _
      $region12: #{_lambda_.3} parent=5 // pred_fallthru
        _
      %p254 = scmp.lt.s32.totalorder %s19, 2
      // Predicated region
      $region41: #{_lambda_.3} parent=5 // pred_check
        %p255 = pneg %p254
      $region42: #{_lambda_.3} parent=5 // pred_check_branch
        %257 = sbr.rel (%p255) target = $region44
      $region43: #{_lambda_.3} parent=5 // pred_region
        // Predicated region
        $region45: #{_lambda_.3} parent=43 // pred_check
          %p258 = pneg %p39
        $region46: #{_lambda_.3} parent=43 // pred_check_branch
          %260 = sbr.rel (%p258) target = $region48
        $region47: #{_lambda_.3} parent=43 // pred_region
          %p261 = scmp.lt.s32.totalorder %s19, 1
          %s262 = scalar_select %p261, %s19, 1
          %s263 = smul.addr %s262, 32
          %s264 = smul.addr %s263, 8
          %s265 = scalar_lea.vmem %s0, %s264
        $region48: #{_lambda_.3} parent=43 // pred_fallthru
          _
      $region44: #{_lambda_.3} parent=5 // pred_fallthru
        _
      %p266 = scmp.le.s32.totalorder 1, %s19
      %p267 = scmp.lt.s32.totalorder %s19, 3
      %p268 = pnand %p266, %p267
      %p269 = pneg %p268
      // Predicated region
      $region49: #{_lambda_.3} parent=5 // pred_check
        _
      $region50: #{_lambda_.3} parent=5 // pred_check_branch
        %271 = sbr.rel (%p268) target = $region52
      $region51: #{_lambda_.3} parent=5 // pred_region
        %s272 = ssub.s32 %s19, 1
        %p273 = scmp.lt.s32.totalorder %s24, 1
        %s274 = scalar_select %p273, %s24, 1
        %s275 = smul.addr %s274, 32
        %s276 = smul.addr %s275, 8
        %s277 = scalar_lea.vmem %s0, %s276
        %p278 = pneg %p45
        %p279 = pneg %p42
        %p280 = pneg %p66
        %p281 = pneg %p63
        %p282 = pneg %p87
        %p283 = pneg %p84
        %p284 = pneg %p108
        %p285 = pneg %p105
        %p286 = pneg %p129
        %p287 = pneg %p126
        %p288 = pneg %p150
        %p289 = pneg %p147
        %p290 = pneg %p171
        %p291 = pneg %p168
        %p292 = pneg %p192
        %p293 = pneg %p189
        %p294 = pneg %p218
        %p295 = pneg %p215
        %s296 = sand.u32 %s205, 1
        %s297 = scalar_lea.sflag [#allocation4], %s296
        %s298 = sand.u32 %s205, 1
        %s299 = smul.addr %s298, 256
        %s300 = scalar_lea.vmem [#allocation3], %s299
        %p301 = scmp.lt.s32.totalorder %s24, 1
        %s302 = scalar_select %p301, %s24, 1
        %s303 = smul.addr %s302, 32
        %s304 = smul.addr %s303, 8
        %s305 = scalar_lea.vmem %s0, %s304
        %v306 = vld [vmem:[%s305] sm:$0xff]
        %v307 = vld [vmem:[%s305 + $0x8] sm:$0xff]
        %v308 = vld [vmem:[%s305 + $0x10] sm:$0xff]
        %v309 = vld [vmem:[%s305 + $0x18] sm:$0xff]
        %v310 = vld [vmem:[%s305 + $0x20] sm:$0xff]
        %v311 = vld [vmem:[%s305 + $0x28] sm:$0xff]
        %v312 = vld [vmem:[%s305 + $0x30] sm:$0xff]
        %v313 = vld [vmem:[%s305 + $0x38] sm:$0xff]
        %v314 = vld [vmem:[%s305 + $0x40] sm:$0xff]
        %v315 = vld [vmem:[%s305 + $0x48] sm:$0xff]
        %v316 = vld [vmem:[%s305 + $0x50] sm:$0xff]
        %v317 = vld [vmem:[%s305 + $0x58] sm:$0xff]
        %v318 = vld [vmem:[%s305 + $0x60] sm:$0xff]
        %v319 = vld [vmem:[%s305 + $0x68] sm:$0xff]
        %v320 = vld [vmem:[%s305 + $0x70] sm:$0xff]
        %v321 = vld [vmem:[%s305 + $0x78] sm:$0xff]
        %v322 = vld [vmem:[%s305 + $0x80] sm:$0xff]
        %v323 = vld [vmem:[%s305 + $0x88] sm:$0xff]
        %v324 = vld [vmem:[%s305 + $0x90] sm:$0xff]
        %v325 = vld [vmem:[%s305 + $0x98] sm:$0xff]
        %v326 = vld [vmem:[%s305 + $0xa0] sm:$0xff]
        %v327 = vld [vmem:[%s305 + $0xa8] sm:$0xff]
        %v328 = vld [vmem:[%s305 + $0xb0] sm:$0xff]
        %v329 = vld [vmem:[%s305 + $0xb8] sm:$0xff]
        %v330 = vld [vmem:[%s305 + $0xc0] sm:$0xff]
        %v331 = vld [vmem:[%s305 + $0xc8] sm:$0xff]
        %v332 = vld [vmem:[%s305 + $0xd0] sm:$0xff]
        %v333 = vld [vmem:[%s305 + $0xd8] sm:$0xff]
        %v334 = vld [vmem:[%s305 + $0xe0] sm:$0xff]
        %v335 = vld [vmem:[%s305 + $0xe8] sm:$0xff]
        %v336 = vld [vmem:[%s305 + $0xf0] sm:$0xff]
        %v337 = vld [vmem:[%s305 + $0xf8] sm:$0xff]
        %v338 = vld [vmem:[%s1] sm:$0xff]
        %v339 = vld [vmem:[%s1 + $0x8] sm:$0xff]
        %v340 = vld [vmem:[%s1 + $0x10] sm:$0xff]
        %v341 = vld [vmem:[%s1 + $0x18] sm:$0xff]
        %v342 = vld [vmem:[%s1 + $0x20] sm:$0xff]
        %v343 = vld [vmem:[%s1 + $0x28] sm:$0xff]
        %v344 = vld [vmem:[%s1 + $0x30] sm:$0xff]
        %v345 = vld [vmem:[%s1 + $0x38] sm:$0xff]
        %v346 = vld [vmem:[%s1 + $0x40] sm:$0xff]
        %v347 = vld [vmem:[%s1 + $0x48] sm:$0xff]
        %v348 = vld [vmem:[%s1 + $0x50] sm:$0xff]
        %v349 = vld [vmem:[%s1 + $0x58] sm:$0xff]
        %v350 = vld [vmem:[%s1 + $0x60] sm:$0xff]
        %v351 = vld [vmem:[%s1 + $0x68] sm:$0xff]
        %v352 = vld [vmem:[%s1 + $0x70] sm:$0xff]
        %v353 = vld [vmem:[%s1 + $0x78] sm:$0xff]
        %v354 = vld [vmem:[%s2] sm:$0x1]
        %v356 = vlaneseq
        %v357 = vshrl.u32 %v356, 7
        %v358 = vsub.s32 0, %v357
        %v359 = vrot.slane %v354, %v358
        %361 = vmatprep.subr.mxu0 0.0
        %362 = vmatpush1.msra.mxu0 %v338
        %363 = vmatprep.subr.mxu0 0.0
        %364 = vmatpush1.msra.mxu0 %v339
        %365 = vmatprep.subr.mxu0 0.0
        %366 = vmatpush1.msra.mxu0 %v340
        %367 = vmatprep.subr.mxu0 0.0
        %368 = vmatpush1.msra.mxu0 %v341
        %369 = vmatprep.subr.mxu0 0.0
        %370 = vmatpush1.msra.mxu0 %v342
        %371 = vmatprep.subr.mxu0 0.0
        %372 = vmatpush1.msra.mxu0 %v343
        %373 = vmatprep.subr.mxu0 0.0
        %374 = vmatpush1.msra.mxu0 %v344
        %375 = vmatprep.subr.mxu0 0.0
        %376 = vmatpush1.msra.mxu0 %v345
        %377 = vmatprep.subr.mxu0 0.0
        %378 = vmatpush1.msra.mxu0 %v346
        %379 = vmatprep.subr.mxu0 0.0
        %380 = vmatpush1.msra.mxu0 %v347
        %381 = vmatprep.subr.mxu0 0.0
        %382 = vmatpush1.msra.mxu0 %v348
        %383 = vmatprep.subr.mxu0 0.0
        %384 = vmatpush1.msra.mxu0 %v349
        %385 = vmatprep.subr.mxu0 0.0
        %386 = vmatpush1.msra.mxu0 %v350
        %387 = vmatprep.subr.mxu0 0.0
        %388 = vmatpush1.msra.mxu0 %v351
        %389 = vmatprep.subr.mxu0 0.0
        %390 = vmatpush1.msra.mxu0 %v352
        %391 = vmatprep.subr.mxu0 0.0
        %392 = vmatpush1.msra.mxu0 %v353
        %393 = vmatprep.subr.mxu0 0.0
        %394 = vmatpush1.msra.mxu0 0.0
        %395 = vmatprep.subr.mxu0 0.0
        %396 = vmatpush1.msra.mxu0 0.0
        %397 = vmatprep.subr.mxu0 0.0
        %398 = vmatpush1.msra.mxu0 0.0
        %399 = vmatprep.subr.mxu0 0.0
        %400 = vmatpush1.msra.mxu0 0.0
        %401 = vmatprep.subr.mxu0 0.0
        %402 = vmatpush1.msra.mxu0 0.0
        %403 = vmatprep.subr.mxu0 0.0
        %404 = vmatpush1.msra.mxu0 0.0
        %405 = vmatprep.subr.mxu0 0.0
        %406 = vmatpush1.msra.mxu0 0.0
        %407 = vmatprep.subr.mxu0 0.0
        %408 = vmatpush1.msra.mxu0 0.0
        %409 = vmatprep.subr.mxu0 0.0
        %410 = vmatpush1.msra.mxu0 0.0
        %411 = vmatprep.subr.mxu0 0.0
        %412 = vmatpush1.msra.mxu0 0.0
        %413 = vmatprep.subr.mxu0 0.0
        %414 = vmatpush1.msra.mxu0 0.0
        %415 = vmatprep.subr.mxu0 0.0
        %416 = vmatpush1.msra.mxu0 0.0
        %417 = vmatprep.subr.mxu0 0.0
        %418 = vmatpush1.msra.mxu0 0.0
        %419 = vmatprep.subr.mxu0 0.0
        %420 = vmatpush1.msra.mxu0 0.0
        %421 = vmatprep.subr.mxu0 0.0
        %422 = vmatpush1.msra.mxu0 0.0
        %423 = vmatprep.subr.mxu0 0.0
        %424 = vmatpush1.msra.mxu0 0.0
        %425 = vmatprep.mubr.f32.mxu0 0.0
        %426 = vmatmul.mubr.f32.gmra.mrb[0].mxu0 %v306
        %v427 = vpop.f32.mrb[0].mxu0
        %v428 = vadd.f32 %v359, %v427
        %v429 = vpop.f32.mrb[0].mxu0
        %430 = vmatprep.mubr.f32.mxu0 0.0
        %431 = vmatmul.mubr.f32.gmra.mrb[0].mxu0 %v307
        %v432 = vpop.f32.mrb[0].mxu0
        %v433 = vadd.f32 %v359, %v432
        %v434 = vpop.f32.mrb[0].mxu0
        %435 = vmatprep.mubr.f32.mxu0 0.0
        %436 = vmatmul.mubr.f32.gmra.mrb[0].mxu0 %v308
        %v437 = vpop.f32.mrb[0].mxu0
        %v438 = vadd.f32 %v359, %v437
        %v439 = vpop.f32.mrb[0].mxu0
        %440 = vmatprep.mubr.f32.mxu0 0.0
        %441 = vmatmul.mubr.f32.gmra.mrb[0].mxu0 %v309
        %v442 = vpop.f32.mrb[0].mxu0
        %v443 = vadd.f32 %v359, %v442
        %v444 = vpop.f32.mrb[0].mxu0
        %445 = vmatprep.mubr.f32.mxu0 0.0
        %446 = vmatmul.mubr.f32.gmra.mrb[0].mxu0 %v310
        %v447 = vpop.f32.mrb[0].mxu0
        %v448 = vadd.f32 %v359, %v447
        %v449 = vpop.f32.mrb[0].mxu0
        %450 = vmatprep.mubr.f32.mxu0 0.0
        %451 = vmatmul.mubr.f32.gmra.mrb[0].mxu0 %v311
        %v452 = vpop.f32.mrb[0].mxu0
        %v453 = vadd.f32 %v359, %v452
        %v454 = vpop.f32.mrb[0].mxu0
        %455 = vmatprep.mubr.f32.mxu0 0.0
        %456 = vmatmul.mubr.f32.gmra.mrb[0].mxu0 %v312
        %v457 = vpop.f32.mrb[0].mxu0
        %v458 = vadd.f32 %v359, %v457
        %v459 = vpop.f32.mrb[0].mxu0
        %460 = vmatprep.mubr.f32.mxu0 0.0
        %461 = vmatmul.mubr.f32.gmra.mrb[0].mxu0 %v313
        %v462 = vpop.f32.mrb[0].mxu0
        %v463 = vadd.f32 %v359, %v462
        %v464 = vpop.f32.mrb[0].mxu0
        %465 = vmatprep.mubr.f32.mxu0 0.0
        %466 = vmatmul.mubr.f32.gmra.mrb[0].mxu0 %v314
        %v467 = vpop.f32.mrb[0].mxu0
        %v468 = vadd.f32 %v359, %v467
        %v469 = vpop.f32.mrb[0].mxu0
        %470 = vmatprep.mubr.f32.mxu0 0.0
        %471 = vmatmul.mubr.f32.gmra.mrb[0].mxu0 %v315
        %v472 = vpop.f32.mrb[0].mxu0
        %v473 = vadd.f32 %v359, %v472
        %v474 = vpop.f32.mrb[0].mxu0
        %475 = vmatprep.mubr.f32.mxu0 0.0
        %476 = vmatmul.mubr.f32.gmra.mrb[0].mxu0 %v316
        %v477 = vpop.f32.mrb[0].mxu0
        %v478 = vadd.f32 %v359, %v477
        %v479 = vpop.f32.mrb[0].mxu0
        %480 = vmatprep.mubr.f32.mxu0 0.0
        %481 = vmatmul.mubr.f32.gmra.mrb[0].mxu0 %v317
        %v482 = vpop.f32.mrb[0].mxu0
        %v483 = vadd.f32 %v359, %v482
        %v484 = vpop.f32.mrb[0].mxu0
        %485 = vmatprep.mubr.f32.mxu0 0.0
        %486 = vmatmul.mubr.f32.gmra.mrb[0].mxu0 %v318
        %v487 = vpop.f32.mrb[0].mxu0
        %v488 = vadd.f32 %v359, %v487
        %v489 = vpop.f32.mrb[0].mxu0
        %490 = vmatprep.mubr.f32.mxu0 0.0
        %491 = vmatmul.mubr.f32.gmra.mrb[0].mxu0 %v319
        %v492 = vpop.f32.mrb[0].mxu0
        %v493 = vadd.f32 %v359, %v492
        %v494 = vpop.f32.mrb[0].mxu0
        %495 = vmatprep.mubr.f32.mxu0 0.0
        %496 = vmatmul.mubr.f32.gmra.mrb[0].mxu0 %v320
        %v497 = vpop.f32.mrb[0].mxu0
        %v498 = vadd.f32 %v359, %v497
        %v499 = vpop.f32.mrb[0].mxu0
        %500 = vmatprep.mubr.f32.mxu0 0.0
        %501 = vmatmul.mubr.f32.gmra.mrb[0].mxu0 %v321
        %v502 = vpop.f32.mrb[0].mxu0
        %v503 = vadd.f32 %v359, %v502
        %v504 = vpop.f32.mrb[0].mxu0
        %505 = vmatprep.mubr.f32.mxu0 0.0
        %506 = vmatmul.mubr.f32.gmra.mrb[0].mxu0 %v322
        %v507 = vpop.f32.mrb[0].mxu0
        %v508 = vadd.f32 %v359, %v507
        %v509 = vpop.f32.mrb[0].mxu0
        %510 = vmatprep.mubr.f32.mxu0 0.0
        %511 = vmatmul.mubr.f32.gmra.mrb[0].mxu0 %v323
        %v512 = vpop.f32.mrb[0].mxu0
        %v513 = vadd.f32 %v359, %v512
        %v514 = vpop.f32.mrb[0].mxu0
        %515 = vmatprep.mubr.f32.mxu0 0.0
        %516 = vmatmul.mubr.f32.gmra.mrb[0].mxu0 %v324
        %v517 = vpop.f32.mrb[0].mxu0
        %v518 = vadd.f32 %v359, %v517
        %v519 = vpop.f32.mrb[0].mxu0
        %520 = vmatprep.mubr.f32.mxu0 0.0
        %521 = vmatmul.mubr.f32.gmra.mrb[0].mxu0 %v325
        %v522 = vpop.f32.mrb[0].mxu0
        %v523 = vadd.f32 %v359, %v522
        %v524 = vpop.f32.mrb[0].mxu0
        %525 = vmatprep.mubr.f32.mxu0 0.0
        %526 = vmatmul.mubr.f32.gmra.mrb[0].mxu0 %v326
        %v527 = vpop.f32.mrb[0].mxu0
        %v528 = vadd.f32 %v359, %v527
        %v529 = vpop.f32.mrb[0].mxu0
        %530 = vmatprep.mubr.f32.mxu0 0.0
        %531 = vmatmul.mubr.f32.gmra.mrb[0].mxu0 %v327
        %v532 = vpop.f32.mrb[0].mxu0
        %v533 = vadd.f32 %v359, %v532
        %v534 = vpop.f32.mrb[0].mxu0
        %535 = vmatprep.mubr.f32.mxu0 0.0
        %536 = vmatmul.mubr.f32.gmra.mrb[0].mxu0 %v328
        %v537 = vpop.f32.mrb[0].mxu0
        %v538 = vadd.f32 %v359, %v537
        %v539 = vpop.f32.mrb[0].mxu0
        %540 = vmatprep.mubr.f32.mxu0 0.0
        %541 = vmatmul.mubr.f32.gmra.mrb[0].mxu0 %v329
        %v542 = vpop.f32.mrb[0].mxu0
        %v543 = vadd.f32 %v359, %v542
        %v544 = vpop.f32.mrb[0].mxu0
        %545 = vmatprep.mubr.f32.mxu0 0.0
        %546 = vmatmul.mubr.f32.gmra.mrb[0].mxu0 %v330
        %v547 = vpop.f32.mrb[0].mxu0
        %v548 = vadd.f32 %v359, %v547
        %v549 = vpop.f32.mrb[0].mxu0
        %550 = vmatprep.mubr.f32.mxu0 0.0
        %551 = vmatmul.mubr.f32.gmra.mrb[0].mxu0 %v331
        %v552 = vpop.f32.mrb[0].mxu0
        %v553 = vadd.f32 %v359, %v552
        %v554 = vpop.f32.mrb[0].mxu0
        %555 = vmatprep.mubr.f32.mxu0 0.0
        %556 = vmatmul.mubr.f32.gmra.mrb[0].mxu0 %v332
        %v557 = vpop.f32.mrb[0].mxu0
        %v558 = vadd.f32 %v359, %v557
        %v559 = vpop.f32.mrb[0].mxu0
        %560 = vmatprep.mubr.f32.mxu0 0.0
        %561 = vmatmul.mubr.f32.gmra.mrb[0].mxu0 %v333
        %v562 = vpop.f32.mrb[0].mxu0
        %v563 = vadd.f32 %v359, %v562
        %v564 = vpop.f32.mrb[0].mxu0
        %565 = vmatprep.mubr.f32.mxu0 0.0
        %566 = vmatmul.mubr.f32.gmra.mrb[0].mxu0 %v334
        %v567 = vpop.f32.mrb[0].mxu0
        %v568 = vadd.f32 %v359, %v567
        %v569 = vpop.f32.mrb[0].mxu0
        %570 = vmatprep.mubr.f32.mxu0 0.0
        %571 = vmatmul.mubr.f32.gmra.mrb[0].mxu0 %v335
        %v572 = vpop.f32.mrb[0].mxu0
        %v573 = vadd.f32 %v359, %v572
        %v574 = vpop.f32.mrb[0].mxu0
        %575 = vmatprep.mubr.f32.mxu0 0.0
        %576 = vmatmul.mubr.f32.gmra.mrb[0].mxu0 %v336
        %v577 = vpop.f32.mrb[0].mxu0
        %v578 = vadd.f32 %v359, %v577
        %v579 = vpop.f32.mrb[0].mxu0
        %580 = vmatprep.mubr.f32.mxu0 0.0
        %581 = vmatmul.mubr.f32.gmra.mrb[0].mxu0 %v337
        %v582 = vpop.f32.mrb[0].mxu0
        %v583 = vadd.f32 %v359, %v582
        %v584 = vpop.f32.mrb[0].mxu0
        %585 = vdwg.mxu0
        %v586 = vld [vmem:[%s3] sm:$0xff]
        %v587 = vld [vmem:[%s3 + $0x8] sm:$0xff]
        %v588 = vld [vmem:[%s3 + $0x10] sm:$0xff]
        %v589 = vld [vmem:[%s3 + $0x18] sm:$0xff]
        %v590 = vld [vmem:[%s3 + $0x20] sm:$0xff]
        %v591 = vld [vmem:[%s3 + $0x28] sm:$0xff]
        %v592 = vld [vmem:[%s3 + $0x30] sm:$0xff]
        %v593 = vld [vmem:[%s3 + $0x38] sm:$0xff]
        %v594 = vld [vmem:[%s3 + $0x40] sm:$0xff]
        %v595 = vld [vmem:[%s3 + $0x48] sm:$0xff]
        %v596 = vld [vmem:[%s3 + $0x50] sm:$0xff]
        %v597 = vld [vmem:[%s3 + $0x58] sm:$0xff]
        %v598 = vld [vmem:[%s3 + $0x60] sm:$0xff]
        %v599 = vld [vmem:[%s3 + $0x68] sm:$0xff]
        %v600 = vld [vmem:[%s3 + $0x70] sm:$0xff]
        %v601 = vld [vmem:[%s3 + $0x78] sm:$0xff]
        %v602 = vld [vmem:[%s4] sm:$0x1]
        %v604 = vlaneseq
        %v605 = vshrl.u32 %v604, 7
        %v606 = vsub.s32 0, %v605
        %v607 = vrot.slane %v602, %v606
        %609 = vmatprep.subr.mxu0 0.0
        %610 = vmatpush1.msra.mxu0 %v586
        %611 = vmatprep.subr.mxu0 0.0
        %612 = vmatpush1.msra.mxu0 %v587
        %613 = vmatprep.subr.mxu0 0.0
        %614 = vmatpush1.msra.mxu0 %v588
        %615 = vmatprep.subr.mxu0 0.0
        %616 = vmatpush1.msra.mxu0 %v589
        %617 = vmatprep.subr.mxu0 0.0
        %618 = vmatpush1.msra.mxu0 %v590
        %619 = vmatprep.subr.mxu0 0.0
        %620 = vmatpush1.msra.mxu0 %v591
        %621 = vmatprep.subr.mxu0 0.0
        %622 = vmatpush1.msra.mxu0 %v592
        %623 = vmatprep.subr.mxu0 0.0
        %624 = vmatpush1.msra.mxu0 %v593
        %625 = vmatprep.subr.mxu0 0.0
        %626 = vmatpush1.msra.mxu0 %v594
        %627 = vmatprep.subr.mxu0 0.0
        %628 = vmatpush1.msra.mxu0 %v595
        %629 = vmatprep.subr.mxu0 0.0
        %630 = vmatpush1.msra.mxu0 %v596
        %631 = vmatprep.subr.mxu0 0.0
        %632 = vmatpush1.msra.mxu0 %v597
        %633 = vmatprep.subr.mxu0 0.0
        %634 = vmatpush1.msra.mxu0 %v598
        %635 = vmatprep.subr.mxu0 0.0
        %636 = vmatpush1.msra.mxu0 %v599
        %637 = vmatprep.subr.mxu0 0.0
        %638 = vmatpush1.msra.mxu0 %v600
        %639 = vmatprep.subr.mxu0 0.0
        %640 = vmatpush1.msra.mxu0 %v601
        %641 = vmatprep.subr.mxu0 0.0
        %642 = vmatpush1.msra.mxu0 0.0
        %643 = vmatprep.subr.mxu0 0.0
        %644 = vmatpush1.msra.mxu0 0.0
        %645 = vmatprep.subr.mxu0 0.0
        %646 = vmatpush1.msra.mxu0 0.0
        %647 = vmatprep.subr.mxu0 0.0
        %648 = vmatpush1.msra.mxu0 0.0
        %649 = vmatprep.subr.mxu0 0.0
        %650 = vmatpush1.msra.mxu0 0.0
        %651 = vmatprep.subr.mxu0 0.0
        %652 = vmatpush1.msra.mxu0 0.0
        %653 = vmatprep.subr.mxu0 0.0
        %654 = vmatpush1.msra.mxu0 0.0
        %655 = vmatprep.subr.mxu0 0.0
        %656 = vmatpush1.msra.mxu0 0.0
        %657 = vmatprep.subr.mxu0 0.0
        %658 = vmatpush1.msra.mxu0 0.0
        %659 = vmatprep.subr.mxu0 0.0
        %660 = vmatpush1.msra.mxu0 0.0
        %661 = vmatprep.subr.mxu0 0.0
        %662 = vmatpush1.msra.mxu0 0.0
        %663 = vmatprep.subr.mxu0 0.0
        %664 = vmatpush1.msra.mxu0 0.0
        %665 = vmatprep.subr.mxu0 0.0
        %666 = vmatpush1.msra.mxu0 0.0
        %667 = vmatprep.subr.mxu0 0.0
        %668 = vmatpush1.msra.mxu0 0.0
        %669 = vmatprep.subr.mxu0 0.0
        %670 = vmatpush1.msra.mxu0 0.0
        %671 = vmatprep.subr.mxu0 0.0
        %672 = vmatpush1.msra.mxu0 0.0
        %673 = vmatprep.mubr.f32.mxu0 0.0
        %674 = vmatmul.mubr.f32.gmra.mrb[0].mxu0 %v306
        %v675 = vpop.f32.mrb[0].mxu0
        %v676 = vadd.f32 %v607, %v675
        %v677 = vpop.f32.mrb[0].mxu0
        %678 = vmatprep.mubr.f32.mxu0 0.0
        %679 = vmatmul.mubr.f32.gmra.mrb[0].mxu0 %v307
        %v680 = vpop.f32.mrb[0].mxu0
        %v681 = vadd.f32 %v607, %v680
        %v682 = vpop.f32.mrb[0].mxu0
        %683 = vmatprep.mubr.f32.mxu0 0.0
        %684 = vmatmul.mubr.f32.gmra.mrb[0].mxu0 %v308
        %v685 = vpop.f32.mrb[0].mxu0
        %v686 = vadd.f32 %v607, %v685
        %v687 = vpop.f32.mrb[0].mxu0
        %688 = vmatprep.mubr.f32.mxu0 0.0
        %689 = vmatmul.mubr.f32.gmra.mrb[0].mxu0 %v309
        %v690 = vpop.f32.mrb[0].mxu0
        %v691 = vadd.f32 %v607, %v690
        %v692 = vpop.f32.mrb[0].mxu0
        %693 = vmatprep.mubr.f32.mxu0 0.0
        %694 = vmatmul.mubr.f32.gmra.mrb[0].mxu0 %v310
        %v695 = vpop.f32.mrb[0].mxu0
        %v696 = vadd.f32 %v607, %v695
        %v697 = vpop.f32.mrb[0].mxu0
        %698 = vmatprep.mubr.f32.mxu0 0.0
        %699 = vmatmul.mubr.f32.gmra.mrb[0].mxu0 %v311
        %v700 = vpop.f32.mrb[0].mxu0
        %v701 = vadd.f32 %v607, %v700
        %v702 = vpop.f32.mrb[0].mxu0
        %703 = vmatprep.mubr.f32.mxu0 0.0
        %704 = vmatmul.mubr.f32.gmra.mrb[0].mxu0 %v312
        %v705 = vpop.f32.mrb[0].mxu0
        %v706 = vadd.f32 %v607, %v705
        %v707 = vpop.f32.mrb[0].mxu0
        %708 = vmatprep.mubr.f32.mxu0 0.0
        %709 = vmatmul.mubr.f32.gmra.mrb[0].mxu0 %v313
        %v710 = vpop.f32.mrb[0].mxu0
        %v711 = vadd.f32 %v607, %v710
        %v712 = vpop.f32.mrb[0].mxu0
        %713 = vmatprep.mubr.f32.mxu0 0.0
        %714 = vmatmul.mubr.f32.gmra.mrb[0].mxu0 %v314
        %v715 = vpop.f32.mrb[0].mxu0
        %v716 = vadd.f32 %v607, %v715
        %v717 = vpop.f32.mrb[0].mxu0
        %718 = vmatprep.mubr.f32.mxu0 0.0
        %719 = vmatmul.mubr.f32.gmra.mrb[0].mxu0 %v315
        %v720 = vpop.f32.mrb[0].mxu0
        %v721 = vadd.f32 %v607, %v720
        %v722 = vpop.f32.mrb[0].mxu0
        %723 = vmatprep.mubr.f32.mxu0 0.0
        %724 = vmatmul.mubr.f32.gmra.mrb[0].mxu0 %v316
        %v725 = vpop.f32.mrb[0].mxu0
        %v726 = vadd.f32 %v607, %v725
        %v727 = vpop.f32.mrb[0].mxu0
        %728 = vmatprep.mubr.f32.mxu0 0.0
        %729 = vmatmul.mubr.f32.gmra.mrb[0].mxu0 %v317
        %v730 = vpop.f32.mrb[0].mxu0
        %v731 = vadd.f32 %v607, %v730
        %v732 = vpop.f32.mrb[0].mxu0
        %733 = vmatprep.mubr.f32.mxu0 0.0
        %734 = vmatmul.mubr.f32.gmra.mrb[0].mxu0 %v318
        %v735 = vpop.f32.mrb[0].mxu0
        %v736 = vadd.f32 %v607, %v735
        %v737 = vpop.f32.mrb[0].mxu0
        %738 = vmatprep.mubr.f32.mxu0 0.0
        %739 = vmatmul.mubr.f32.gmra.mrb[0].mxu0 %v319
        %v740 = vpop.f32.mrb[0].mxu0
        %v741 = vadd.f32 %v607, %v740
        %v742 = vpop.f32.mrb[0].mxu0
        %743 = vmatprep.mubr.f32.mxu0 0.0
        %744 = vmatmul.mubr.f32.gmra.mrb[0].mxu0 %v320
        %v745 = vpop.f32.mrb[0].mxu0
        %v746 = vadd.f32 %v607, %v745
        %v747 = vpop.f32.mrb[0].mxu0
        %748 = vmatprep.mubr.f32.mxu0 0.0
        %749 = vmatmul.mubr.f32.gmra.mrb[0].mxu0 %v321
        %v750 = vpop.f32.mrb[0].mxu0
        %v751 = vadd.f32 %v607, %v750
        %v752 = vpop.f32.mrb[0].mxu0
        %753 = vmatprep.mubr.f32.mxu0 0.0
        %754 = vmatmul.mubr.f32.gmra.mrb[0].mxu0 %v322
        %v755 = vpop.f32.mrb[0].mxu0
        %v756 = vadd.f32 %v607, %v755
        %v757 = vpop.f32.mrb[0].mxu0
        %758 = vmatprep.mubr.f32.mxu0 0.0
        %759 = vmatmul.mubr.f32.gmra.mrb[0].mxu0 %v323
        %v760 = vpop.f32.mrb[0].mxu0
        %v761 = vadd.f32 %v607, %v760
        %v762 = vpop.f32.mrb[0].mxu0
        %763 = vmatprep.mubr.f32.mxu0 0.0
        %764 = vmatmul.mubr.f32.gmra.mrb[0].mxu0 %v324
        %v765 = vpop.f32.mrb[0].mxu0
        %v766 = vadd.f32 %v607, %v765
        %v767 = vpop.f32.mrb[0].mxu0
        %768 = vmatprep.mubr.f32.mxu0 0.0
        %769 = vmatmul.mubr.f32.gmra.mrb[0].mxu0 %v325
        %v770 = vpop.f32.mrb[0].mxu0
        %v771 = vadd.f32 %v607, %v770
        %v772 = vpop.f32.mrb[0].mxu0
        %773 = vmatprep.mubr.f32.mxu0 0.0
        %774 = vmatmul.mubr.f32.gmra.mrb[0].mxu0 %v326
        %v775 = vpop.f32.mrb[0].mxu0
        %v776 = vadd.f32 %v607, %v775
        %v777 = vpop.f32.mrb[0].mxu0
        %778 = vmatprep.mubr.f32.mxu0 0.0
        %779 = vmatmul.mubr.f32.gmra.mrb[0].mxu0 %v327
        %v780 = vpop.f32.mrb[0].mxu0
        %v781 = vadd.f32 %v607, %v780
        %v782 = vpop.f32.mrb[0].mxu0
        %783 = vmatprep.mubr.f32.mxu0 0.0
        %784 = vmatmul.mubr.f32.gmra.mrb[0].mxu0 %v328
        %v785 = vpop.f32.mrb[0].mxu0
        %v786 = vadd.f32 %v607, %v785
        %v787 = vpop.f32.mrb[0].mxu0
        %788 = vmatprep.mubr.f32.mxu0 0.0
        %789 = vmatmul.mubr.f32.gmra.mrb[0].mxu0 %v329
        %v790 = vpop.f32.mrb[0].mxu0
        %v791 = vadd.f32 %v607, %v790
        %v792 = vpop.f32.mrb[0].mxu0
        %793 = vmatprep.mubr.f32.mxu0 0.0
        %794 = vmatmul.mubr.f32.gmra.mrb[0].mxu0 %v330
        %v795 = vpop.f32.mrb[0].mxu0
        %v796 = vadd.f32 %v607, %v795
        %v797 = vpop.f32.mrb[0].mxu0
        %798 = vmatprep.mubr.f32.mxu0 0.0
        %799 = vmatmul.mubr.f32.gmra.mrb[0].mxu0 %v331
        %v800 = vpop.f32.mrb[0].mxu0
        %v801 = vadd.f32 %v607, %v800
        %v802 = vpop.f32.mrb[0].mxu0
        %803 = vmatprep.mubr.f32.mxu0 0.0
        %804 = vmatmul.mubr.f32.gmra.mrb[0].mxu0 %v332
        %v805 = vpop.f32.mrb[0].mxu0
        %v806 = vadd.f32 %v607, %v805
        %v807 = vpop.f32.mrb[0].mxu0
        %808 = vmatprep.mubr.f32.mxu0 0.0
        %809 = vmatmul.mubr.f32.gmra.mrb[0].mxu0 %v333
        %v810 = vpop.f32.mrb[0].mxu0
        %v811 = vadd.f32 %v607, %v810
        %v812 = vpop.f32.mrb[0].mxu0
        %813 = vmatprep.mubr.f32.mxu0 0.0
        %814 = vmatmul.mubr.f32.gmra.mrb[0].mxu0 %v334
        %v815 = vpop.f32.mrb[0].mxu0
        %v816 = vadd.f32 %v607, %v815
        %v817 = vpop.f32.mrb[0].mxu0
        %818 = vmatprep.mubr.f32.mxu0 0.0
        %819 = vmatmul.mubr.f32.gmra.mrb[0].mxu0 %v335
        %v820 = vpop.f32.mrb[0].mxu0
        %v821 = vadd.f32 %v607, %v820
        %v822 = vpop.f32.mrb[0].mxu0
        %823 = vmatprep.mubr.f32.mxu0 0.0
        %824 = vmatmul.mubr.f32.gmra.mrb[0].mxu0 %v336
        %v825 = vpop.f32.mrb[0].mxu0
        %v826 = vadd.f32 %v607, %v825
        %v827 = vpop.f32.mrb[0].mxu0
        %828 = vmatprep.mubr.f32.mxu0 0.0
        %829 = vmatmul.mubr.f32.gmra.mrb[0].mxu0 %v337
        %v830 = vpop.f32.mrb[0].mxu0
        %v831 = vadd.f32 %v607, %v830
        %v832 = vpop.f32.mrb[0].mxu0
        %833 = vdwg.mxu0
        %v834 = vld [vmem:[%s5] sm:$0xff]
        %v835 = vld [vmem:[%s5 + $0x8] sm:$0xff]
        %v836 = vld [vmem:[%s5 + $0x10] sm:$0xff]
        %v837 = vld [vmem:[%s5 + $0x18] sm:$0xff]
        %v838 = vld [vmem:[%s5 + $0x20] sm:$0xff]
        %v839 = vld [vmem:[%s5 + $0x28] sm:$0xff]
        %v840 = vld [vmem:[%s5 + $0x30] sm:$0xff]
        %v841 = vld [vmem:[%s5 + $0x38] sm:$0xff]
        %v842 = vld [vmem:[%s5 + $0x40] sm:$0xff]
        %v843 = vld [vmem:[%s5 + $0x48] sm:$0xff]
        %v844 = vld [vmem:[%s5 + $0x50] sm:$0xff]
        %v845 = vld [vmem:[%s5 + $0x58] sm:$0xff]
        %v846 = vld [vmem:[%s5 + $0x60] sm:$0xff]
        %v847 = vld [vmem:[%s5 + $0x68] sm:$0xff]
        %v848 = vld [vmem:[%s5 + $0x70] sm:$0xff]
        %v849 = vld [vmem:[%s5 + $0x78] sm:$0xff]
        %v850 = vld [vmem:[%s6] sm:$0x1]
        %v852 = vlaneseq
        %v853 = vshrl.u32 %v852, 7
        %v854 = vsub.s32 0, %v853
        %v855 = vrot.slane %v850, %v854
        %857 = vmatprep.subr.mxu0 0.0
        %858 = vmatpush1.msra.mxu0 %v834
        %859 = vmatprep.subr.mxu0 0.0
        %860 = vmatpush1.msra.mxu0 %v835
        %861 = vmatprep.subr.mxu0 0.0
        %862 = vmatpush1.msra.mxu0 %v836
        %863 = vmatprep.subr.mxu0 0.0
        %864 = vmatpush1.msra.mxu0 %v837
        %865 = vmatprep.subr.mxu0 0.0
        %866 = vmatpush1.msra.mxu0 %v838
        %867 = vmatprep.subr.mxu0 0.0
        %868 = vmatpush1.msra.mxu0 %v839
        %869 = vmatprep.subr.mxu0 0.0
        %870 = vmatpush1.msra.mxu0 %v840
        %871 = vmatprep.subr.mxu0 0.0
        %872 = vmatpush1.msra.mxu0 %v841
        %873 = vmatprep.subr.mxu0 0.0
        %874 = vmatpush1.msra.mxu0 %v842
        %875 = vmatprep.subr.mxu0 0.0
        %876 = vmatpush1.msra.mxu0 %v843
        %877 = vmatprep.subr.mxu0 0.0
        %878 = vmatpush1.msra.mxu0 %v844
        %879 = vmatprep.subr.mxu0 0.0
        %880 = vmatpush1.msra.mxu0 %v845
        %881 = vmatprep.subr.mxu0 0.0
        %882 = vmatpush1.msra.mxu0 %v846
        %883 = vmatprep.subr.mxu0 0.0
        %884 = vmatpush1.msra.mxu0 %v847
        %885 = vmatprep.subr.mxu0 0.0
        %886 = vmatpush1.msra.mxu0 %v848
        %887 = vmatprep.subr.mxu0 0.0
        %888 = vmatpush1.msra.mxu0 %v849
        %889 = vmatprep.subr.mxu0 0.0
        %890 = vmatpush1.msra.mxu0 0.0
        %891 = vmatprep.subr.mxu0 0.0
        %892 = vmatpush1.msra.mxu0 0.0
        %893 = vmatprep.subr.mxu0 0.0
        %894 = vmatpush1.msra.mxu0 0.0
        %895 = vmatprep.subr.mxu0 0.0
        %896 = vmatpush1.msra.mxu0 0.0
        %897 = vmatprep.subr.mxu0 0.0
        %898 = vmatpush1.msra.mxu0 0.0
        %899 = vmatprep.subr.mxu0 0.0
        %900 = vmatpush1.msra.mxu0 0.0
        %901 = vmatprep.subr.mxu0 0.0
        %902 = vmatpush1.msra.mxu0 0.0
        %903 = vmatprep.subr.mxu0 0.0
        %904 = vmatpush1.msra.mxu0 0.0
        %905 = vmatprep.subr.mxu0 0.0
        %906 = vmatpush1.msra.mxu0 0.0
        %907 = vmatprep.subr.mxu0 0.0
        %908 = vmatpush1.msra.mxu0 0.0
        %909 = vmatprep.subr.mxu0 0.0
        %910 = vmatpush1.msra.mxu0 0.0
        %911 = vmatprep.subr.mxu0 0.0
        %912 = vmatpush1.msra.mxu0 0.0
        %913 = vmatprep.subr.mxu0 0.0
        %914 = vmatpush1.msra.mxu0 0.0
        %915 = vmatprep.subr.mxu0 0.0
        %916 = vmatpush1.msra.mxu0 0.0
        %917 = vmatprep.subr.mxu0 0.0
        %918 = vmatpush1.msra.mxu0 0.0
        %919 = vmatprep.subr.mxu0 0.0
        %920 = vmatpush1.msra.mxu0 0.0
        %921 = vmatprep.mubr.f32.mxu0 0.0
        %922 = vmatmul.mubr.f32.gmra.mrb[0].mxu0 %v306
        %v923 = vpop.f32.mrb[0].mxu0
        %v924 = vadd.f32 %v855, %v923
        %v925 = vpop.f32.mrb[0].mxu0
        %926 = vmatprep.mubr.f32.mxu0 0.0
        %927 = vmatmul.mubr.f32.gmra.mrb[0].mxu0 %v307
        %v928 = vpop.f32.mrb[0].mxu0
        %v929 = vadd.f32 %v855, %v928
        %v930 = vpop.f32.mrb[0].mxu0
        %931 = vmatprep.mubr.f32.mxu0 0.0
        %932 = vmatmul.mubr.f32.gmra.mrb[0].mxu0 %v308
        %v933 = vpop.f32.mrb[0].mxu0
        %v934 = vadd.f32 %v855, %v933
        %v935 = vpop.f32.mrb[0].mxu0
        %936 = vmatprep.mubr.f32.mxu0 0.0
        %937 = vmatmul.mubr.f32.gmra.mrb[0].mxu0 %v309
        %v938 = vpop.f32.mrb[0].mxu0
        %v939 = vadd.f32 %v855, %v938
        %v940 = vpop.f32.mrb[0].mxu0
        %941 = vmatprep.mubr.f32.mxu0 0.0
        %942 = vmatmul.mubr.f32.gmra.mrb[0].mxu0 %v310
        %v943 = vpop.f32.mrb[0].mxu0
        %v944 = vadd.f32 %v855, %v943
        %v945 = vpop.f32.mrb[0].mxu0
        %946 = vmatprep.mubr.f32.mxu0 0.0
        %947 = vmatmul.mubr.f32.gmra.mrb[0].mxu0 %v311
        %v948 = vpop.f32.mrb[0].mxu0
        %v949 = vadd.f32 %v855, %v948
        %v950 = vpop.f32.mrb[0].mxu0
        %951 = vmatprep.mubr.f32.mxu0 0.0
        %952 = vmatmul.mubr.f32.gmra.mrb[0].mxu0 %v312
        %v953 = vpop.f32.mrb[0].mxu0
        %v954 = vadd.f32 %v855, %v953
        %v955 = vpop.f32.mrb[0].mxu0
        %956 = vmatprep.mubr.f32.mxu0 0.0
        %957 = vmatmul.mubr.f32.gmra.mrb[0].mxu0 %v313
        %v958 = vpop.f32.mrb[0].mxu0
        %v959 = vadd.f32 %v855, %v958
        %v960 = vpop.f32.mrb[0].mxu0
        %961 = vmatprep.mubr.f32.mxu0 0.0
        %962 = vmatmul.mubr.f32.gmra.mrb[0].mxu0 %v314
        %v963 = vpop.f32.mrb[0].mxu0
        %v964 = vadd.f32 %v855, %v963
        %v965 = vpop.f32.mrb[0].mxu0
        %966 = vmatprep.mubr.f32.mxu0 0.0
        %967 = vmatmul.mubr.f32.gmra.mrb[0].mxu0 %v315
        %v968 = vpop.f32.mrb[0].mxu0
        %v969 = vadd.f32 %v855, %v968
        %v970 = vpop.f32.mrb[0].mxu0
        %971 = vmatprep.mubr.f32.mxu0 0.0
        %972 = vmatmul.mubr.f32.gmra.mrb[0].mxu0 %v316
        %v973 = vpop.f32.mrb[0].mxu0
        %v974 = vadd.f32 %v855, %v973
        %v975 = vpop.f32.mrb[0].mxu0
        %976 = vmatprep.mubr.f32.mxu0 0.0
        %977 = vmatmul.mubr.f32.gmra.mrb[0].mxu0 %v317
        %v978 = vpop.f32.mrb[0].mxu0
        %v979 = vadd.f32 %v855, %v978
        %v980 = vpop.f32.mrb[0].mxu0
        %981 = vmatprep.mubr.f32.mxu0 0.0
        %982 = vmatmul.mubr.f32.gmra.mrb[0].mxu0 %v318
        %v983 = vpop.f32.mrb[0].mxu0
        %v984 = vadd.f32 %v855, %v983
        %v985 = vpop.f32.mrb[0].mxu0
        %986 = vmatprep.mubr.f32.mxu0 0.0
        %987 = vmatmul.mubr.f32.gmra.mrb[0].mxu0 %v319
        %v988 = vpop.f32.mrb[0].mxu0
        %v989 = vadd.f32 %v855, %v988
        %v990 = vpop.f32.mrb[0].mxu0
        %991 = vmatprep.mubr.f32.mxu0 0.0
        %992 = vmatmul.mubr.f32.gmra.mrb[0].mxu0 %v320
        %v993 = vpop.f32.mrb[0].mxu0
        %v994 = vadd.f32 %v855, %v993
        %v995 = vpop.f32.mrb[0].mxu0
        %996 = vmatprep.mubr.f32.mxu0 0.0
        %997 = vmatmul.mubr.f32.gmra.mrb[0].mxu0 %v321
        %v998 = vpop.f32.mrb[0].mxu0
        %v999 = vadd.f32 %v855, %v998
        %v1000 = vpop.f32.mrb[0].mxu0
        %1001 = vmatprep.mubr.f32.mxu0 0.0
        %1002 = vmatmul.mubr.f32.gmra.mrb[0].mxu0 %v322
        %v1003 = vpop.f32.mrb[0].mxu0
        %v1004 = vadd.f32 %v855, %v1003
        %v1005 = vpop.f32.mrb[0].mxu0
        %1006 = vmatprep.mubr.f32.mxu0 0.0
        %1007 = vmatmul.mubr.f32.gmra.mrb[0].mxu0 %v323
        %v1008 = vpop.f32.mrb[0].mxu0
        %v1009 = vadd.f32 %v855, %v1008
        %v1010 = vpop.f32.mrb[0].mxu0
        %1011 = vmatprep.mubr.f32.mxu0 0.0
        %1012 = vmatmul.mubr.f32.gmra.mrb[0].mxu0 %v324
        %v1013 = vpop.f32.mrb[0].mxu0
        %v1014 = vadd.f32 %v855, %v1013
        %v1015 = vpop.f32.mrb[0].mxu0
        %1016 = vmatprep.mubr.f32.mxu0 0.0
        %1017 = vmatmul.mubr.f32.gmra.mrb[0].mxu0 %v325
        %v1018 = vpop.f32.mrb[0].mxu0
        %v1019 = vadd.f32 %v855, %v1018
        %v1020 = vpop.f32.mrb[0].mxu0
        %1021 = vmatprep.mubr.f32.mxu0 0.0
        %1022 = vmatmul.mubr.f32.gmra.mrb[0].mxu0 %v326
        %v1023 = vpop.f32.mrb[0].mxu0
        %v1024 = vadd.f32 %v855, %v1023
        %v1025 = vpop.f32.mrb[0].mxu0
        %1026 = vmatprep.mubr.f32.mxu0 0.0
        %1027 = vmatmul.mubr.f32.gmra.mrb[0].mxu0 %v327
        %v1028 = vpop.f32.mrb[0].mxu0
        %v1029 = vadd.f32 %v855, %v1028
        %v1030 = vpop.f32.mrb[0].mxu0
        %1031 = vmatprep.mubr.f32.mxu0 0.0
        %1032 = vmatmul.mubr.f32.gmra.mrb[0].mxu0 %v328
        %v1033 = vpop.f32.mrb[0].mxu0
        %v1034 = vadd.f32 %v855, %v1033
        %v1035 = vpop.f32.mrb[0].mxu0
        %1036 = vmatprep.mubr.f32.mxu0 0.0
        %1037 = vmatmul.mubr.f32.gmra.mrb[0].mxu0 %v329
        %v1038 = vpop.f32.mrb[0].mxu0
        %v1039 = vadd.f32 %v855, %v1038
        %v1040 = vpop.f32.mrb[0].mxu0
        %1041 = vmatprep.mubr.f32.mxu0 0.0
        %1042 = vmatmul.mubr.f32.gmra.mrb[0].mxu0 %v330
        %v1043 = vpop.f32.mrb[0].mxu0
        %v1044 = vadd.f32 %v855, %v1043
        %v1045 = vpop.f32.mrb[0].mxu0
        %1046 = vmatprep.mubr.f32.mxu0 0.0
        %1047 = vmatmul.mubr.f32.gmra.mrb[0].mxu0 %v331
        %v1048 = vpop.f32.mrb[0].mxu0
        %v1049 = vadd.f32 %v855, %v1048
        %v1050 = vpop.f32.mrb[0].mxu0
        %1051 = vmatprep.mubr.f32.mxu0 0.0
        %1052 = vmatmul.mubr.f32.gmra.mrb[0].mxu0 %v332
        %v1053 = vpop.f32.mrb[0].mxu0
        %v1054 = vadd.f32 %v855, %v1053
        %v1055 = vpop.f32.mrb[0].mxu0
        %1056 = vmatprep.mubr.f32.mxu0 0.0
        %1057 = vmatmul.mubr.f32.gmra.mrb[0].mxu0 %v333
        %v1058 = vpop.f32.mrb[0].mxu0
        %v1059 = vadd.f32 %v855, %v1058
        %v1060 = vpop.f32.mrb[0].mxu0
        %1061 = vmatprep.mubr.f32.mxu0 0.0
        %1062 = vmatmul.mubr.f32.gmra.mrb[0].mxu0 %v334
        %v1063 = vpop.f32.mrb[0].mxu0
        %v1064 = vadd.f32 %v855, %v1063
        %v1065 = vpop.f32.mrb[0].mxu0
        %1066 = vmatprep.mubr.f32.mxu0 0.0
        %1067 = vmatmul.mubr.f32.gmra.mrb[0].mxu0 %v335
        %v1068 = vpop.f32.mrb[0].mxu0
        %v1069 = vadd.f32 %v855, %v1068
        %v1070 = vpop.f32.mrb[0].mxu0
        %1071 = vmatprep.mubr.f32.mxu0 0.0
        %1072 = vmatmul.mubr.f32.gmra.mrb[0].mxu0 %v336
        %v1073 = vpop.f32.mrb[0].mxu0
        %v1074 = vadd.f32 %v855, %v1073
        %v1075 = vpop.f32.mrb[0].mxu0
        %1076 = vmatprep.mubr.f32.mxu0 0.0
        %1077 = vmatmul.mubr.f32.gmra.mrb[0].mxu0 %v337
        %v1078 = vpop.f32.mrb[0].mxu0
        %v1079 = vadd.f32 %v855, %v1078
        %v1080 = vpop.f32.mrb[0].mxu0
        %1081 = vdwg.mxu0
        %v1082 = vmul.f32 %v428, %v428
        %v1083 = vmul.f32 %v433, %v433
        %v1084 = vmul.f32 %v438, %v438
        %v1085 = vmul.f32 %v443, %v443
        %v1086 = vmul.f32 %v448, %v448
        %v1087 = vmul.f32 %v453, %v453
        %v1088 = vmul.f32 %v458, %v458
        %v1089 = vmul.f32 %v463, %v463
        %v1090 = vmul.f32 %v468, %v468
        %v1091 = vmul.f32 %v473, %v473
        %v1092 = vmul.f32 %v478, %v478
        %v1093 = vmul.f32 %v483, %v483
        %v1094 = vmul.f32 %v488, %v488
        %v1095 = vmul.f32 %v493, %v493
        %v1096 = vmul.f32 %v498, %v498
        %v1097 = vmul.f32 %v503, %v503
        %v1098 = vmul.f32 %v508, %v508
        %v1099 = vmul.f32 %v513, %v513
        %v1100 = vmul.f32 %v518, %v518
        %v1101 = vmul.f32 %v523, %v523
        %v1102 = vmul.f32 %v528, %v528
        %v1103 = vmul.f32 %v533, %v533
        %v1104 = vmul.f32 %v538, %v538
        %v1105 = vmul.f32 %v543, %v543
        %v1106 = vmul.f32 %v548, %v548
        %v1107 = vmul.f32 %v553, %v553
        %v1108 = vmul.f32 %v558, %v558
        %v1109 = vmul.f32 %v563, %v563
        %v1110 = vmul.f32 %v568, %v568
        %v1111 = vmul.f32 %v573, %v573
        %v1112 = vmul.f32 %v578, %v578
        %v1113 = vmul.f32 %v583, %v583
        %vm1114 = vcmask 130048
        %v1115 = vsel %vm1114, %v1082, 0.0
        %1116 = vadd.xlane.f32.xlu0 %v1115
        %v1117 = vpop.xlane.xlu0 %1116
        %v1118 = vsel %vm1114, %v1083, 0.0
        %1119 = vadd.xlane.f32.xlu0 %v1118
        %v1120 = vpop.xlane.xlu0 %1119
        %v1121 = vsel %vm1114, %v1084, 0.0
        %1122 = vadd.xlane.f32.xlu0 %v1121
        %v1123 = vpop.xlane.xlu0 %1122
        %v1124 = vsel %vm1114, %v1085, 0.0
        %1125 = vadd.xlane.f32.xlu0 %v1124
        %v1126 = vpop.xlane.xlu0 %1125
        %v1127 = vsel %vm1114, %v1086, 0.0
        %1128 = vadd.xlane.f32.xlu0 %v1127
        %v1129 = vpop.xlane.xlu0 %1128
        %v1130 = vsel %vm1114, %v1087, 0.0
        %1131 = vadd.xlane.f32.xlu0 %v1130
        %v1132 = vpop.xlane.xlu0 %1131
        %v1133 = vsel %vm1114, %v1088, 0.0
        %1134 = vadd.xlane.f32.xlu0 %v1133
        %v1135 = vpop.xlane.xlu0 %1134
        %v1136 = vsel %vm1114, %v1089, 0.0
        %1137 = vadd.xlane.f32.xlu0 %v1136
        %v1138 = vpop.xlane.xlu0 %1137
        %v1139 = vsel %vm1114, %v1090, 0.0
        %1140 = vadd.xlane.f32.xlu0 %v1139
        %v1141 = vpop.xlane.xlu0 %1140
        %v1142 = vsel %vm1114, %v1091, 0.0
        %1143 = vadd.xlane.f32.xlu0 %v1142
        %v1144 = vpop.xlane.xlu0 %1143
        %v1145 = vsel %vm1114, %v1092, 0.0
        %1146 = vadd.xlane.f32.xlu0 %v1145
        %v1147 = vpop.xlane.xlu0 %1146
        %v1148 = vsel %vm1114, %v1093, 0.0
        %1149 = vadd.xlane.f32.xlu0 %v1148
        %v1150 = vpop.xlane.xlu0 %1149
        %v1151 = vsel %vm1114, %v1094, 0.0
        %1152 = vadd.xlane.f32.xlu0 %v1151
        %v1153 = vpop.xlane.xlu0 %1152
        %v1154 = vsel %vm1114, %v1095, 0.0
        %1155 = vadd.xlane.f32.xlu0 %v1154
        %v1156 = vpop.xlane.xlu0 %1155
        %v1157 = vsel %vm1114, %v1096, 0.0
        %1158 = vadd.xlane.f32.xlu0 %v1157
        %v1159 = vpop.xlane.xlu0 %1158
        %v1160 = vsel %vm1114, %v1097, 0.0
        %1161 = vadd.xlane.f32.xlu0 %v1160
        %v1162 = vpop.xlane.xlu0 %1161
        %v1163 = vsel %vm1114, %v1098, 0.0
        %1164 = vadd.xlane.f32.xlu0 %v1163
        %v1165 = vpop.xlane.xlu0 %1164
        %v1166 = vsel %vm1114, %v1099, 0.0
        %1167 = vadd.xlane.f32.xlu0 %v1166
        %v1168 = vpop.xlane.xlu0 %1167
        %v1169 = vsel %vm1114, %v1100, 0.0
        %1170 = vadd.xlane.f32.xlu0 %v1169
        %v1171 = vpop.xlane.xlu0 %1170
        %v1172 = vsel %vm1114, %v1101, 0.0
        %1173 = vadd.xlane.f32.xlu0 %v1172
        %v1174 = vpop.xlane.xlu0 %1173
        %v1175 = vsel %vm1114, %v1102, 0.0
        %1176 = vadd.xlane.f32.xlu0 %v1175
        %v1177 = vpop.xlane.xlu0 %1176
        %v1178 = vsel %vm1114, %v1103, 0.0
        %1179 = vadd.xlane.f32.xlu0 %v1178
        %v1180 = vpop.xlane.xlu0 %1179
        %v1181 = vsel %vm1114, %v1104, 0.0
        %1182 = vadd.xlane.f32.xlu0 %v1181
        %v1183 = vpop.xlane.xlu0 %1182
        %v1184 = vsel %vm1114, %v1105, 0.0
        %1185 = vadd.xlane.f32.xlu0 %v1184
        %v1186 = vpop.xlane.xlu0 %1185
        %v1187 = vsel %vm1114, %v1106, 0.0
        %1188 = vadd.xlane.f32.xlu0 %v1187
        %v1189 = vpop.xlane.xlu0 %1188
        %v1190 = vsel %vm1114, %v1107, 0.0
        %1191 = vadd.xlane.f32.xlu0 %v1190
        %v1192 = vpop.xlane.xlu0 %1191
        %v1193 = vsel %vm1114, %v1108, 0.0
        %1194 = vadd.xlane.f32.xlu0 %v1193
        %v1195 = vpop.xlane.xlu0 %1194
        %v1196 = vsel %vm1114, %v1109, 0.0
        %1197 = vadd.xlane.f32.xlu0 %v1196
        %v1198 = vpop.xlane.xlu0 %1197
        %v1199 = vsel %vm1114, %v1110, 0.0
        %1200 = vadd.xlane.f32.xlu0 %v1199
        %v1201 = vpop.xlane.xlu0 %1200
        %v1202 = vsel %vm1114, %v1111, 0.0
        %1203 = vadd.xlane.f32.xlu0 %v1202
        %v1204 = vpop.xlane.xlu0 %1203
        %v1205 = vsel %vm1114, %v1112, 0.0
        %1206 = vadd.xlane.f32.xlu0 %v1205
        %v1207 = vpop.xlane.xlu0 %1206
        %v1208 = vsel %vm1114, %v1113, 0.0
        %1209 = vadd.xlane.f32.xlu0 %v1208
        %v1210 = vpop.xlane.xlu0 %1209
        %v1211 = vrsqrt.pop %v1117
        %v1212 = vrsqrt.pop %v1120
        %v1213 = vrsqrt.pop %v1123
        %v1214 = vrsqrt.pop %v1126
        %v1215 = vrsqrt.pop %v1129
        %v1216 = vrsqrt.pop %v1132
        %v1217 = vrsqrt.pop %v1135
        %v1218 = vrsqrt.pop %v1138
        %v1219 = vrsqrt.pop %v1141
        %v1220 = vrsqrt.pop %v1144
        %v1221 = vrsqrt.pop %v1147
        %v1222 = vrsqrt.pop %v1150
        %v1223 = vrsqrt.pop %v1153
        %v1224 = vrsqrt.pop %v1156
        %v1225 = vrsqrt.pop %v1159
        %v1226 = vrsqrt.pop %v1162
        %v1227 = vrsqrt.pop %v1165
        %v1228 = vrsqrt.pop %v1168
        %v1229 = vrsqrt.pop %v1171
        %v1230 = vrsqrt.pop %v1174
        %v1231 = vrsqrt.pop %v1177
        %v1232 = vrsqrt.pop %v1180
        %v1233 = vrsqrt.pop %v1183
        %v1234 = vrsqrt.pop %v1186
        %v1235 = vrsqrt.pop %v1189
        %v1236 = vrsqrt.pop %v1192
        %v1237 = vrsqrt.pop %v1195
        %v1238 = vrsqrt.pop %v1198
        %v1239 = vrsqrt.pop %v1201
        %v1240 = vrsqrt.pop %v1204
        %v1241 = vrsqrt.pop %v1207
        %v1242 = vrsqrt.pop %v1210
        %v1243 = vmul.f32 %v428, %v1211
        %v1244 = vmul.f32 %v433, %v1212
        %v1245 = vmul.f32 %v438, %v1213
        %v1246 = vmul.f32 %v443, %v1214
        %v1247 = vmul.f32 %v448, %v1215
        %v1248 = vmul.f32 %v453, %v1216
        %v1249 = vmul.f32 %v458, %v1217
        %v1250 = vmul.f32 %v463, %v1218
        %v1251 = vmul.f32 %v468, %v1219
        %v1252 = vmul.f32 %v473, %v1220
        %v1253 = vmul.f32 %v478, %v1221
        %v1254 = vmul.f32 %v483, %v1222
        %v1255 = vmul.f32 %v488, %v1223
        %v1256 = vmul.f32 %v493, %v1224
        %v1257 = vmul.f32 %v498, %v1225
        %v1258 = vmul.f32 %v503, %v1226
        %v1259 = vmul.f32 %v508, %v1227
        %v1260 = vmul.f32 %v513, %v1228
        %v1261 = vmul.f32 %v518, %v1229
        %v1262 = vmul.f32 %v523, %v1230
        %v1263 = vmul.f32 %v528, %v1231
        %v1264 = vmul.f32 %v533, %v1232
        %v1265 = vmul.f32 %v538, %v1233
        %v1266 = vmul.f32 %v543, %v1234
        %v1267 = vmul.f32 %v548, %v1235
        %v1268 = vmul.f32 %v553, %v1236
        %v1269 = vmul.f32 %v558, %v1237
        %v1270 = vmul.f32 %v563, %v1238
        %v1271 = vmul.f32 %v568, %v1239
        %v1272 = vmul.f32 %v573, %v1240
        %v1273 = vmul.f32 %v578, %v1241
        %v1274 = vmul.f32 %v583, %v1242
        %v1275 = vmul.f32 %v676, %v676
        %v1276 = vmul.f32 %v681, %v681
        %v1277 = vmul.f32 %v686, %v686
        %v1278 = vmul.f32 %v691, %v691
        %v1279 = vmul.f32 %v696, %v696
        %v1280 = vmul.f32 %v701, %v701
        %v1281 = vmul.f32 %v706, %v706
        %v1282 = vmul.f32 %v711, %v711
        %v1283 = vmul.f32 %v716, %v716
        %v1284 = vmul.f32 %v721, %v721
        %v1285 = vmul.f32 %v726, %v726
        %v1286 = vmul.f32 %v731, %v731
        %v1287 = vmul.f32 %v736, %v736
        %v1288 = vmul.f32 %v741, %v741
        %v1289 = vmul.f32 %v746, %v746
        %v1290 = vmul.f32 %v751, %v751
        %v1291 = vmul.f32 %v756, %v756
        %v1292 = vmul.f32 %v761, %v761
        %v1293 = vmul.f32 %v766, %v766
        %v1294 = vmul.f32 %v771, %v771
        %v1295 = vmul.f32 %v776, %v776
        %v1296 = vmul.f32 %v781, %v781
        %v1297 = vmul.f32 %v786, %v786
        %v1298 = vmul.f32 %v791, %v791
        %v1299 = vmul.f32 %v796, %v796
        %v1300 = vmul.f32 %v801, %v801
        %v1301 = vmul.f32 %v806, %v806
        %v1302 = vmul.f32 %v811, %v811
        %v1303 = vmul.f32 %v816, %v816
        %v1304 = vmul.f32 %v821, %v821
        %v1305 = vmul.f32 %v826, %v826
        %v1306 = vmul.f32 %v831, %v831
        %v1307 = vsel %vm1114, %v1275, 0.0
        %1308 = vadd.xlane.f32.xlu0 %v1307
        %v1309 = vpop.xlane.xlu0 %1308
        %v1310 = vsel %vm1114, %v1276, 0.0
        %1311 = vadd.xlane.f32.xlu0 %v1310
        %v1312 = vpop.xlane.xlu0 %1311
        %v1313 = vsel %vm1114, %v1277, 0.0
        %1314 = vadd.xlane.f32.xlu0 %v1313
        %v1315 = vpop.xlane.xlu0 %1314
        %v1316 = vsel %vm1114, %v1278, 0.0
        %1317 = vadd.xlane.f32.xlu0 %v1316
        %v1318 = vpop.xlane.xlu0 %1317
        %v1319 = vsel %vm1114, %v1279, 0.0
        %1320 = vadd.xlane.f32.xlu0 %v1319
        %v1321 = vpop.xlane.xlu0 %1320
        %v1322 = vsel %vm1114, %v1280, 0.0
        %1323 = vadd.xlane.f32.xlu0 %v1322
        %v1324 = vpop.xlane.xlu0 %1323
        %v1325 = vsel %vm1114, %v1281, 0.0
        %1326 = vadd.xlane.f32.xlu0 %v1325
        %v1327 = vpop.xlane.xlu0 %1326
        %v1328 = vsel %vm1114, %v1282, 0.0
        %1329 = vadd.xlane.f32.xlu0 %v1328
        %v1330 = vpop.xlane.xlu0 %1329
        %v1331 = vsel %vm1114, %v1283, 0.0
        %1332 = vadd.xlane.f32.xlu0 %v1331
        %v1333 = vpop.xlane.xlu0 %1332
        %v1334 = vsel %vm1114, %v1284, 0.0
        %1335 = vadd.xlane.f32.xlu0 %v1334
        %v1336 = vpop.xlane.xlu0 %1335
        %v1337 = vsel %vm1114, %v1285, 0.0
        %1338 = vadd.xlane.f32.xlu0 %v1337
        %v1339 = vpop.xlane.xlu0 %1338
        %v1340 = vsel %vm1114, %v1286, 0.0
        %1341 = vadd.xlane.f32.xlu0 %v1340
        %v1342 = vpop.xlane.xlu0 %1341
        %v1343 = vsel %vm1114, %v1287, 0.0
        %1344 = vadd.xlane.f32.xlu0 %v1343
        %v1345 = vpop.xlane.xlu0 %1344
        %v1346 = vsel %vm1114, %v1288, 0.0
        %1347 = vadd.xlane.f32.xlu0 %v1346
        %v1348 = vpop.xlane.xlu0 %1347
        %v1349 = vsel %vm1114, %v1289, 0.0
        %1350 = vadd.xlane.f32.xlu0 %v1349
        %v1351 = vpop.xlane.xlu0 %1350
        %v1352 = vsel %vm1114, %v1290, 0.0
        %1353 = vadd.xlane.f32.xlu0 %v1352
        %v1354 = vpop.xlane.xlu0 %1353
        %v1355 = vsel %vm1114, %v1291, 0.0
        %1356 = vadd.xlane.f32.xlu0 %v1355
        %v1357 = vpop.xlane.xlu0 %1356
        %v1358 = vsel %vm1114, %v1292, 0.0
        %1359 = vadd.xlane.f32.xlu0 %v1358
        %v1360 = vpop.xlane.xlu0 %1359
        %v1361 = vsel %vm1114, %v1293, 0.0
        %1362 = vadd.xlane.f32.xlu0 %v1361
        %v1363 = vpop.xlane.xlu0 %1362
        %v1364 = vsel %vm1114, %v1294, 0.0
        %1365 = vadd.xlane.f32.xlu0 %v1364
        %v1366 = vpop.xlane.xlu0 %1365
        %v1367 = vsel %vm1114, %v1295, 0.0
        %1368 = vadd.xlane.f32.xlu0 %v1367
        %v1369 = vpop.xlane.xlu0 %1368
        %v1370 = vsel %vm1114, %v1296, 0.0
        %1371 = vadd.xlane.f32.xlu0 %v1370
        %v1372 = vpop.xlane.xlu0 %1371
        %v1373 = vsel %vm1114, %v1297, 0.0
        %1374 = vadd.xlane.f32.xlu0 %v1373
        %v1375 = vpop.xlane.xlu0 %1374
        %v1376 = vsel %vm1114, %v1298, 0.0
        %1377 = vadd.xlane.f32.xlu0 %v1376
        %v1378 = vpop.xlane.xlu0 %1377
        %v1379 = vsel %vm1114, %v1299, 0.0
        %1380 = vadd.xlane.f32.xlu0 %v1379
        %v1381 = vpop.xlane.xlu0 %1380
        %v1382 = vsel %vm1114, %v1300, 0.0
        %1383 = vadd.xlane.f32.xlu0 %v1382
        %v1384 = vpop.xlane.xlu0 %1383
        %v1385 = vsel %vm1114, %v1301, 0.0
        %1386 = vadd.xlane.f32.xlu0 %v1385
        %v1387 = vpop.xlane.xlu0 %1386
        %v1388 = vsel %vm1114, %v1302, 0.0
        %1389 = vadd.xlane.f32.xlu0 %v1388
        %v1390 = vpop.xlane.xlu0 %1389
        %v1391 = vsel %vm1114, %v1303, 0.0
        %1392 = vadd.xlane.f32.xlu0 %v1391
        %v1393 = vpop.xlane.xlu0 %1392
        %v1394 = vsel %vm1114, %v1304, 0.0
        %1395 = vadd.xlane.f32.xlu0 %v1394
        %v1396 = vpop.xlane.xlu0 %1395
        %v1397 = vsel %vm1114, %v1305, 0.0
        %1398 = vadd.xlane.f32.xlu0 %v1397
        %v1399 = vpop.xlane.xlu0 %1398
        %v1400 = vsel %vm1114, %v1306, 0.0
        %1401 = vadd.xlane.f32.xlu0 %v1400
        %v1402 = vpop.xlane.xlu0 %1401
        %v1403 = vrsqrt.pop %v1309
        %v1404 = vrsqrt.pop %v1312
        %v1405 = vrsqrt.pop %v1315
        %v1406 = vrsqrt.pop %v1318
        %v1407 = vrsqrt.pop %v1321
        %v1408 = vrsqrt.pop %v1324
        %v1409 = vrsqrt.pop %v1327
        %v1410 = vrsqrt.pop %v1330
        %v1411 = vrsqrt.pop %v1333
        %v1412 = vrsqrt.pop %v1336
        %v1413 = vrsqrt.pop %v1339
        %v1414 = vrsqrt.pop %v1342
        %v1415 = vrsqrt.pop %v1345
        %v1416 = vrsqrt.pop %v1348
        %v1417 = vrsqrt.pop %v1351
        %v1418 = vrsqrt.pop %v1354
        %v1419 = vrsqrt.pop %v1357
        %v1420 = vrsqrt.pop %v1360
        %v1421 = vrsqrt.pop %v1363
        %v1422 = vrsqrt.pop %v1366
        %v1423 = vrsqrt.pop %v1369
        %v1424 = vrsqrt.pop %v1372
        %v1425 = vrsqrt.pop %v1375
        %v1426 = vrsqrt.pop %v1378
        %v1427 = vrsqrt.pop %v1381
        %v1428 = vrsqrt.pop %v1384
        %v1429 = vrsqrt.pop %v1387
        %v1430 = vrsqrt.pop %v1390
        %v1431 = vrsqrt.pop %v1393
        %v1432 = vrsqrt.pop %v1396
        %v1433 = vrsqrt.pop %v1399
        %v1434 = vrsqrt.pop %v1402
        %v1435 = vmul.f32 %v676, %v1403
        %v1436 = vmul.f32 %v681, %v1404
        %v1437 = vmul.f32 %v686, %v1405
        %v1438 = vmul.f32 %v691, %v1406
        %v1439 = vmul.f32 %v696, %v1407
        %v1440 = vmul.f32 %v701, %v1408
        %v1441 = vmul.f32 %v706, %v1409
        %v1442 = vmul.f32 %v711, %v1410
        %v1443 = vmul.f32 %v716, %v1411
        %v1444 = vmul.f32 %v721, %v1412
        %v1445 = vmul.f32 %v726, %v1413
        %v1446 = vmul.f32 %v731, %v1414
        %v1447 = vmul.f32 %v736, %v1415
        %v1448 = vmul.f32 %v741, %v1416
        %v1449 = vmul.f32 %v746, %v1417
        %v1450 = vmul.f32 %v751, %v1418
        %v1451 = vmul.f32 %v756, %v1419
        %v1452 = vmul.f32 %v761, %v1420
        %v1453 = vmul.f32 %v766, %v1421
        %v1454 = vmul.f32 %v771, %v1422
        %v1455 = vmul.f32 %v776, %v1423
        %v1456 = vmul.f32 %v781, %v1424
        %v1457 = vmul.f32 %v786, %v1425
        %v1458 = vmul.f32 %v791, %v1426
        %v1459 = vmul.f32 %v796, %v1427
        %v1460 = vmul.f32 %v801, %v1428
        %v1461 = vmul.f32 %v806, %v1429
        %v1462 = vmul.f32 %v811, %v1430
        %v1463 = vmul.f32 %v816, %v1431
        %v1464 = vmul.f32 %v821, %v1432
        %v1465 = vmul.f32 %v826, %v1433
        %v1466 = vmul.f32 %v831, %v1434
        %v1467 = vsel %vm1114, %v1435, 0.0
        %v1468 = vsel %vm1114, %v1436, 0.0
        %v1469 = vadd.f32 %v1467, %v1468
        %v1470 = vsel %vm1114, %v1437, 0.0
        %v1471 = vadd.f32 %v1469, %v1470
        %v1472 = vsel %vm1114, %v1438, 0.0
        %v1473 = vadd.f32 %v1471, %v1472
        %v1474 = vsel %vm1114, %v1439, 0.0
        %v1475 = vadd.f32 %v1473, %v1474
        %v1476 = vsel %vm1114, %v1440, 0.0
        %v1477 = vadd.f32 %v1475, %v1476
        %v1478 = vsel %vm1114, %v1441, 0.0
        %v1479 = vadd.f32 %v1477, %v1478
        %v1480 = vsel %vm1114, %v1442, 0.0
        %v1481 = vadd.f32 %v1479, %v1480
        %v1482 = vsel %vm1114, %v1443, 0.0
        %v1483 = vadd.f32 %v1481, %v1482
        %v1484 = vsel %vm1114, %v1444, 0.0
        %v1485 = vadd.f32 %v1483, %v1484
        %v1486 = vsel %vm1114, %v1445, 0.0
        %v1487 = vadd.f32 %v1485, %v1486
        %v1488 = vsel %vm1114, %v1446, 0.0
        %v1489 = vadd.f32 %v1487, %v1488
        %v1490 = vsel %vm1114, %v1447, 0.0
        %v1491 = vadd.f32 %v1489, %v1490
        %v1492 = vsel %vm1114, %v1448, 0.0
        %v1493 = vadd.f32 %v1491, %v1492
        %v1494 = vsel %vm1114, %v1449, 0.0
        %v1495 = vadd.f32 %v1493, %v1494
        %v1496 = vsel %vm1114, %v1450, 0.0
        %v1497 = vadd.f32 %v1495, %v1496
        %v1498 = vsel %vm1114, %v1451, 0.0
        %v1499 = vadd.f32 %v1497, %v1498
        %v1500 = vsel %vm1114, %v1452, 0.0
        %v1501 = vadd.f32 %v1499, %v1500
        %v1502 = vsel %vm1114, %v1453, 0.0
        %v1503 = vadd.f32 %v1501, %v1502
        %v1504 = vsel %vm1114, %v1454, 0.0
        %v1505 = vadd.f32 %v1503, %v1504
        %v1506 = vsel %vm1114, %v1455, 0.0
        %v1507 = vadd.f32 %v1505, %v1506
        %v1508 = vsel %vm1114, %v1456, 0.0
        %v1509 = vadd.f32 %v1507, %v1508
        %v1510 = vsel %vm1114, %v1457, 0.0
        %v1511 = vadd.f32 %v1509, %v1510
        %v1512 = vsel %vm1114, %v1458, 0.0
        %v1513 = vadd.f32 %v1511, %v1512
        %v1514 = vsel %vm1114, %v1459, 0.0
        %v1515 = vadd.f32 %v1513, %v1514
        %v1516 = vsel %vm1114, %v1460, 0.0
        %v1517 = vadd.f32 %v1515, %v1516
        %v1518 = vsel %vm1114, %v1461, 0.0
        %v1519 = vadd.f32 %v1517, %v1518
        %v1520 = vsel %vm1114, %v1462, 0.0
        %v1521 = vadd.f32 %v1519, %v1520
        %v1522 = vsel %vm1114, %v1463, 0.0
        %v1523 = vadd.f32 %v1521, %v1522
        %v1524 = vsel %vm1114, %v1464, 0.0
        %v1525 = vadd.f32 %v1523, %v1524
        %v1526 = vsel %vm1114, %v1465, 0.0
        %v1527 = vadd.f32 %v1525, %v1526
        %v1528 = vsel %vm1114, %v1466, 0.0
        %v1529 = vadd.f32 %v1527, %v1528
        %v1530 = vrot.slane %v1529, 4
        %v1531 = vadd.f32 %v1529, %v1530
        %v1532 = vrot.slane %v1531, 2
        %v1533 = vadd.f32 %v1531, %v1532
        %v1534 = vrot.slane %v1533, 1
        %v1535 = vadd.f32 %v1533, %v1534
        %v1536 = vadd.f32 %v1535, 1e-06
        %v1537 = vmul.f32 %v1243, %v1536
        %v1538 = vmul.f32 %v1244, %v1536
        %v1539 = vmul.f32 %v1245, %v1536
        %v1540 = vmul.f32 %v1246, %v1536
        %v1541 = vmul.f32 %v1247, %v1536
        %v1542 = vmul.f32 %v1248, %v1536
        %v1543 = vmul.f32 %v1249, %v1536
        %v1544 = vmul.f32 %v1250, %v1536
        %v1545 = vmul.f32 %v1251, %v1536
        %v1546 = vmul.f32 %v1252, %v1536
        %v1547 = vmul.f32 %v1253, %v1536
        %v1548 = vmul.f32 %v1254, %v1536
        %v1549 = vmul.f32 %v1255, %v1536
        %v1550 = vmul.f32 %v1256, %v1536
        %v1551 = vmul.f32 %v1257, %v1536
        %v1552 = vmul.f32 %v1258, %v1536
        %v1553 = vmul.f32 %v1259, %v1536
        %v1554 = vmul.f32 %v1260, %v1536
        %v1555 = vmul.f32 %v1261, %v1536
        %v1556 = vmul.f32 %v1262, %v1536
        %v1557 = vmul.f32 %v1263, %v1536
        %v1558 = vmul.f32 %v1264, %v1536
        %v1559 = vmul.f32 %v1265, %v1536
        %v1560 = vmul.f32 %v1266, %v1536
        %v1561 = vmul.f32 %v1267, %v1536
        %v1562 = vmul.f32 %v1268, %v1536
        %v1563 = vmul.f32 %v1269, %v1536
        %v1564 = vmul.f32 %v1270, %v1536
        %v1565 = vmul.f32 %v1271, %v1536
        %v1566 = vmul.f32 %v1272, %v1536
        %v1567 = vmul.f32 %v1273, %v1536
        %v1568 = vmul.f32 %v1274, %v1536
        %v1569 = vsel %vm1114, %v1537, 0.0
        %1570 = vadd.xlane.f32.xlu0 %v1569
        %v1571 = vpop.xlane.xlu0 %1570
        %v1572 = vsel %vm1114, %v1538, 0.0
        %1573 = vadd.xlane.f32.xlu0 %v1572
        %v1574 = vpop.xlane.xlu0 %1573
        %v1575 = vsel %vm1114, %v1539, 0.0
        %1576 = vadd.xlane.f32.xlu0 %v1575
        %v1577 = vpop.xlane.xlu0 %1576
        %v1578 = vsel %vm1114, %v1540, 0.0
        %1579 = vadd.xlane.f32.xlu0 %v1578
        %v1580 = vpop.xlane.xlu0 %1579
        %v1581 = vsel %vm1114, %v1541, 0.0
        %1582 = vadd.xlane.f32.xlu0 %v1581
        %v1583 = vpop.xlane.xlu0 %1582
        %v1584 = vsel %vm1114, %v1542, 0.0
        %1585 = vadd.xlane.f32.xlu0 %v1584
        %v1586 = vpop.xlane.xlu0 %1585
        %v1587 = vsel %vm1114, %v1543, 0.0
        %1588 = vadd.xlane.f32.xlu0 %v1587
        %v1589 = vpop.xlane.xlu0 %1588
        %v1590 = vsel %vm1114, %v1544, 0.0
        %1591 = vadd.xlane.f32.xlu0 %v1590
        %v1592 = vpop.xlane.xlu0 %1591
        %v1593 = vsel %vm1114, %v1545, 0.0
        %1594 = vadd.xlane.f32.xlu0 %v1593
        %v1595 = vpop.xlane.xlu0 %1594
        %v1596 = vsel %vm1114, %v1546, 0.0
        %1597 = vadd.xlane.f32.xlu0 %v1596
        %v1598 = vpop.xlane.xlu0 %1597
        %v1599 = vsel %vm1114, %v1547, 0.0
        %1600 = vadd.xlane.f32.xlu0 %v1599
        %v1601 = vpop.xlane.xlu0 %1600
        %v1602 = vsel %vm1114, %v1548, 0.0
        %1603 = vadd.xlane.f32.xlu0 %v1602
        %v1604 = vpop.xlane.xlu0 %1603
        %v1605 = vsel %vm1114, %v1549, 0.0
        %1606 = vadd.xlane.f32.xlu0 %v1605
        %v1607 = vpop.xlane.xlu0 %1606
        %v1608 = vsel %vm1114, %v1550, 0.0
        %1609 = vadd.xlane.f32.xlu0 %v1608
        %v1610 = vpop.xlane.xlu0 %1609
        %v1611 = vsel %vm1114, %v1551, 0.0
        %1612 = vadd.xlane.f32.xlu0 %v1611
        %v1613 = vpop.xlane.xlu0 %1612
        %v1614 = vsel %vm1114, %v1552, 0.0
        %1615 = vadd.xlane.f32.xlu0 %v1614
        %v1616 = vpop.xlane.xlu0 %1615
        %v1617 = vsel %vm1114, %v1553, 0.0
        %1618 = vadd.xlane.f32.xlu0 %v1617
        %v1619 = vpop.xlane.xlu0 %1618
        %v1620 = vsel %vm1114, %v1554, 0.0
        %1621 = vadd.xlane.f32.xlu0 %v1620
        %v1622 = vpop.xlane.xlu0 %1621
        %v1623 = vsel %vm1114, %v1555, 0.0
        %1624 = vadd.xlane.f32.xlu0 %v1623
        %v1625 = vpop.xlane.xlu0 %1624
        %v1626 = vsel %vm1114, %v1556, 0.0
        %1627 = vadd.xlane.f32.xlu0 %v1626
        %v1628 = vpop.xlane.xlu0 %1627
        %v1629 = vsel %vm1114, %v1557, 0.0
        %1630 = vadd.xlane.f32.xlu0 %v1629
        %v1631 = vpop.xlane.xlu0 %1630
        %v1632 = vsel %vm1114, %v1558, 0.0
        %1633 = vadd.xlane.f32.xlu0 %v1632
        %v1634 = vpop.xlane.xlu0 %1633
        %v1635 = vsel %vm1114, %v1559, 0.0
        %1636 = vadd.xlane.f32.xlu0 %v1635
        %v1637 = vpop.xlane.xlu0 %1636
        %v1638 = vsel %vm1114, %v1560, 0.0
        %1639 = vadd.xlane.f32.xlu0 %v1638
        %v1640 = vpop.xlane.xlu0 %1639
        %v1641 = vsel %vm1114, %v1561, 0.0
        %1642 = vadd.xlane.f32.xlu0 %v1641
        %v1643 = vpop.xlane.xlu0 %1642
        %v1644 = vsel %vm1114, %v1562, 0.0
        %1645 = vadd.xlane.f32.xlu0 %v1644
        %v1646 = vpop.xlane.xlu0 %1645
        %v1647 = vsel %vm1114, %v1563, 0.0
        %1648 = vadd.xlane.f32.xlu0 %v1647
        %v1649 = vpop.xlane.xlu0 %1648
        %v1650 = vsel %vm1114, %v1564, 0.0
        %1651 = vadd.xlane.f32.xlu0 %v1650
        %v1652 = vpop.xlane.xlu0 %1651
        %v1653 = vsel %vm1114, %v1565, 0.0
        %1654 = vadd.xlane.f32.xlu0 %v1653
        %v1655 = vpop.xlane.xlu0 %1654
        %v1656 = vsel %vm1114, %v1566, 0.0
        %1657 = vadd.xlane.f32.xlu0 %v1656
        %v1658 = vpop.xlane.xlu0 %1657
        %v1659 = vsel %vm1114, %v1567, 0.0
        %1660 = vadd.xlane.f32.xlu0 %v1659
        %v1661 = vpop.xlane.xlu0 %1660
        %v1662 = vsel %vm1114, %v1568, 0.0
        %1663 = vadd.xlane.f32.xlu0 %v1662
        %v1664 = vpop.xlane.xlu0 %1663
        %v1665 = vadd.f32 %v1571, 256.0
        %v1666 = vadd.f32 %v1574, 256.0
        %v1667 = vadd.f32 %v1577, 256.0
        %v1668 = vadd.f32 %v1580, 256.0
        %v1669 = vadd.f32 %v1583, 256.0
        %v1670 = vadd.f32 %v1586, 256.0
        %v1671 = vadd.f32 %v1589, 256.0
        %v1672 = vadd.f32 %v1592, 256.0
        %v1673 = vadd.f32 %v1595, 256.0
        %v1674 = vadd.f32 %v1598, 256.0
        %v1675 = vadd.f32 %v1601, 256.0
        %v1676 = vadd.f32 %v1604, 256.0
        %v1677 = vadd.f32 %v1607, 256.0
        %v1678 = vadd.f32 %v1610, 256.0
        %v1679 = vadd.f32 %v1613, 256.0
        %v1680 = vadd.f32 %v1616, 256.0
        %v1681 = vadd.f32 %v1619, 256.0
        %v1682 = vadd.f32 %v1622, 256.0
        %v1683 = vadd.f32 %v1625, 256.0
        %v1684 = vadd.f32 %v1628, 256.0
        %v1685 = vadd.f32 %v1631, 256.0
        %v1686 = vadd.f32 %v1634, 256.0
        %v1687 = vadd.f32 %v1637, 256.0
        %v1688 = vadd.f32 %v1640, 256.0
        %v1689 = vadd.f32 %v1643, 256.0
        %v1690 = vadd.f32 %v1646, 256.0
        %v1691 = vadd.f32 %v1649, 256.0
        %v1692 = vadd.f32 %v1652, 256.0
        %v1693 = vadd.f32 %v1655, 256.0
        %v1694 = vadd.f32 %v1658, 256.0
        %v1695 = vadd.f32 %v1661, 256.0
        %v1696 = vadd.f32 %v1664, 256.0
        %v1697 = vrcp.pop %v1665
        %v1698 = vmul.f32 1.0, %v1697
        %v1699 = vrcp.pop %v1666
        %v1700 = vmul.f32 1.0, %v1699
        %v1701 = vrcp.pop %v1667
        %v1702 = vmul.f32 1.0, %v1701
        %v1703 = vrcp.pop %v1668
        %v1704 = vmul.f32 1.0, %v1703
        %v1705 = vrcp.pop %v1669
        %v1706 = vmul.f32 1.0, %v1705
        %v1707 = vrcp.pop %v1670
        %v1708 = vmul.f32 1.0, %v1707
        %v1709 = vrcp.pop %v1671
        %v1710 = vmul.f32 1.0, %v1709
        %v1711 = vrcp.pop %v1672
        %v1712 = vmul.f32 1.0, %v1711
        %v1713 = vrcp.pop %v1673
        %v1714 = vmul.f32 1.0, %v1713
        %v1715 = vrcp.pop %v1674
        %v1716 = vmul.f32 1.0, %v1715
        %v1717 = vrcp.pop %v1675
        %v1718 = vmul.f32 1.0, %v1717
        %v1719 = vrcp.pop %v1676
        %v1720 = vmul.f32 1.0, %v1719
        %v1721 = vrcp.pop %v1677
        %v1722 = vmul.f32 1.0, %v1721
        %v1723 = vrcp.pop %v1678
        %v1724 = vmul.f32 1.0, %v1723
        %v1725 = vrcp.pop %v1679
        %v1726 = vmul.f32 1.0, %v1725
        %v1727 = vrcp.pop %v1680
        %v1728 = vmul.f32 1.0, %v1727
        %v1729 = vrcp.pop %v1681
        %v1730 = vmul.f32 1.0, %v1729
        %v1731 = vrcp.pop %v1682
        %v1732 = vmul.f32 1.0, %v1731
        %v1733 = vrcp.pop %v1683
        %v1734 = vmul.f32 1.0, %v1733
        %v1735 = vrcp.pop %v1684
        %v1736 = vmul.f32 1.0, %v1735
        %v1737 = vrcp.pop %v1685
        %v1738 = vmul.f32 1.0, %v1737
        %v1739 = vrcp.pop %v1686
        %v1740 = vmul.f32 1.0, %v1739
        %v1741 = vrcp.pop %v1687
        %v1742 = vmul.f32 1.0, %v1741
        %v1743 = vrcp.pop %v1688
        %v1744 = vmul.f32 1.0, %v1743
        %v1745 = vrcp.pop %v1689
        %v1746 = vmul.f32 1.0, %v1745
        %v1747 = vrcp.pop %v1690
        %v1748 = vmul.f32 1.0, %v1747
        %v1749 = vrcp.pop %v1691
        %v1750 = vmul.f32 1.0, %v1749
        %v1751 = vrcp.pop %v1692
        %v1752 = vmul.f32 1.0, %v1751
        %v1753 = vrcp.pop %v1693
        %v1754 = vmul.f32 1.0, %v1753
        %v1755 = vrcp.pop %v1694
        %v1756 = vmul.f32 1.0, %v1755
        %v1757 = vrcp.pop %v1695
        %v1758 = vmul.f32 1.0, %v1757
        %v1759 = vrcp.pop %v1696
        %v1760 = vmul.f32 1.0, %v1759
        %v1761 = vadd.f32 %v924, %v929
        %v1762 = vadd.f32 %v1761, %v934
        %v1763 = vadd.f32 %v1762, %v939
        %v1764 = vadd.f32 %v1763, %v944
        %v1765 = vadd.f32 %v1764, %v949
        %v1766 = vadd.f32 %v1765, %v954
        %v1767 = vadd.f32 %v1766, %v959
        %v1768 = vadd.f32 %v1767, %v964
        %v1769 = vadd.f32 %v1768, %v969
        %v1770 = vadd.f32 %v1769, %v974
        %v1771 = vadd.f32 %v1770, %v979
        %v1772 = vadd.f32 %v1771, %v984
        %v1773 = vadd.f32 %v1772, %v989
        %v1774 = vadd.f32 %v1773, %v994
        %v1775 = vadd.f32 %v1774, %v999
        %v1776 = vadd.f32 %v1775, %v1004
        %v1777 = vadd.f32 %v1776, %v1009
        %v1778 = vadd.f32 %v1777, %v1014
        %v1779 = vadd.f32 %v1778, %v1019
        %v1780 = vadd.f32 %v1779, %v1024
        %v1781 = vadd.f32 %v1780, %v1029
        %v1782 = vadd.f32 %v1781, %v1034
        %v1783 = vadd.f32 %v1782, %v1039
        %v1784 = vadd.f32 %v1783, %v1044
        %v1785 = vadd.f32 %v1784, %v1049
        %v1786 = vadd.f32 %v1785, %v1054
        %v1787 = vadd.f32 %v1786, %v1059
        %v1788 = vadd.f32 %v1787, %v1064
        %v1789 = vadd.f32 %v1788, %v1069
        %v1790 = vadd.f32 %v1789, %v1074
        %v1791 = vadd.f32 %v1790, %v1079
        %v1792 = vrot.slane %v1791, 4
        %v1793 = vadd.f32 %v1791, %v1792
        %v1794 = vrot.slane %v1793, 2
        %v1795 = vadd.f32 %v1793, %v1794
        %v1796 = vrot.slane %v1795, 1
        %v1797 = vadd.f32 %v1795, %v1796
        %1798 = vxpose.xlu0.b32.start [1/16] %v1435, 128
        %1799 = vxpose.xlu0.b32.cont [2/16] %v1436, 128
        %1800 = vxpose.xlu0.b32.cont [3/16] %v1437, 128
        %1801 = vxpose.xlu0.b32.cont [4/16] %v1438, 128
        %1802 = vxpose.xlu0.b32.cont [5/16] %v1439, 128
        %1803 = vxpose.xlu0.b32.cont [6/16] %v1440, 128
        %1804 = vxpose.xlu0.b32.cont [7/16] %v1441, 128
        %1805 = vxpose.xlu0.b32.cont [8/16] %v1442, 128
        %1806 = vxpose.xlu0.b32.cont [9/16] %v1443, 128
        %1807 = vxpose.xlu0.b32.cont [10/16] %v1444, 128
        %1808 = vxpose.xlu0.b32.cont [11/16] %v1445, 128
        %1809 = vxpose.xlu0.b32.cont [12/16] %v1446, 128
        %1810 = vxpose.xlu0.b32.cont [13/16] %v1447, 128
        %1811 = vxpose.xlu0.b32.cont [14/16] %v1448, 128
        %1812 = vxpose.xlu0.b32.cont [15/16] %v1449, 128
        %1813 = vxpose.xlu0.b32.end [16/16] %v1450, 128
        %v1814 = vpop.trf.xlu0
        %v1815 = vpop.trf.xlu0
        %v1816 = vpop.trf.xlu0
        %v1817 = vpop.trf.xlu0
        %v1818 = vpop.trf.xlu0
        %v1819 = vpop.trf.xlu0
        %v1820 = vpop.trf.xlu0
        %v1821 = vpop.trf.xlu0
        %v1822 = vpop.trf.xlu0
        %v1823 = vpop.trf.xlu0
        %v1824 = vpop.trf.xlu0
        %v1825 = vpop.trf.xlu0
        %v1826 = vpop.trf.xlu0
        %v1827 = vpop.trf.xlu0
        %v1828 = vpop.trf.xlu0
        %v1829 = vpop.trf.xlu0
        %1830 = vxpose.xlu0.b32.start [1/16] %v1451, 128
        %1831 = vxpose.xlu0.b32.cont [2/16] %v1452, 128
        %1832 = vxpose.xlu0.b32.cont [3/16] %v1453, 128
        %1833 = vxpose.xlu0.b32.cont [4/16] %v1454, 128
        %1834 = vxpose.xlu0.b32.cont [5/16] %v1455, 128
        %1835 = vxpose.xlu0.b32.cont [6/16] %v1456, 128
        %1836 = vxpose.xlu0.b32.cont [7/16] %v1457, 128
        %1837 = vxpose.xlu0.b32.cont [8/16] %v1458, 128
        %1838 = vxpose.xlu0.b32.cont [9/16] %v1459, 128
        %1839 = vxpose.xlu0.b32.cont [10/16] %v1460, 128
        %1840 = vxpose.xlu0.b32.cont [11/16] %v1461, 128
        %1841 = vxpose.xlu0.b32.cont [12/16] %v1462, 128
        %1842 = vxpose.xlu0.b32.cont [13/16] %v1463, 128
        %1843 = vxpose.xlu0.b32.cont [14/16] %v1464, 128
        %1844 = vxpose.xlu0.b32.cont [15/16] %v1465, 128
        %1845 = vxpose.xlu0.b32.end [16/16] %v1466, 128
        %v1846 = vpop.trf.xlu0
        %v1847 = vpop.trf.xlu0
        %v1848 = vpop.trf.xlu0
        %v1849 = vpop.trf.xlu0
        %v1850 = vpop.trf.xlu0
        %v1851 = vpop.trf.xlu0
        %v1852 = vpop.trf.xlu0
        %v1853 = vpop.trf.xlu0
        %v1854 = vpop.trf.xlu0
        %v1855 = vpop.trf.xlu0
        %v1856 = vpop.trf.xlu0
        %v1857 = vpop.trf.xlu0
        %v1858 = vpop.trf.xlu0
        %v1859 = vpop.trf.xlu0
        %v1860 = vpop.trf.xlu0
        %v1861 = vpop.trf.xlu0
        %1862 = vmatprep.subr.mxu0 0.0
        %1863 = vmatpush1.msra.mxu0 %v924
        %1864 = vmatprep.subr.mxu0 0.0
        %1865 = vmatpush1.msra.mxu0 %v929
        %1866 = vmatprep.subr.mxu0 0.0
        %1867 = vmatpush1.msra.mxu0 %v934
        %1868 = vmatprep.subr.mxu0 0.0
        %1869 = vmatpush1.msra.mxu0 %v939
        %1870 = vmatprep.subr.mxu0 0.0
        %1871 = vmatpush1.msra.mxu0 %v944
        %1872 = vmatprep.subr.mxu0 0.0
        %1873 = vmatpush1.msra.mxu0 %v949
        %1874 = vmatprep.subr.mxu0 0.0
        %1875 = vmatpush1.msra.mxu0 %v954
        %1876 = vmatprep.subr.mxu0 0.0
        %1877 = vmatpush1.msra.mxu0 %v959
        %1878 = vmatprep.subr.mxu0 0.0
        %1879 = vmatpush1.msra.mxu0 %v964
        %1880 = vmatprep.subr.mxu0 0.0
        %1881 = vmatpush1.msra.mxu0 %v969
        %1882 = vmatprep.subr.mxu0 0.0
        %1883 = vmatpush1.msra.mxu0 %v974
        %1884 = vmatprep.subr.mxu0 0.0
        %1885 = vmatpush1.msra.mxu0 %v979
        %1886 = vmatprep.subr.mxu0 0.0
        %1887 = vmatpush1.msra.mxu0 %v984
        %1888 = vmatprep.subr.mxu0 0.0
        %1889 = vmatpush1.msra.mxu0 %v989
        %1890 = vmatprep.subr.mxu0 0.0
        %1891 = vmatpush1.msra.mxu0 %v994
        %1892 = vmatprep.subr.mxu0 0.0
        %1893 = vmatpush1.msra.mxu0 %v999
        %1894 = vmatprep.subr.mxu0 0.0
        %1895 = vmatpush1.msra.mxu0 %v1004
        %1896 = vmatprep.subr.mxu0 0.0
        %1897 = vmatpush1.msra.mxu0 %v1009
        %1898 = vmatprep.subr.mxu0 0.0
        %1899 = vmatpush1.msra.mxu0 %v1014
        %1900 = vmatprep.subr.mxu0 0.0
        %1901 = vmatpush1.msra.mxu0 %v1019
        %1902 = vmatprep.subr.mxu0 0.0
        %1903 = vmatpush1.msra.mxu0 %v1024
        %1904 = vmatprep.subr.mxu0 0.0
        %1905 = vmatpush1.msra.mxu0 %v1029
        %1906 = vmatprep.subr.mxu0 0.0
        %1907 = vmatpush1.msra.mxu0 %v1034
        %1908 = vmatprep.subr.mxu0 0.0
        %1909 = vmatpush1.msra.mxu0 %v1039
        %1910 = vmatprep.subr.mxu0 0.0
        %1911 = vmatpush1.msra.mxu0 %v1044
        %1912 = vmatprep.subr.mxu0 0.0
        %1913 = vmatpush1.msra.mxu0 %v1049
        %1914 = vmatprep.subr.mxu0 0.0
        %1915 = vmatpush1.msra.mxu0 %v1054
        %1916 = vmatprep.subr.mxu0 0.0
        %1917 = vmatpush1.msra.mxu0 %v1059
        %1918 = vmatprep.subr.mxu0 0.0
        %1919 = vmatpush1.msra.mxu0 %v1064
        %1920 = vmatprep.subr.mxu0 0.0
        %1921 = vmatpush1.msra.mxu0 %v1069
        %1922 = vmatprep.subr.mxu0 0.0
        %1923 = vmatpush1.msra.mxu0 %v1074
        %1924 = vmatprep.subr.mxu0 0.0
        %1925 = vmatpush1.msra.mxu0 %v1079
        %1926 = vmatprep.mubr.f32.mxu0 %v1846
        %1927 = vmatmul.mubr.f32.gmra.mrb[0].mxu0 %v1814
        %v1928 = vpop.f32.mrb[0].mxu0
        %v1929 = vadd.f32 0.0, %v1928
        %v1930 = vpop.f32.mrb[0].mxu0
        %1931 = vmatprep.mubr.f32.mxu0 %v1847
        %1932 = vmatmul.mubr.f32.gmra.mrb[0].mxu0 %v1815
        %v1933 = vpop.f32.mrb[0].mxu0
        %v1934 = vadd.f32 0.0, %v1933
        %v1935 = vpop.f32.mrb[0].mxu0
        %1936 = vdwg.mxu0
        %v1938 = vsel %vm1114, %v1243, 0
        %v1941 = vsel %vm1114, %v1244, 0
        %v1944 = vsel %vm1114, %v1245, 0
        %v1947 = vsel %vm1114, %v1246, 0
        %v1950 = vsel %vm1114, %v1247, 0
        %v1953 = vsel %vm1114, %v1248, 0
        %v1956 = vsel %vm1114, %v1249, 0
        %v1959 = vsel %vm1114, %v1250, 0
        %v1962 = vsel %vm1114, %v1251, 0
        %v1965 = vsel %vm1114, %v1252, 0
        %v1968 = vsel %vm1114, %v1253, 0
        %v1971 = vsel %vm1114, %v1254, 0
        %v1974 = vsel %vm1114, %v1255, 0
        %v1977 = vsel %vm1114, %v1256, 0
        %v1980 = vsel %vm1114, %v1257, 0
        %v1983 = vsel %vm1114, %v1258, 0
        %v1986 = vsel %vm1114, %v1259, 0
        %v1989 = vsel %vm1114, %v1260, 0
        %v1992 = vsel %vm1114, %v1261, 0
        %v1995 = vsel %vm1114, %v1262, 0
        %v1998 = vsel %vm1114, %v1263, 0
        %v2001 = vsel %vm1114, %v1264, 0
        %v2004 = vsel %vm1114, %v1265, 0
        %v2007 = vsel %vm1114, %v1266, 0
        %v2010 = vsel %vm1114, %v1267, 0
        %v2013 = vsel %vm1114, %v1268, 0
        %v2016 = vsel %vm1114, %v1269, 0
        %v2019 = vsel %vm1114, %v1270, 0
        %v2022 = vsel %vm1114, %v1271, 0
        %v2025 = vsel %vm1114, %v1272, 0
        %v2028 = vsel %vm1114, %v1273, 0
        %v2031 = vsel %vm1114, %v1274, 0
        %2033 = vmatprep.subr.mxu0 0.0
        %2034 = vmatpush1.msra.mxu0 %v1929
        %2035 = vmatprep.subr.mxu0 0.0
        %2036 = vmatpush1.msra.mxu0 %v1934
        %2037 = vmatprep.subr.mxu0 0.0
        %2038 = vmatpush1.msra.mxu0 0.0
        %2039 = vmatprep.subr.mxu0 0.0
        %2040 = vmatpush1.msra.mxu0 0.0
        %2041 = vmatprep.subr.mxu0 0.0
        %2042 = vmatpush1.msra.mxu0 0.0
        %2043 = vmatprep.subr.mxu0 0.0
        %2044 = vmatpush1.msra.mxu0 0.0
        %2045 = vmatprep.subr.mxu0 0.0
        %2046 = vmatpush1.msra.mxu0 0.0
        %2047 = vmatprep.subr.mxu0 0.0
        %2048 = vmatpush1.msra.mxu0 0.0
        %2049 = vmatprep.subr.mxu0 0.0
        %2050 = vmatpush1.msra.mxu0 0.0
        %2051 = vmatprep.subr.mxu0 0.0
        %2052 = vmatpush1.msra.mxu0 0.0
        %2053 = vmatprep.subr.mxu0 0.0
        %2054 = vmatpush1.msra.mxu0 0.0
        %2055 = vmatprep.subr.mxu0 0.0
        %2056 = vmatpush1.msra.mxu0 0.0
        %2057 = vmatprep.subr.mxu0 0.0
        %2058 = vmatpush1.msra.mxu0 0.0
        %2059 = vmatprep.subr.mxu0 0.0
        %2060 = vmatpush1.msra.mxu0 0.0
        %2061 = vmatprep.subr.mxu0 0.0
        %2062 = vmatpush1.msra.mxu0 0.0
        %2063 = vmatprep.subr.mxu0 0.0
        %2064 = vmatpush1.msra.mxu0 0.0
        %2065 = vmatprep.subr.mxu0 0.0
        %2066 = vmatpush1.msra.mxu0 0.0
        %2067 = vmatprep.subr.mxu0 0.0
        %2068 = vmatpush1.msra.mxu0 0.0
        %2069 = vmatprep.subr.mxu0 0.0
        %2070 = vmatpush1.msra.mxu0 0.0
        %2071 = vmatprep.subr.mxu0 0.0
        %2072 = vmatpush1.msra.mxu0 0.0
        %2073 = vmatprep.subr.mxu0 0.0
        %2074 = vmatpush1.msra.mxu0 0.0
        %2075 = vmatprep.subr.mxu0 0.0
        %2076 = vmatpush1.msra.mxu0 0.0
        %2077 = vmatprep.subr.mxu0 0.0
        %2078 = vmatpush1.msra.mxu0 0.0
        %2079 = vmatprep.subr.mxu0 0.0
        %2080 = vmatpush1.msra.mxu0 0.0
        %2081 = vmatprep.subr.mxu0 0.0
        %2082 = vmatpush1.msra.mxu0 0.0
        %2083 = vmatprep.subr.mxu0 0.0
        %2084 = vmatpush1.msra.mxu0 0.0
        %2085 = vmatprep.subr.mxu0 0.0
        %2086 = vmatpush1.msra.mxu0 0.0
        %2087 = vmatprep.subr.mxu0 0.0
        %2088 = vmatpush1.msra.mxu0 0.0
        %2089 = vmatprep.subr.mxu0 0.0
        %2090 = vmatpush1.msra.mxu0 0.0
        %2091 = vmatprep.subr.mxu0 0.0
        %2092 = vmatpush1.msra.mxu0 0.0
        %2093 = vmatprep.subr.mxu0 0.0
        %2094 = vmatpush1.msra.mxu0 0.0
        %2095 = vmatprep.subr.mxu0 0.0
        %2096 = vmatpush1.msra.mxu0 0.0
        %2097 = vmatprep.mubr.f32.mxu0 0.0
        %2098 = vmatmul.mubr.f32.gmra.mrb[0].mxu0 %v1938
        %v2099 = vpop.f32.mrb[0].mxu0
        %v2100 = vadd.f32 0.0, %v2099
        %v2101 = vpop.f32.mrb[0].mxu0
        %2102 = vmatprep.mubr.f32.mxu0 0.0
        %2103 = vmatmul.mubr.f32.gmra.mrb[0].mxu0 %v1941
        %v2104 = vpop.f32.mrb[0].mxu0
        %v2105 = vadd.f32 0.0, %v2104
        %v2106 = vpop.f32.mrb[0].mxu0
        %2107 = vmatprep.mubr.f32.mxu0 0.0
        %2108 = vmatmul.mubr.f32.gmra.mrb[0].mxu0 %v1944
        %v2109 = vpop.f32.mrb[0].mxu0
        %v2110 = vadd.f32 0.0, %v2109
        %v2111 = vpop.f32.mrb[0].mxu0
        %2112 = vmatprep.mubr.f32.mxu0 0.0
        %2113 = vmatmul.mubr.f32.gmra.mrb[0].mxu0 %v1947
        %v2114 = vpop.f32.mrb[0].mxu0
        %v2115 = vadd.f32 0.0, %v2114
        %v2116 = vpop.f32.mrb[0].mxu0
        %2117 = vmatprep.mubr.f32.mxu0 0.0
        %2118 = vmatmul.mubr.f32.gmra.mrb[0].mxu0 %v1950
        %v2119 = vpop.f32.mrb[0].mxu0
        %v2120 = vadd.f32 0.0, %v2119
        %v2121 = vpop.f32.mrb[0].mxu0
        %2122 = vmatprep.mubr.f32.mxu0 0.0
        %2123 = vmatmul.mubr.f32.gmra.mrb[0].mxu0 %v1953
        %v2124 = vpop.f32.mrb[0].mxu0
        %v2125 = vadd.f32 0.0, %v2124
        %v2126 = vpop.f32.mrb[0].mxu0
        %2127 = vmatprep.mubr.f32.mxu0 0.0
        %2128 = vmatmul.mubr.f32.gmra.mrb[0].mxu0 %v1956
        %v2129 = vpop.f32.mrb[0].mxu0
        %v2130 = vadd.f32 0.0, %v2129
        %v2131 = vpop.f32.mrb[0].mxu0
        %2132 = vmatprep.mubr.f32.mxu0 0.0
        %2133 = vmatmul.mubr.f32.gmra.mrb[0].mxu0 %v1959
        %v2134 = vpop.f32.mrb[0].mxu0
        %v2135 = vadd.f32 0.0, %v2134
        %v2136 = vpop.f32.mrb[0].mxu0
        %2137 = vmatprep.mubr.f32.mxu0 0.0
        %2138 = vmatmul.mubr.f32.gmra.mrb[0].mxu0 %v1962
        %v2139 = vpop.f32.mrb[0].mxu0
        %v2140 = vadd.f32 0.0, %v2139
        %v2141 = vpop.f32.mrb[0].mxu0
        %2142 = vmatprep.mubr.f32.mxu0 0.0
        %2143 = vmatmul.mubr.f32.gmra.mrb[0].mxu0 %v1965
        %v2144 = vpop.f32.mrb[0].mxu0
        %v2145 = vadd.f32 0.0, %v2144
        %v2146 = vpop.f32.mrb[0].mxu0
        %2147 = vmatprep.mubr.f32.mxu0 0.0
        %2148 = vmatmul.mubr.f32.gmra.mrb[0].mxu0 %v1968
        %v2149 = vpop.f32.mrb[0].mxu0
        %v2150 = vadd.f32 0.0, %v2149
        %v2151 = vpop.f32.mrb[0].mxu0
        %2152 = vmatprep.mubr.f32.mxu0 0.0
        %2153 = vmatmul.mubr.f32.gmra.mrb[0].mxu0 %v1971
        %v2154 = vpop.f32.mrb[0].mxu0
        %v2155 = vadd.f32 0.0, %v2154
        %v2156 = vpop.f32.mrb[0].mxu0
        %2157 = vmatprep.mubr.f32.mxu0 0.0
        %2158 = vmatmul.mubr.f32.gmra.mrb[0].mxu0 %v1974
        %v2159 = vpop.f32.mrb[0].mxu0
        %v2160 = vadd.f32 0.0, %v2159
        %v2161 = vpop.f32.mrb[0].mxu0
        %2162 = vmatprep.mubr.f32.mxu0 0.0
        %2163 = vmatmul.mubr.f32.gmra.mrb[0].mxu0 %v1977
        %v2164 = vpop.f32.mrb[0].mxu0
        %v2165 = vadd.f32 0.0, %v2164
        %v2166 = vpop.f32.mrb[0].mxu0
        %2167 = vmatprep.mubr.f32.mxu0 0.0
        %2168 = vmatmul.mubr.f32.gmra.mrb[0].mxu0 %v1980
        %v2169 = vpop.f32.mrb[0].mxu0
        %v2170 = vadd.f32 0.0, %v2169
        %v2171 = vpop.f32.mrb[0].mxu0
        %2172 = vmatprep.mubr.f32.mxu0 0.0
        %2173 = vmatmul.mubr.f32.gmra.mrb[0].mxu0 %v1983
        %v2174 = vpop.f32.mrb[0].mxu0
        %v2175 = vadd.f32 0.0, %v2174
        %v2176 = vpop.f32.mrb[0].mxu0
        %2177 = vmatprep.mubr.f32.mxu0 0.0
        %2178 = vmatmul.mubr.f32.gmra.mrb[0].mxu0 %v1986
        %v2179 = vpop.f32.mrb[0].mxu0
        %v2180 = vadd.f32 0.0, %v2179
        %v2181 = vpop.f32.mrb[0].mxu0
        %2182 = vmatprep.mubr.f32.mxu0 0.0
        %2183 = vmatmul.mubr.f32.gmra.mrb[0].mxu0 %v1989
        %v2184 = vpop.f32.mrb[0].mxu0
        %v2185 = vadd.f32 0.0, %v2184
        %v2186 = vpop.f32.mrb[0].mxu0
        %2187 = vmatprep.mubr.f32.mxu0 0.0
        %2188 = vmatmul.mubr.f32.gmra.mrb[0].mxu0 %v1992
        %v2189 = vpop.f32.mrb[0].mxu0
        %v2190 = vadd.f32 0.0, %v2189
        %v2191 = vpop.f32.mrb[0].mxu0
        %2192 = vmatprep.mubr.f32.mxu0 0.0
        %2193 = vmatmul.mubr.f32.gmra.mrb[0].mxu0 %v1995
        %v2194 = vpop.f32.mrb[0].mxu0
        %v2195 = vadd.f32 0.0, %v2194
        %v2196 = vpop.f32.mrb[0].mxu0
        %2197 = vmatprep.mubr.f32.mxu0 0.0
        %2198 = vmatmul.mubr.f32.gmra.mrb[0].mxu0 %v1998
        %v2199 = vpop.f32.mrb[0].mxu0
        %v2200 = vadd.f32 0.0, %v2199
        %v2201 = vpop.f32.mrb[0].mxu0
        %2202 = vmatprep.mubr.f32.mxu0 0.0
        %2203 = vmatmul.mubr.f32.gmra.mrb[0].mxu0 %v2001
        %v2204 = vpop.f32.mrb[0].mxu0
        %v2205 = vadd.f32 0.0, %v2204
        %v2206 = vpop.f32.mrb[0].mxu0
        %2207 = vmatprep.mubr.f32.mxu0 0.0
        %2208 = vmatmul.mubr.f32.gmra.mrb[0].mxu0 %v2004
        %v2209 = vpop.f32.mrb[0].mxu0
        %v2210 = vadd.f32 0.0, %v2209
        %v2211 = vpop.f32.mrb[0].mxu0
        %2212 = vmatprep.mubr.f32.mxu0 0.0
        %2213 = vmatmul.mubr.f32.gmra.mrb[0].mxu0 %v2007
        %v2214 = vpop.f32.mrb[0].mxu0
        %v2215 = vadd.f32 0.0, %v2214
        %v2216 = vpop.f32.mrb[0].mxu0
        %2217 = vmatprep.mubr.f32.mxu0 0.0
        %2218 = vmatmul.mubr.f32.gmra.mrb[0].mxu0 %v2010
        %v2219 = vpop.f32.mrb[0].mxu0
        %v2220 = vadd.f32 0.0, %v2219
        %v2221 = vpop.f32.mrb[0].mxu0
        %2222 = vmatprep.mubr.f32.mxu0 0.0
        %2223 = vmatmul.mubr.f32.gmra.mrb[0].mxu0 %v2013
        %v2224 = vpop.f32.mrb[0].mxu0
        %v2225 = vadd.f32 0.0, %v2224
        %v2226 = vpop.f32.mrb[0].mxu0
        %2227 = vmatprep.mubr.f32.mxu0 0.0
        %2228 = vmatmul.mubr.f32.gmra.mrb[0].mxu0 %v2016
        %v2229 = vpop.f32.mrb[0].mxu0
        %v2230 = vadd.f32 0.0, %v2229
        %v2231 = vpop.f32.mrb[0].mxu0
        %2232 = vmatprep.mubr.f32.mxu0 0.0
        %2233 = vmatmul.mubr.f32.gmra.mrb[0].mxu0 %v2019
        %v2234 = vpop.f32.mrb[0].mxu0
        %v2235 = vadd.f32 0.0, %v2234
        %v2236 = vpop.f32.mrb[0].mxu0
        %2237 = vmatprep.mubr.f32.mxu0 0.0
        %2238 = vmatmul.mubr.f32.gmra.mrb[0].mxu0 %v2022
        %v2239 = vpop.f32.mrb[0].mxu0
        %v2240 = vadd.f32 0.0, %v2239
        %v2241 = vpop.f32.mrb[0].mxu0
        %2242 = vmatprep.mubr.f32.mxu0 0.0
        %2243 = vmatmul.mubr.f32.gmra.mrb[0].mxu0 %v2025
        %v2244 = vpop.f32.mrb[0].mxu0
        %v2245 = vadd.f32 0.0, %v2244
        %v2246 = vpop.f32.mrb[0].mxu0
        %2247 = vmatprep.mubr.f32.mxu0 0.0
        %2248 = vmatmul.mubr.f32.gmra.mrb[0].mxu0 %v2028
        %v2249 = vpop.f32.mrb[0].mxu0
        %v2250 = vadd.f32 0.0, %v2249
        %v2251 = vpop.f32.mrb[0].mxu0
        %2252 = vmatprep.mubr.f32.mxu0 0.0
        %2253 = vmatmul.mubr.f32.gmra.mrb[0].mxu0 %v2031
        %v2254 = vpop.f32.mrb[0].mxu0
        %v2255 = vadd.f32 0.0, %v2254
        %v2256 = vpop.f32.mrb[0].mxu0
        %2257 = vdwg.mxu0
        %v2258 = vadd.f32 %v1797, %v2100
        %v2259 = vadd.f32 %v1797, %v2105
        %v2260 = vadd.f32 %v1797, %v2110
        %v2261 = vadd.f32 %v1797, %v2115
        %v2262 = vadd.f32 %v1797, %v2120
        %v2263 = vadd.f32 %v1797, %v2125
        %v2264 = vadd.f32 %v1797, %v2130
        %v2265 = vadd.f32 %v1797, %v2135
        %v2266 = vadd.f32 %v1797, %v2140
        %v2267 = vadd.f32 %v1797, %v2145
        %v2268 = vadd.f32 %v1797, %v2150
        %v2269 = vadd.f32 %v1797, %v2155
        %v2270 = vadd.f32 %v1797, %v2160
        %v2271 = vadd.f32 %v1797, %v2165
        %v2272 = vadd.f32 %v1797, %v2170
        %v2273 = vadd.f32 %v1797, %v2175
        %v2274 = vadd.f32 %v1797, %v2180
        %v2275 = vadd.f32 %v1797, %v2185
        %v2276 = vadd.f32 %v1797, %v2190
        %v2277 = vadd.f32 %v1797, %v2195
        %v2278 = vadd.f32 %v1797, %v2200
        %v2279 = vadd.f32 %v1797, %v2205
        %v2280 = vadd.f32 %v1797, %v2210
        %v2281 = vadd.f32 %v1797, %v2215
        %v2282 = vadd.f32 %v1797, %v2220
        %v2283 = vadd.f32 %v1797, %v2225
        %v2284 = vadd.f32 %v1797, %v2230
        %v2285 = vadd.f32 %v1797, %v2235
        %v2286 = vadd.f32 %v1797, %v2240
        %v2287 = vadd.f32 %v1797, %v2245
        %v2288 = vadd.f32 %v1797, %v2250
        %v2289 = vadd.f32 %v1797, %v2255
        %v2290 = vmul.f32 %v2258, %v1698
        %v2291 = vmul.f32 %v2259, %v1700
        %v2292 = vmul.f32 %v2260, %v1702
        %v2293 = vmul.f32 %v2261, %v1704
        %v2294 = vmul.f32 %v2262, %v1706
        %v2295 = vmul.f32 %v2263, %v1708
        %v2296 = vmul.f32 %v2264, %v1710
        %v2297 = vmul.f32 %v2265, %v1712
        %v2298 = vmul.f32 %v2266, %v1714
        %v2299 = vmul.f32 %v2267, %v1716
        %v2300 = vmul.f32 %v2268, %v1718
        %v2301 = vmul.f32 %v2269, %v1720
        %v2302 = vmul.f32 %v2270, %v1722
        %v2303 = vmul.f32 %v2271, %v1724
        %v2304 = vmul.f32 %v2272, %v1726
        %v2305 = vmul.f32 %v2273, %v1728
        %v2306 = vmul.f32 %v2274, %v1730
        %v2307 = vmul.f32 %v2275, %v1732
        %v2308 = vmul.f32 %v2276, %v1734
        %v2309 = vmul.f32 %v2277, %v1736
        %v2310 = vmul.f32 %v2278, %v1738
        %v2311 = vmul.f32 %v2279, %v1740
        %v2312 = vmul.f32 %v2280, %v1742
        %v2313 = vmul.f32 %v2281, %v1744
        %v2314 = vmul.f32 %v2282, %v1746
        %v2315 = vmul.f32 %v2283, %v1748
        %v2316 = vmul.f32 %v2284, %v1750
        %v2317 = vmul.f32 %v2285, %v1752
        %v2318 = vmul.f32 %v2286, %v1754
        %v2319 = vmul.f32 %v2287, %v1756
        %v2320 = vmul.f32 %v2288, %v1758
        %v2321 = vmul.f32 %v2289, %v1760
        %v2322 = vld [vmem:[#allocation2] sm:$0x1]
        %v2324 = vlaneseq
        %v2325 = vshrl.u32 %v2324, 7
        %v2326 = vsub.s32 0, %v2325
        %v2327 = vrot.slane %v2322, %v2326
        %2328 = vset.pattern.permute.xlu0 0
        %2329 = vperm.xlu0 %2328, %v2327
        %v2330 = vpop.permute.xlu0 %2329
        %v2332 = vmul.f32 %v2330, %v2290
        %v2333 = vmul.f32 %v2330, %v2291
        %v2334 = vmul.f32 %v2330, %v2292
        %v2335 = vmul.f32 %v2330, %v2293
        %v2336 = vmul.f32 %v2330, %v2294
        %v2337 = vmul.f32 %v2330, %v2295
        %v2338 = vmul.f32 %v2330, %v2296
        %v2339 = vmul.f32 %v2330, %v2297
        %v2340 = vmul.f32 %v2330, %v2298
        %v2341 = vmul.f32 %v2330, %v2299
        %v2342 = vmul.f32 %v2330, %v2300
        %v2343 = vmul.f32 %v2330, %v2301
        %v2344 = vmul.f32 %v2330, %v2302
        %v2345 = vmul.f32 %v2330, %v2303
        %v2346 = vmul.f32 %v2330, %v2304
        %v2347 = vmul.f32 %v2330, %v2305
        %v2348 = vmul.f32 %v2330, %v2306
        %v2349 = vmul.f32 %v2330, %v2307
        %v2350 = vmul.f32 %v2330, %v2308
        %v2351 = vmul.f32 %v2330, %v2309
        %v2352 = vmul.f32 %v2330, %v2310
        %v2353 = vmul.f32 %v2330, %v2311
        %v2354 = vmul.f32 %v2330, %v2312
        %v2355 = vmul.f32 %v2330, %v2313
        %v2356 = vmul.f32 %v2330, %v2314
        %v2357 = vmul.f32 %v2330, %v2315
        %v2358 = vmul.f32 %v2330, %v2316
        %v2359 = vmul.f32 %v2330, %v2317
        %v2360 = vmul.f32 %v2330, %v2318
        %v2361 = vmul.f32 %v2330, %v2319
        %v2362 = vmul.f32 %v2330, %v2320
        %v2363 = vmul.f32 %v2330, %v2321
        %v2364 = vadd.f32 %v2332, %v306
        %v2365 = vadd.f32 %v2333, %v307
        %v2366 = vadd.f32 %v2334, %v308
        %v2367 = vadd.f32 %v2335, %v309
        %v2368 = vadd.f32 %v2336, %v310
        %v2369 = vadd.f32 %v2337, %v311
        %v2370 = vadd.f32 %v2338, %v312
        %v2371 = vadd.f32 %v2339, %v313
        %v2372 = vadd.f32 %v2340, %v314
        %v2373 = vadd.f32 %v2341, %v315
        %v2374 = vadd.f32 %v2342, %v316
        %v2375 = vadd.f32 %v2343, %v317
        %v2376 = vadd.f32 %v2344, %v318
        %v2377 = vadd.f32 %v2345, %v319
        %v2378 = vadd.f32 %v2346, %v320
        %v2379 = vadd.f32 %v2347, %v321
        %v2380 = vadd.f32 %v2348, %v322
        %v2381 = vadd.f32 %v2349, %v323
        %v2382 = vadd.f32 %v2350, %v324
        %v2383 = vadd.f32 %v2351, %v325
        %v2384 = vadd.f32 %v2352, %v326
        %v2385 = vadd.f32 %v2353, %v327
        %v2386 = vadd.f32 %v2354, %v328
        %v2387 = vadd.f32 %v2355, %v329
        %v2388 = vadd.f32 %v2356, %v330
        %v2389 = vadd.f32 %v2357, %v331
        %v2390 = vadd.f32 %v2358, %v332
        %v2391 = vadd.f32 %v2359, %v333
        %v2392 = vadd.f32 %v2360, %v334
        %v2393 = vadd.f32 %v2361, %v335
        %v2394 = vadd.f32 %v2362, %v336
        %v2395 = vadd.f32 %v2363, %v337
        %2396 = vst [vmem:[%s300] sm:$0xff] %v2364
        %2397 = vst [vmem:[%s300 + $0x8] sm:$0xff] %v2365
        %2398 = vst [vmem:[%s300 + $0x10] sm:$0xff] %v2366
        %2399 = vst [vmem:[%s300 + $0x18] sm:$0xff] %v2367
        %2400 = vst [vmem:[%s300 + $0x20] sm:$0xff] %v2368
        %2401 = vst [vmem:[%s300 + $0x28] sm:$0xff] %v2369
        %2402 = vst [vmem:[%s300 + $0x30] sm:$0xff] %v2370
        %2403 = vst [vmem:[%s300 + $0x38] sm:$0xff] %v2371
        %2404 = vst [vmem:[%s300 + $0x40] sm:$0xff] %v2372
        %2405 = vst [vmem:[%s300 + $0x48] sm:$0xff] %v2373
        %2406 = vst [vmem:[%s300 + $0x50] sm:$0xff] %v2374
        %2407 = vst [vmem:[%s300 + $0x58] sm:$0xff] %v2375
        %2408 = vst [vmem:[%s300 + $0x60] sm:$0xff] %v2376
        %2409 = vst [vmem:[%s300 + $0x68] sm:$0xff] %v2377
        %2410 = vst [vmem:[%s300 + $0x70] sm:$0xff] %v2378
        %2411 = vst [vmem:[%s300 + $0x78] sm:$0xff] %v2379
        %2412 = vst [vmem:[%s300 + $0x80] sm:$0xff] %v2380
        %2413 = vst [vmem:[%s300 + $0x88] sm:$0xff] %v2381
        %2414 = vst [vmem:[%s300 + $0x90] sm:$0xff] %v2382
        %2415 = vst [vmem:[%s300 + $0x98] sm:$0xff] %v2383
        %2416 = vst [vmem:[%s300 + $0xa0] sm:$0xff] %v2384
        %2417 = vst [vmem:[%s300 + $0xa8] sm:$0xff] %v2385
        %2418 = vst [vmem:[%s300 + $0xb0] sm:$0xff] %v2386
        %2419 = vst [vmem:[%s300 + $0xb8] sm:$0xff] %v2387
        %2420 = vst [vmem:[%s300 + $0xc0] sm:$0xff] %v2388
        %2421 = vst [vmem:[%s300 + $0xc8] sm:$0xff] %v2389
        %2422 = vst [vmem:[%s300 + $0xd0] sm:$0xff] %v2390
        %2423 = vst [vmem:[%s300 + $0xd8] sm:$0xff] %v2391
        %2424 = vst [vmem:[%s300 + $0xe0] sm:$0xff] %v2392
        %2425 = vst [vmem:[%s300 + $0xe8] sm:$0xff] %v2393
        %2426 = vst [vmem:[%s300 + $0xf0] sm:$0xff] %v2394
        %2427 = vst [vmem:[%s300 + $0xf8] sm:$0xff] %v2395
        %s2428 = sand.u32 %s205, 1
        %s2429 = scalar_lea.sflag [#allocation4], %s2428
        %s2430 = sand.u32 %s205, 1
        %s2431 = smul.addr %s2430, 256
        %s2432 = scalar_lea.vmem [#allocation3], %s2431
        // Predicated region
        $region53: #{_lambda_.3} parent=51 // pred_check
          %p2433 = pneg %p215
        $region54: #{_lambda_.3} parent=51 // pred_check_branch
          %2435 = sbr.rel (%p2433) target = $region56
        $region55: #{_lambda_.3} parent=51 // pred_region
          %s2437 = ssub.s32 4096, 4096
          %2438 = vsyncadd %s2429, %s2437
          %s2439 = smul.addr %s24, 32
          %s2440 = smul.addr %s2439, 128
          %s2441 = scalar_lea.hbm %s8, %s2440
          %s2442 = sshll.u32 %s2432, 4
          %s2443 = int_to_ptr.vmem [resolvable:$true] %s2442
          %2448 = dma.vmem_to_hbm [thread:$0]  %s2443, 4096, %s2441, %s2429, 128, 128, 8
        $region56: #{_lambda_.3} parent=51 // pred_fallthru
          _
      $region52: #{_lambda_.3} parent=5 // pred_fallthru
        _
      %p2449 = scmp.le.s32.totalorder 2, %s19
      // Predicated region
      $region57: #{_lambda_.3} parent=5 // pred_check
        %p2450 = pneg %p2449
      $region58: #{_lambda_.3} parent=5 // pred_check_branch
        %2452 = sbr.rel (%p2450) target = $region60
      $region59: #{_lambda_.3} parent=5 // pred_region
        %s2453 = ssub.s32 %s19, 2
        // Predicated region
        $region61: #{_lambda_.3} parent=59 // pred_check
          %p2454 = pneg %p221
        $region62: #{_lambda_.3} parent=59 // pred_check_branch
          %2456 = sbr.rel (%p2454) target = $region64
        $region63: #{_lambda_.3} parent=59 // pred_region
          %s2457 = sand.u32 %s206, 1
          %s2458 = scalar_lea.sflag [#allocation4], %s2457
          %s2459 = sand.u32 %s206, 1
          %s2460 = smul.addr %s2459, 256
          %s2461 = scalar_lea.vmem [#allocation3], %s2460
          %2462 = dma.done %s2458, 4096
        $region64: #{_lambda_.3} parent=59 // pred_fallthru
          _
      $region60: #{_lambda_.3} parent=5 // pred_fallthru
        _
    $region6: #{_lambda_.3} parent=1 // loop_footer
      %s23 = sadd.s32 1, %s19
    $region7: #{_lambda_.3} parent=1 // loop_footer_branch
      %18 = sbr.rel target = $region3
    $region8: #{_lambda_.3} parent=1 // loop_exit
      _
    %2463 = vsyncpa [#allocation4], 1
    %s2464 = scalar_lea.sflag [#allocation4], 1
    %2465 = vsyncpa %s2464, 1

</llo_original>
